<compile_context>
chip_gen: v7x
topology: tpu7x:2x2x1
jax: 0.10.0
libtpu: 0.0.40
codegen_flags: <defaults>
</compile_context>

<pallas_src>
import functools

import jax
import jax.numpy as jnp
from jax import lax
from jax.experimental import pallas as pl
from jax.experimental.pallas import tpu as pltpu

EPS = 1e-5  # nn.BatchNorm2d default eps


# -----------------------------------------------------------------------------
# Fused Pallas kernel
# -----------------------------------------------------------------------------
def _downsample_block_kernel(xpp_ref, w1_ref, w2_ref, wd_ref, bn_ref,
                             o_ref, o1p_ref, *, B, HO, WO, CIN, PLANES):
    M = B * HO * WO
    inv_m = jnp.float32(1.0 / M)

    bn = bn_ref[...]
    g1, b1 = bn[0:1, :], bn[1:2, :]
    g2, b2 = bn[2:3, :], bn[3:4, :]
    gd, bd = bn[4:5, :], bn[5:6, :]

    # Row-of-ones: pushes the per-channel BN reductions onto the MXU
    # ((1,M)x(M,C) matmuls) instead of the cross-sublane XLU path.
    ones_row = jnp.ones((1, M), jnp.float32)

    def bn_scale_shift(y, g, b):
        # One-pass batch statistics (biased variance, training-mode BN) with
        # the gamma/beta folded into a single per-channel scale/shift.
        s = jnp.dot(ones_row, y, preferred_element_type=jnp.float32)
        ss = jnp.dot(ones_row, y * y, preferred_element_type=jnp.float32)
        mean = s * inv_m
        var = ss * inv_m - mean * mean
        scale = g * lax.rsqrt(var + EPS)
        shift = b - mean * scale
        return scale, shift

    # ---- conv1: 3x3 stride-2 (pad 1) as 9 accumulating bf16 MXU matmuls ----
    y1 = None
    for kh in range(3):
        for kw in range(3):
            tap = xpp_ref[kh % 2, kw % 2, :,
                          pl.ds(kh // 2, HO), pl.ds(kw // 2, WO), :]
            lhs = tap.reshape(M, CIN).astype(jnp.bfloat16)
            part = jnp.dot(lhs, w1_ref[kh, kw, :, :],
                           preferred_element_type=jnp.float32)
            y1 = part if y1 is None else y1 + part

    scale1, shift1 = bn_scale_shift(y1, g1, b1)
    out1 = jnp.maximum(y1 * scale1 + shift1, 0.0)          # bn1 + relu

    # Keep out1 resident in VMEM.  Zero only the 1-pixel halo (two border
    # rows + two border columns); the interior is fully overwritten below.
    zrow = jnp.zeros((B, 1, WO + 2, PLANES), jnp.float32)
    zcol = jnp.zeros((B, HO + 2, 1, PLANES), jnp.float32)
    o1p_ref[:, pl.ds(0, 1), :, :] = zrow
    o1p_ref[:, pl.ds(HO + 1, 1), :, :] = zrow
    o1p_ref[:, :, pl.ds(0, 1), :] = zcol
    o1p_ref[:, :, pl.ds(WO + 1, 1), :] = zcol
    o1p_ref[:, pl.ds(1, HO), pl.ds(1, WO), :] = out1.reshape(B, HO, WO, PLANES)

    # ---- conv2: 3x3 stride-1 (pad 1) on out1 --------------------------------
    y2 = None
    for kh in range(3):
        for kw in range(3):
            tap = o1p_ref[:, pl.ds(kh, HO), pl.ds(kw, WO), :]
            lhs = tap.reshape(M, PLANES).astype(jnp.bfloat16)
            part = jnp.dot(lhs, w2_ref[kh, kw, :, :],
                           preferred_element_type=jnp.float32)
            y2 = part if y2 is None else y2 + part

    scale2, shift2 = bn_scale_shift(y2, g2, b2)
    out2 = y2 * scale2 + shift2                             # bn2 (no relu yet)

    # ---- downsample branch: 1x1 stride-2 conv + bn --------------------------
    # x[:, ::2, ::2, :] is exactly phase (1, 1) of the padded phase tensor.
    xs = xpp_ref[1, 1, :, pl.ds(0, HO), pl.ds(0, WO), :]
    yd = jnp.dot(xs.reshape(M, CIN).astype(jnp.bfloat16), wd_ref[...],
                 preferred_element_type=jnp.float32)
    scaled, shiftd = bn_scale_shift(yd, gd, bd)
    res = yd * scaled + shiftd

    # residual add + final relu
    o_ref[...] = jnp.maximum(out2 + res, 0.0).astype(o_ref.dtype)


def _full_spec(shape):
    ndim = len(shape)
    return pl.BlockSpec(shape, lambda i, _n=ndim: (0,) * _n)


# -----------------------------------------------------------------------------
# Forward pass of DownSampleBlock (NHWC)
# -----------------------------------------------------------------------------
def downsample_block(x, params):
    B, H, W, CIN = x.shape
    PLANES = params["w1"].shape[-1]
    HO, WO = H // 2, W // 2
    M = B * HO * WO

    # Pad once, then split into the 4 stride-2 phases so every conv tap inside
    # the kernel is a contiguous static slice (no strided reads, no im2col).
    #   xpp[rp, cp, b, i, j, c] == xpad[b, 2*i + rp, 2*j + cp, c]
    xp = jnp.pad(x, ((0, 0), (1, 1), (1, 1), (0, 0)))             # (B,H+2,W+2,C)
    xpp = xp.reshape(B, HO + 1, 2, WO + 1, 2, CIN).transpose(2, 4, 0, 1, 3, 5)

    # Weights pre-cast to bf16 (MXU-native on v5e/v6e/v7x); BN affine params
    # travel as one (6, planes) f32 input (one DMA instead of six tiny ones).
    w1 = params["w1"].astype(jnp.bfloat16)                        # (3,3,CIN,P)
    w2 = params["w2"].astype(jnp.bfloat16)                        # (3,3,P,P)
    wd = params["wd"].reshape(CIN, PLANES).astype(jnp.bfloat16)   # (CIN,P)
    bn = jnp.concatenate([params["g1"], params["b1"], params["g2"],
                          params["b2"], params["gd"], params["bd"]], axis=0)

    kernel = functools.partial(_downsample_block_kernel,
                               B=B, HO=HO, WO=WO, CIN=CIN, PLANES=PLANES)

    out = pl.pallas_call(
        kernel,
        out_shape=jax.ShapeDtypeStruct((M, PLANES), jnp.float32),
        grid=(1,),
        in_specs=[_full_spec(xpp.shape),
                  _full_spec(w1.shape),
                  _full_spec(w2.shape),
                  _full_spec(wd.shape),
                  _full_spec(bn.shape)],
        out_specs=_full_spec((M, PLANES)),
        scratch_shapes=[pltpu.VMEM((B, HO + 2, WO + 2, PLANES), jnp.float32)],
        compiler_params=pltpu.CompilerParams(
            dimension_semantics=("arbitrary",),
            vmem_limit_bytes=32 * 1024 * 1024,
            # Let XLA fuse the pad/phase-split producer into the activation
            # input DMA when it can, avoiding an extra HBM round trip.
            allow_input_fusion=[True, False, False, False, False]),
    )(xpp, w1, w2, wd, bn)

    return out.reshape(B, HO, WO, PLANES)


# -----------------------------------------------------------------------------
# Pure-JAX reference (matched operand precision: bf16 operands, f32 accum)
# -----------------------------------------------------------------------------
def _bn_train_ref(y, g, b):
    mean = jnp.mean(y, axis=(0, 1, 2), keepdims=True)
    var = jnp.mean(jnp.square(y - mean), axis=(0, 1, 2), keepdims=True)
    return (y - mean) * lax.rsqrt(var + EPS) * g + b


def reference_block(x, params):
    dn = ("NHWC", "HWIO", "NHWC")
    bf = lambda a: a.astype(jnp.bfloat16)

    def conv(a, w, stride, pad):
        # Same mixed precision as the kernel: bf16 operands, f32 accumulation.
        return lax.conv_general_dilated(bf(a), bf(w), stride, pad,
                                        dimension_numbers=dn,
                                        preferred_element_type=jnp.float32)

    y1 = conv(x, params["w1"], (2, 2), ((1, 1), (1, 1)))
    y1 = jnp.maximum(_bn_train_ref(y1, params["g1"], params["b1"]), 0.0)
    y2 = conv(y1, params["w2"], (1, 1), ((1, 1), (1, 1)))
    y2 = _bn_train_ref(y2, params["g2"], params["b2"])
    r = conv(x, params["wd"], (2, 2), ((0, 0), (0, 0)))
    r = _bn_train_ref(r, params["gd"], params["bd"])
    return jnp.maximum(y2 + r, 0.0)


# -----------------------------------------------------------------------------
if __name__ == "__main__":
    B, Cin, H, W = 2, 4, 16, 16
    planes = 8
    ks = jax.random.split(jax.random.PRNGKey(0), 9)

    # Deterministic synthetic parameters (HWIO conv weights; BN gamma/beta).
    params = {
        "w1": 0.1 * jax.random.normal(ks[0], (3, 3, Cin, planes), jnp.float32),
        "g1": 1.0 + 0.1 * jax.random.normal(ks[1], (1, planes), jnp.float32),
        "b1": 0.1 * jax.random.normal(ks[2], (1, planes), jnp.float32),
        "w2": 0.1 * jax.random.normal(ks[3], (3, 3, planes, planes), jnp.float32),
        "g2": 1.0 + 0.1 * jax.random.normal(ks[4], (1, planes), jnp.float32),
        "b2": 0.1 * jax.random.normal(ks[5], (1, planes), jnp.float32),
        "wd": 0.1 * jax.random.normal(ks[6], (1, 1, Cin, planes), jnp.float32),
        "gd": jnp.ones((1, planes), jnp.float32),
        "bd": jnp.zeros((1, planes), jnp.float32),
    }

    x_nchw = jax.random.normal(ks[8], (B, Cin, H, W), jnp.float32)
    x = jnp.transpose(x_nchw, (0, 2, 3, 1))  # NCHW -> NHWC

    out = jax.block_until_ready(downsample_block(x, params))
    ref = jax.block_until_ready(reference_block(x, params))

    assert out.shape == (B, H // 2, W // 2, planes), out.shape
    assert jnp.allclose(out, ref, atol=5e-3, rtol=5e-3), float(
        jnp.max(jnp.abs(out - ref)))

    print("KERNEL_OK")
</pallas_src>

<mosaic_0001>
module attributes {stable_mosaic.version = 11 : i64} {
  func.func @_downsample_block_kernel(%arg0: i32, %arg1: memref<2x2x2x9x9x4xf32, #tpu.memory_space<vmem>>, %arg2: memref<3x3x4x8xbf16, #tpu.memory_space<vmem>>, %arg3: memref<3x3x8x8xbf16, #tpu.memory_space<vmem>>, %arg4: memref<4x8xbf16, #tpu.memory_space<vmem>>, %arg5: memref<6x8xf32, #tpu.memory_space<vmem>>, %arg6: memref<128x8xf32, #tpu.memory_space<vmem>>, %arg7: memref<2x10x10x8xf32, #tpu.memory_space<vmem>>) attributes {dimension_semantics = [#tpu.dimension_semantics<arbitrary>], iteration_bounds = array<i64: 1>, scalar_prefetch = 0 : i64, scratch_operands = 1 : i64, tpu.core_type = #tpu.core_type<tc>, window_params = [{pipeline_mode = #tpu.pipeline_mode<synchronous>, transform_indices = @transform_0, window_bounds = array<i64: 2, 2, 2, 9, 9, 4>}, {pipeline_mode = #tpu.pipeline_mode<synchronous>, transform_indices = @transform_1, window_bounds = array<i64: 3, 3, 4, 8>}, {pipeline_mode = #tpu.pipeline_mode<synchronous>, transform_indices = @transform_2, window_bounds = array<i64: 3, 3, 8, 8>}, {pipeline_mode = #tpu.pipeline_mode<synchronous>, transform_indices = @transform_3, window_bounds = array<i64: 4, 8>}, {pipeline_mode = #tpu.pipeline_mode<synchronous>, transform_indices = @transform_4, window_bounds = array<i64: 6, 8>}, {pipeline_mode = #tpu.pipeline_mode<synchronous>, transform_indices = @transform_5, window_bounds = array<i64: 128, 8>}]} {
    %c0 = arith.constant 0 : index
    %c0_0 = arith.constant 0 : index
    %0 = vector.load %arg5[%c0, %c0_0] : memref<6x8xf32, #tpu.memory_space<vmem>>, vector<6x8xf32>
    %1 = vector.extract_strided_slice %0 {offsets = [0, 0], sizes = [1, 8], strides = [1, 1]} : vector<6x8xf32> to vector<1x8xf32>
    %2 = vector.extract_strided_slice %0 {offsets = [1, 0], sizes = [1, 8], strides = [1, 1]} : vector<6x8xf32> to vector<1x8xf32>
    %3 = vector.extract_strided_slice %0 {offsets = [2, 0], sizes = [1, 8], strides = [1, 1]} : vector<6x8xf32> to vector<1x8xf32>
    %4 = vector.extract_strided_slice %0 {offsets = [3, 0], sizes = [1, 8], strides = [1, 1]} : vector<6x8xf32> to vector<1x8xf32>
    %5 = vector.extract_strided_slice %0 {offsets = [4, 0], sizes = [1, 8], strides = [1, 1]} : vector<6x8xf32> to vector<1x8xf32>
    %6 = vector.extract_strided_slice %0 {offsets = [5, 0], sizes = [1, 8], strides = [1, 1]} : vector<6x8xf32> to vector<1x8xf32>
    %cst = arith.constant 1.000000e+00 : f32
    %7 = vector.broadcast %cst : f32 to vector<1x128xf32>
    %c0_1 = arith.constant 0 : index
    %c0_2 = arith.constant 0 : index
    %c0_3 = arith.constant 0 : index
    %c0_4 = arith.constant 0 : index
    %c0_5 = arith.constant 0 : index
    %c0_6 = arith.constant 0 : index
    %8 = vector.load %arg1[%c0_1, %c0_2, %c0_3, %c0_4, %c0_5, %c0_6] : memref<2x2x2x9x9x4xf32, #tpu.memory_space<vmem>>, vector<1x1x2x8x8x4xf32>
    %9 = vector.shape_cast %8 : vector<1x1x2x8x8x4xf32> to vector<2x8x8x4xf32>
    %10 = vector.shape_cast %9 : vector<2x8x8x4xf32> to vector<128x4xf32>
    %11 = arith.truncf %10 : vector<128x4xf32> to vector<128x4xbf16>
    %c0_7 = arith.constant 0 : index
    %c0_8 = arith.constant 0 : index
    %c0_9 = arith.constant 0 : index
    %c0_10 = arith.constant 0 : index
    %12 = vector.load %arg2[%c0_7, %c0_8, %c0_9, %c0_10] : memref<3x3x4x8xbf16, #tpu.memory_space<vmem>>, vector<1x1x4x8xbf16>
    %13 = vector.shape_cast %12 : vector<1x1x4x8xbf16> to vector<4x8xbf16>
    %cst_11 = arith.constant dense<0.000000e+00> : vector<128x8xf32>
    %14 = tpu.matmul %11, %13, %cst_11 {dimension_numbers = #tpu.dot_dimension_numbers<[1], [0], [0], [1], [0, 0, 1, 1], [], []>} : vector<128x4xbf16>, vector<4x8xbf16>, vector<128x8xf32> -> vector<128x8xf32>
    %c0_12 = arith.constant 0 : index
    %c1 = arith.constant 1 : index
    %c0_13 = arith.constant 0 : index
    %c0_14 = arith.constant 0 : index
    %c0_15 = arith.constant 0 : index
    %c0_16 = arith.constant 0 : index
    %15 = vector.load %arg1[%c0_12, %c1, %c0_13, %c0_14, %c0_15, %c0_16] : memref<2x2x2x9x9x4xf32, #tpu.memory_space<vmem>>, vector<1x1x2x8x8x4xf32>
    %16 = vector.shape_cast %15 : vector<1x1x2x8x8x4xf32> to vector<2x8x8x4xf32>
    %17 = vector.shape_cast %16 : vector<2x8x8x4xf32> to vector<128x4xf32>
    %18 = arith.truncf %17 : vector<128x4xf32> to vector<128x4xbf16>
    %c0_17 = arith.constant 0 : index
    %c1_18 = arith.constant 1 : index
    %c0_19 = arith.constant 0 : index
    %c0_20 = arith.constant 0 : index
    %19 = vector.load %arg2[%c0_17, %c1_18, %c0_19, %c0_20] : memref<3x3x4x8xbf16, #tpu.memory_space<vmem>>, vector<1x1x4x8xbf16>
    %20 = vector.shape_cast %19 : vector<1x1x4x8xbf16> to vector<4x8xbf16>
    %cst_21 = arith.constant dense<0.000000e+00> : vector<128x8xf32>
    %21 = tpu.matmul %18, %20, %cst_21 {dimension_numbers = #tpu.dot_dimension_numbers<[1], [0], [0], [1], [0, 0, 1, 1], [], []>} : vector<128x4xbf16>, vector<4x8xbf16>, vector<128x8xf32> -> vector<128x8xf32>
    %22 = arith.addf %14, %21 : vector<128x8xf32>
    %c0_22 = arith.constant 0 : index
    %c0_23 = arith.constant 0 : index
    %c0_24 = arith.constant 0 : index
    %c0_25 = arith.constant 0 : index
    %c1_26 = arith.constant 1 : index
    %c0_27 = arith.constant 0 : index
    %23 = vector.load %arg1[%c0_22, %c0_23, %c0_24, %c0_25, %c1_26, %c0_27] : memref<2x2x2x9x9x4xf32, #tpu.memory_space<vmem>>, vector<1x1x2x8x8x4xf32>
    %24 = vector.shape_cast %23 : vector<1x1x2x8x8x4xf32> to vector<2x8x8x4xf32>
    %25 = vector.shape_cast %24 : vector<2x8x8x4xf32> to vector<128x4xf32>
    %26 = arith.truncf %25 : vector<128x4xf32> to vector<128x4xbf16>
    %c0_28 = arith.constant 0 : index
    %c2 = arith.constant 2 : index
    %c0_29 = arith.constant 0 : index
    %c0_30 = arith.constant 0 : index
    %27 = vector.load %arg2[%c0_28, %c2, %c0_29, %c0_30] : memref<3x3x4x8xbf16, #tpu.memory_space<vmem>>, vector<1x1x4x8xbf16>
    %28 = vector.shape_cast %27 : vector<1x1x4x8xbf16> to vector<4x8xbf16>
    %cst_31 = arith.constant dense<0.000000e+00> : vector<128x8xf32>
    %29 = tpu.matmul %26, %28, %cst_31 {dimension_numbers = #tpu.dot_dimension_numbers<[1], [0], [0], [1], [0, 0, 1, 1], [], []>} : vector<128x4xbf16>, vector<4x8xbf16>, vector<128x8xf32> -> vector<128x8xf32>
    %30 = arith.addf %22, %29 : vector<128x8xf32>
    %c1_32 = arith.constant 1 : index
    %c0_33 = arith.constant 0 : index
    %c0_34 = arith.constant 0 : index
    %c0_35 = arith.constant 0 : index
    %c0_36 = arith.constant 0 : index
    %c0_37 = arith.constant 0 : index
    %31 = vector.load %arg1[%c1_32, %c0_33, %c0_34, %c0_35, %c0_36, %c0_37] : memref<2x2x2x9x9x4xf32, #tpu.memory_space<vmem>>, vector<1x1x2x8x8x4xf32>
    %32 = vector.shape_cast %31 : vector<1x1x2x8x8x4xf32> to vector<2x8x8x4xf32>
    %33 = vector.shape_cast %32 : vector<2x8x8x4xf32> to vector<128x4xf32>
    %34 = arith.truncf %33 : vector<128x4xf32> to vector<128x4xbf16>
    %c1_38 = arith.constant 1 : index
    %c0_39 = arith.constant 0 : index
    %c0_40 = arith.constant 0 : index
    %c0_41 = arith.constant 0 : index
    %35 = vector.load %arg2[%c1_38, %c0_39, %c0_40, %c0_41] : memref<3x3x4x8xbf16, #tpu.memory_space<vmem>>, vector<1x1x4x8xbf16>
    %36 = vector.shape_cast %35 : vector<1x1x4x8xbf16> to vector<4x8xbf16>
    %cst_42 = arith.constant dense<0.000000e+00> : vector<128x8xf32>
    %37 = tpu.matmul %34, %36, %cst_42 {dimension_numbers = #tpu.dot_dimension_numbers<[1], [0], [0], [1], [0, 0, 1, 1], [], []>} : vector<128x4xbf16>, vector<4x8xbf16>, vector<128x8xf32> -> vector<128x8xf32>
    %38 = arith.addf %30, %37 : vector<128x8xf32>
    %c1_43 = arith.constant 1 : index
    %c1_44 = arith.constant 1 : index
    %c0_45 = arith.constant 0 : index
    %c0_46 = arith.constant 0 : index
    %c0_47 = arith.constant 0 : index
    %c0_48 = arith.constant 0 : index
    %39 = vector.load %arg1[%c1_43, %c1_44, %c0_45, %c0_46, %c0_47, %c0_48] : memref<2x2x2x9x9x4xf32, #tpu.memory_space<vmem>>, vector<1x1x2x8x8x4xf32>
    %40 = vector.shape_cast %39 : vector<1x1x2x8x8x4xf32> to vector<2x8x8x4xf32>
    %41 = vector.shape_cast %40 : vector<2x8x8x4xf32> to vector<128x4xf32>
    %42 = arith.truncf %41 : vector<128x4xf32> to vector<128x4xbf16>
    %c1_49 = arith.constant 1 : index
    %c1_50 = arith.constant 1 : index
    %c0_51 = arith.constant 0 : index
    %c0_52 = arith.constant 0 : index
    %43 = vector.load %arg2[%c1_49, %c1_50, %c0_51, %c0_52] : memref<3x3x4x8xbf16, #tpu.memory_space<vmem>>, vector<1x1x4x8xbf16>
    %44 = vector.shape_cast %43 : vector<1x1x4x8xbf16> to vector<4x8xbf16>
    %cst_53 = arith.constant dense<0.000000e+00> : vector<128x8xf32>
    %45 = tpu.matmul %42, %44, %cst_53 {dimension_numbers = #tpu.dot_dimension_numbers<[1], [0], [0], [1], [0, 0, 1, 1], [], []>} : vector<128x4xbf16>, vector<4x8xbf16>, vector<128x8xf32> -> vector<128x8xf32>
    %46 = arith.addf %38, %45 : vector<128x8xf32>
    %c1_54 = arith.constant 1 : index
    %c0_55 = arith.constant 0 : index
    %c0_56 = arith.constant 0 : index
    %c0_57 = arith.constant 0 : index
    %c1_58 = arith.constant 1 : index
    %c0_59 = arith.constant 0 : index
    %47 = vector.load %arg1[%c1_54, %c0_55, %c0_56, %c0_57, %c1_58, %c0_59] : memref<2x2x2x9x9x4xf32, #tpu.memory_space<vmem>>, vector<1x1x2x8x8x4xf32>
    %48 = vector.shape_cast %47 : vector<1x1x2x8x8x4xf32> to vector<2x8x8x4xf32>
    %49 = vector.shape_cast %48 : vector<2x8x8x4xf32> to vector<128x4xf32>
    %50 = arith.truncf %49 : vector<128x4xf32> to vector<128x4xbf16>
    %c1_60 = arith.constant 1 : index
    %c2_61 = arith.constant 2 : index
    %c0_62 = arith.constant 0 : index
    %c0_63 = arith.constant 0 : index
    %51 = vector.load %arg2[%c1_60, %c2_61, %c0_62, %c0_63] : memref<3x3x4x8xbf16, #tpu.memory_space<vmem>>, vector<1x1x4x8xbf16>
    %52 = vector.shape_cast %51 : vector<1x1x4x8xbf16> to vector<4x8xbf16>
    %cst_64 = arith.constant dense<0.000000e+00> : vector<128x8xf32>
    %53 = tpu.matmul %50, %52, %cst_64 {dimension_numbers = #tpu.dot_dimension_numbers<[1], [0], [0], [1], [0, 0, 1, 1], [], []>} : vector<128x4xbf16>, vector<4x8xbf16>, vector<128x8xf32> -> vector<128x8xf32>
    %54 = arith.addf %46, %53 : vector<128x8xf32>
    %c0_65 = arith.constant 0 : index
    %c0_66 = arith.constant 0 : index
    %c0_67 = arith.constant 0 : index
    %c1_68 = arith.constant 1 : index
    %c0_69 = arith.constant 0 : index
    %c0_70 = arith.constant 0 : index
    %55 = vector.load %arg1[%c0_65, %c0_66, %c0_67, %c1_68, %c0_69, %c0_70] : memref<2x2x2x9x9x4xf32, #tpu.memory_space<vmem>>, vector<1x1x2x8x8x4xf32>
    %56 = vector.shape_cast %55 : vector<1x1x2x8x8x4xf32> to vector<2x8x8x4xf32>
    %57 = vector.shape_cast %56 : vector<2x8x8x4xf32> to vector<128x4xf32>
    %58 = arith.truncf %57 : vector<128x4xf32> to vector<128x4xbf16>
    %c2_71 = arith.constant 2 : index
    %c0_72 = arith.constant 0 : index
    %c0_73 = arith.constant 0 : index
    %c0_74 = arith.constant 0 : index
    %59 = vector.load %arg2[%c2_71, %c0_72, %c0_73, %c0_74] : memref<3x3x4x8xbf16, #tpu.memory_space<vmem>>, vector<1x1x4x8xbf16>
    %60 = vector.shape_cast %59 : vector<1x1x4x8xbf16> to vector<4x8xbf16>
    %cst_75 = arith.constant dense<0.000000e+00> : vector<128x8xf32>
    %61 = tpu.matmul %58, %60, %cst_75 {dimension_numbers = #tpu.dot_dimension_numbers<[1], [0], [0], [1], [0, 0, 1, 1], [], []>} : vector<128x4xbf16>, vector<4x8xbf16>, vector<128x8xf32> -> vector<128x8xf32>
    %62 = arith.addf %54, %61 : vector<128x8xf32>
    %c0_76 = arith.constant 0 : index
    %c1_77 = arith.constant 1 : index
    %c0_78 = arith.constant 0 : index
    %c1_79 = arith.constant 1 : index
    %c0_80 = arith.constant 0 : index
    %c0_81 = arith.constant 0 : index
    %63 = vector.load %arg1[%c0_76, %c1_77, %c0_78, %c1_79, %c0_80, %c0_81] : memref<2x2x2x9x9x4xf32, #tpu.memory_space<vmem>>, vector<1x1x2x8x8x4xf32>
    %64 = vector.shape_cast %63 : vector<1x1x2x8x8x4xf32> to vector<2x8x8x4xf32>
    %65 = vector.shape_cast %64 : vector<2x8x8x4xf32> to vector<128x4xf32>
    %66 = arith.truncf %65 : vector<128x4xf32> to vector<128x4xbf16>
    %c2_82 = arith.constant 2 : index
    %c1_83 = arith.constant 1 : index
    %c0_84 = arith.constant 0 : index
    %c0_85 = arith.constant 0 : index
    %67 = vector.load %arg2[%c2_82, %c1_83, %c0_84, %c0_85] : memref<3x3x4x8xbf16, #tpu.memory_space<vmem>>, vector<1x1x4x8xbf16>
    %68 = vector.shape_cast %67 : vector<1x1x4x8xbf16> to vector<4x8xbf16>
    %cst_86 = arith.constant dense<0.000000e+00> : vector<128x8xf32>
    %69 = tpu.matmul %66, %68, %cst_86 {dimension_numbers = #tpu.dot_dimension_numbers<[1], [0], [0], [1], [0, 0, 1, 1], [], []>} : vector<128x4xbf16>, vector<4x8xbf16>, vector<128x8xf32> -> vector<128x8xf32>
    %70 = arith.addf %62, %69 : vector<128x8xf32>
    %c0_87 = arith.constant 0 : index
    %c0_88 = arith.constant 0 : index
    %c0_89 = arith.constant 0 : index
    %c1_90 = arith.constant 1 : index
    %c1_91 = arith.constant 1 : index
    %c0_92 = arith.constant 0 : index
    %71 = vector.load %arg1[%c0_87, %c0_88, %c0_89, %c1_90, %c1_91, %c0_92] : memref<2x2x2x9x9x4xf32, #tpu.memory_space<vmem>>, vector<1x1x2x8x8x4xf32>
    %72 = vector.shape_cast %71 : vector<1x1x2x8x8x4xf32> to vector<2x8x8x4xf32>
    %73 = vector.shape_cast %72 : vector<2x8x8x4xf32> to vector<128x4xf32>
    %74 = arith.truncf %73 : vector<128x4xf32> to vector<128x4xbf16>
    %c2_93 = arith.constant 2 : index
    %c2_94 = arith.constant 2 : index
    %c0_95 = arith.constant 0 : index
    %c0_96 = arith.constant 0 : index
    %75 = vector.load %arg2[%c2_93, %c2_94, %c0_95, %c0_96] : memref<3x3x4x8xbf16, #tpu.memory_space<vmem>>, vector<1x1x4x8xbf16>
    %76 = vector.shape_cast %75 : vector<1x1x4x8xbf16> to vector<4x8xbf16>
    %cst_97 = arith.constant dense<0.000000e+00> : vector<128x8xf32>
    %77 = tpu.matmul %74, %76, %cst_97 {dimension_numbers = #tpu.dot_dimension_numbers<[1], [0], [0], [1], [0, 0, 1, 1], [], []>} : vector<128x4xbf16>, vector<4x8xbf16>, vector<128x8xf32> -> vector<128x8xf32>
    %78 = arith.addf %70, %77 : vector<128x8xf32>
    %cst_98 = arith.constant dense<0.000000e+00> : vector<1x8xf32>
    %79 = tpu.matmul %7, %78, %cst_98 {dimension_numbers = #tpu.dot_dimension_numbers<[1], [0], [0], [1], [0, 0, 1, 1], [], []>} : vector<1x128xf32>, vector<128x8xf32>, vector<1x8xf32> -> vector<1x8xf32>
    %80 = arith.mulf %78, %78 : vector<128x8xf32>
    %cst_99 = arith.constant dense<0.000000e+00> : vector<1x8xf32>
    %81 = tpu.matmul %7, %80, %cst_99 {dimension_numbers = #tpu.dot_dimension_numbers<[1], [0], [0], [1], [0, 0, 1, 1], [], []>} : vector<1x128xf32>, vector<128x8xf32>, vector<1x8xf32> -> vector<1x8xf32>
    %cst_100 = arith.constant 7.812500e-03 : f32
    %82 = vector.broadcast %cst_100 : f32 to vector<1x8xf32>
    %83 = arith.mulf %79, %82 : vector<1x8xf32>
    %cst_101 = arith.constant 7.812500e-03 : f32
    %84 = vector.broadcast %cst_101 : f32 to vector<1x8xf32>
    %85 = arith.mulf %81, %84 : vector<1x8xf32>
    %86 = arith.mulf %83, %83 : vector<1x8xf32>
    %87 = arith.subf %85, %86 : vector<1x8xf32>
    %cst_102 = arith.constant 9.99999974E-6 : f32
    %88 = vector.broadcast %cst_102 : f32 to vector<1x8xf32>
    %89 = arith.addf %87, %88 : vector<1x8xf32>
    %90 = math.rsqrt %89 : vector<1x8xf32>
    %91 = arith.mulf %1, %90 : vector<1x8xf32>
    %92 = arith.mulf %83, %91 : vector<1x8xf32>
    %93 = arith.subf %2, %92 : vector<1x8xf32>
    %94 = vector.broadcast %91 : vector<1x8xf32> to vector<128x8xf32>
    %95 = arith.mulf %78, %94 : vector<128x8xf32>
    %96 = vector.broadcast %93 : vector<1x8xf32> to vector<128x8xf32>
    %97 = arith.addf %95, %96 : vector<128x8xf32>
    %cst_103 = arith.constant 0.000000e+00 : f32
    %98 = vector.broadcast %cst_103 : f32 to vector<128x8xf32>
    %99 = arith.maximumf %97, %98 : vector<128x8xf32>
    %cst_104 = arith.constant 0.000000e+00 : f32
    %100 = vector.broadcast %cst_104 : f32 to vector<2x1x10x8xf32>
    %cst_105 = arith.constant 0.000000e+00 : f32
    %101 = vector.broadcast %cst_105 : f32 to vector<2x10x1x8xf32>
    %c0_106 = arith.constant 0 : index
    %c0_107 = arith.constant 0 : index
    %c0_108 = arith.constant 0 : index
    %c0_109 = arith.constant 0 : index
    %102 = vector.load %arg7[%c0_106, %c0_107, %c0_108, %c0_109] : memref<2x10x10x8xf32, #tpu.memory_space<vmem>>, vector<2x1x10x8xf32>
    tpu.vector_store %arg7[%c0_106, %c0_107, %c0_108, %c0_109], %100 {strides = array<i32>} : memref<2x10x10x8xf32, #tpu.memory_space<vmem>>, vector<2x1x10x8xf32>,
    %c0_110 = arith.constant 0 : index
    %c9 = arith.constant 9 : index
    %c0_111 = arith.constant 0 : index
    %c0_112 = arith.constant 0 : index
    %103 = vector.load %arg7[%c0_110, %c9, %c0_111, %c0_112] : memref<2x10x10x8xf32, #tpu.memory_space<vmem>>, vector<2x1x10x8xf32>
    tpu.vector_store %arg7[%c0_110, %c9, %c0_111, %c0_112], %100 {strides = array<i32>} : memref<2x10x10x8xf32, #tpu.memory_space<vmem>>, vector<2x1x10x8xf32>,
    %c0_113 = arith.constant 0 : index
    %c0_114 = arith.constant 0 : index
    %c0_115 = arith.constant 0 : index
    %c0_116 = arith.constant 0 : index
    %104 = vector.load %arg7[%c0_113, %c0_114, %c0_115, %c0_116] : memref<2x10x10x8xf32, #tpu.memory_space<vmem>>, vector<2x10x1x8xf32>
    tpu.vector_store %arg7[%c0_113, %c0_114, %c0_115, %c0_116], %101 {strides = array<i32>} : memref<2x10x10x8xf32, #tpu.memory_space<vmem>>, vector<2x10x1x8xf32>,
    %c0_117 = arith.constant 0 : index
    %c0_118 = arith.constant 0 : index
    %c9_119 = arith.constant 9 : index
    %c0_120 = arith.constant 0 : index
    %105 = vector.load %arg7[%c0_117, %c0_118, %c9_119, %c0_120] : memref<2x10x10x8xf32, #tpu.memory_space<vmem>>, vector<2x10x1x8xf32>
    tpu.vector_store %arg7[%c0_117, %c0_118, %c9_119, %c0_120], %101 {strides = array<i32>} : memref<2x10x10x8xf32, #tpu.memory_space<vmem>>, vector<2x10x1x8xf32>,
    %106 = vector.shape_cast %99 : vector<128x8xf32> to vector<2x8x8x8xf32>
    %c0_121 = arith.constant 0 : index
    %c1_122 = arith.constant 1 : index
    %c1_123 = arith.constant 1 : index
    %c0_124 = arith.constant 0 : index
    %107 = vector.load %arg7[%c0_121, %c1_122, %c1_123, %c0_124] : memref<2x10x10x8xf32, #tpu.memory_space<vmem>>, vector<2x8x8x8xf32>
    tpu.vector_store %arg7[%c0_121, %c1_122, %c1_123, %c0_124], %106 {strides = array<i32>} : memref<2x10x10x8xf32, #tpu.memory_space<vmem>>, vector<2x8x8x8xf32>,
    %c0_125 = arith.constant 0 : index
    %c0_126 = arith.constant 0 : index
    %c0_127 = arith.constant 0 : index
    %c0_128 = arith.constant 0 : index
    %108 = vector.load %arg7[%c0_125, %c0_126, %c0_127, %c0_128] : memref<2x10x10x8xf32, #tpu.memory_space<vmem>>, vector<2x8x8x8xf32>
    %109 = vector.shape_cast %108 : vector<2x8x8x8xf32> to vector<128x8xf32>
    %110 = arith.truncf %109 : vector<128x8xf32> to vector<128x8xbf16>
    %c0_129 = arith.constant 0 : index
    %c0_130 = arith.constant 0 : index
    %c0_131 = arith.constant 0 : index
    %c0_132 = arith.constant 0 : index
    %111 = vector.load %arg3[%c0_129, %c0_130, %c0_131, %c0_132] : memref<3x3x8x8xbf16, #tpu.memory_space<vmem>>, vector<1x1x8x8xbf16>
    %112 = vector.shape_cast %111 : vector<1x1x8x8xbf16> to vector<8x8xbf16>
    %cst_133 = arith.constant dense<0.000000e+00> : vector<128x8xf32>
    %113 = tpu.matmul %110, %112, %cst_133 {dimension_numbers = #tpu.dot_dimension_numbers<[1], [0], [0], [1], [0, 0, 1, 1], [], []>} : vector<128x8xbf16>, vector<8x8xbf16>, vector<128x8xf32> -> vector<128x8xf32>
    %c0_134 = arith.constant 0 : index
    %c0_135 = arith.constant 0 : index
    %c1_136 = arith.constant 1 : index
    %c0_137 = arith.constant 0 : index
    %114 = vector.load %arg7[%c0_134, %c0_135, %c1_136, %c0_137] : memref<2x10x10x8xf32, #tpu.memory_space<vmem>>, vector<2x8x8x8xf32>
    %115 = vector.shape_cast %114 : vector<2x8x8x8xf32> to vector<128x8xf32>
    %116 = arith.truncf %115 : vector<128x8xf32> to vector<128x8xbf16>
    %c0_138 = arith.constant 0 : index
    %c1_139 = arith.constant 1 : index
    %c0_140 = arith.constant 0 : index
    %c0_141 = arith.constant 0 : index
    %117 = vector.load %arg3[%c0_138, %c1_139, %c0_140, %c0_141] : memref<3x3x8x8xbf16, #tpu.memory_space<vmem>>, vector<1x1x8x8xbf16>
    %118 = vector.shape_cast %117 : vector<1x1x8x8xbf16> to vector<8x8xbf16>
    %cst_142 = arith.constant dense<0.000000e+00> : vector<128x8xf32>
    %119 = tpu.matmul %116, %118, %cst_142 {dimension_numbers = #tpu.dot_dimension_numbers<[1], [0], [0], [1], [0, 0, 1, 1], [], []>} : vector<128x8xbf16>, vector<8x8xbf16>, vector<128x8xf32> -> vector<128x8xf32>
    %120 = arith.addf %113, %119 : vector<128x8xf32>
    %c0_143 = arith.constant 0 : index
    %c0_144 = arith.constant 0 : index
    %c2_145 = arith.constant 2 : index
    %c0_146 = arith.constant 0 : index
    %121 = vector.load %arg7[%c0_143, %c0_144, %c2_145, %c0_146] : memref<2x10x10x8xf32, #tpu.memory_space<vmem>>, vector<2x8x8x8xf32>
    %122 = vector.shape_cast %121 : vector<2x8x8x8xf32> to vector<128x8xf32>
    %123 = arith.truncf %122 : vector<128x8xf32> to vector<128x8xbf16>
    %c0_147 = arith.constant 0 : index
    %c2_148 = arith.constant 2 : index
    %c0_149 = arith.constant 0 : index
    %c0_150 = arith.constant 0 : index
    %124 = vector.load %arg3[%c0_147, %c2_148, %c0_149, %c0_150] : memref<3x3x8x8xbf16, #tpu.memory_space<vmem>>, vector<1x1x8x8xbf16>
    %125 = vector.shape_cast %124 : vector<1x1x8x8xbf16> to vector<8x8xbf16>
    %cst_151 = arith.constant dense<0.000000e+00> : vector<128x8xf32>
    %126 = tpu.matmul %123, %125, %cst_151 {dimension_numbers = #tpu.dot_dimension_numbers<[1], [0], [0], [1], [0, 0, 1, 1], [], []>} : vector<128x8xbf16>, vector<8x8xbf16>, vector<128x8xf32> -> vector<128x8xf32>
    %127 = arith.addf %120, %126 : vector<128x8xf32>
    %c0_152 = arith.constant 0 : index
    %c1_153 = arith.constant 1 : index
    %c0_154 = arith.constant 0 : index
    %c0_155 = arith.constant 0 : index
    %128 = vector.load %arg7[%c0_152, %c1_153, %c0_154, %c0_155] : memref<2x10x10x8xf32, #tpu.memory_space<vmem>>, vector<2x8x8x8xf32>
    %129 = vector.shape_cast %128 : vector<2x8x8x8xf32> to vector<128x8xf32>
    %130 = arith.truncf %129 : vector<128x8xf32> to vector<128x8xbf16>
    %c1_156 = arith.constant 1 : index
    %c0_157 = arith.constant 0 : index
    %c0_158 = arith.constant 0 : index
    %c0_159 = arith.constant 0 : index
    %131 = vector.load %arg3[%c1_156, %c0_157, %c0_158, %c0_159] : memref<3x3x8x8xbf16, #tpu.memory_space<vmem>>, vector<1x1x8x8xbf16>
    %132 = vector.shape_cast %131 : vector<1x1x8x8xbf16> to vector<8x8xbf16>
    %cst_160 = arith.constant dense<0.000000e+00> : vector<128x8xf32>
    %133 = tpu.matmul %130, %132, %cst_160 {dimension_numbers = #tpu.dot_dimension_numbers<[1], [0], [0], [1], [0, 0, 1, 1], [], []>} : vector<128x8xbf16>, vector<8x8xbf16>, vector<128x8xf32> -> vector<128x8xf32>
    %134 = arith.addf %127, %133 : vector<128x8xf32>
    %c0_161 = arith.constant 0 : index
    %c1_162 = arith.constant 1 : index
    %c1_163 = arith.constant 1 : index
    %c0_164 = arith.constant 0 : index
    %135 = vector.load %arg7[%c0_161, %c1_162, %c1_163, %c0_164] : memref<2x10x10x8xf32, #tpu.memory_space<vmem>>, vector<2x8x8x8xf32>
    %136 = vector.shape_cast %135 : vector<2x8x8x8xf32> to vector<128x8xf32>
    %137 = arith.truncf %136 : vector<128x8xf32> to vector<128x8xbf16>
    %c1_165 = arith.constant 1 : index
    %c1_166 = arith.constant 1 : index
    %c0_167 = arith.constant 0 : index
    %c0_168 = arith.constant 0 : index
    %138 = vector.load %arg3[%c1_165, %c1_166, %c0_167, %c0_168] : memref<3x3x8x8xbf16, #tpu.memory_space<vmem>>, vector<1x1x8x8xbf16>
    %139 = vector.shape_cast %138 : vector<1x1x8x8xbf16> to vector<8x8xbf16>
    %cst_169 = arith.constant dense<0.000000e+00> : vector<128x8xf32>
    %140 = tpu.matmul %137, %139, %cst_169 {dimension_numbers = #tpu.dot_dimension_numbers<[1], [0], [0], [1], [0, 0, 1, 1], [], []>} : vector<128x8xbf16>, vector<8x8xbf16>, vector<128x8xf32> -> vector<128x8xf32>
    %141 = arith.addf %134, %140 : vector<128x8xf32>
    %c0_170 = arith.constant 0 : index
    %c1_171 = arith.constant 1 : index
    %c2_172 = arith.constant 2 : index
    %c0_173 = arith.constant 0 : index
    %142 = vector.load %arg7[%c0_170, %c1_171, %c2_172, %c0_173] : memref<2x10x10x8xf32, #tpu.memory_space<vmem>>, vector<2x8x8x8xf32>
    %143 = vector.shape_cast %142 : vector<2x8x8x8xf32> to vector<128x8xf32>
    %144 = arith.truncf %143 : vector<128x8xf32> to vector<128x8xbf16>
    %c1_174 = arith.constant 1 : index
    %c2_175 = arith.constant 2 : index
    %c0_176 = arith.constant 0 : index
    %c0_177 = arith.constant 0 : index
    %145 = vector.load %arg3[%c1_174, %c2_175, %c0_176, %c0_177] : memref<3x3x8x8xbf16, #tpu.memory_space<vmem>>, vector<1x1x8x8xbf16>
    %146 = vector.shape_cast %145 : vector<1x1x8x8xbf16> to vector<8x8xbf16>
    %cst_178 = arith.constant dense<0.000000e+00> : vector<128x8xf32>
    %147 = tpu.matmul %144, %146, %cst_178 {dimension_numbers = #tpu.dot_dimension_numbers<[1], [0], [0], [1], [0, 0, 1, 1], [], []>} : vector<128x8xbf16>, vector<8x8xbf16>, vector<128x8xf32> -> vector<128x8xf32>
    %148 = arith.addf %141, %147 : vector<128x8xf32>
    %c0_179 = arith.constant 0 : index
    %c2_180 = arith.constant 2 : index
    %c0_181 = arith.constant 0 : index
    %c0_182 = arith.constant 0 : index
    %149 = vector.load %arg7[%c0_179, %c2_180, %c0_181, %c0_182] : memref<2x10x10x8xf32, #tpu.memory_space<vmem>>, vector<2x8x8x8xf32>
    %150 = vector.shape_cast %149 : vector<2x8x8x8xf32> to vector<128x8xf32>
    %151 = arith.truncf %150 : vector<128x8xf32> to vector<128x8xbf16>
    %c2_183 = arith.constant 2 : index
    %c0_184 = arith.constant 0 : index
    %c0_185 = arith.constant 0 : index
    %c0_186 = arith.constant 0 : index
    %152 = vector.load %arg3[%c2_183, %c0_184, %c0_185, %c0_186] : memref<3x3x8x8xbf16, #tpu.memory_space<vmem>>, vector<1x1x8x8xbf16>
    %153 = vector.shape_cast %152 : vector<1x1x8x8xbf16> to vector<8x8xbf16>
    %cst_187 = arith.constant dense<0.000000e+00> : vector<128x8xf32>
    %154 = tpu.matmul %151, %153, %cst_187 {dimension_numbers = #tpu.dot_dimension_numbers<[1], [0], [0], [1], [0, 0, 1, 1], [], []>} : vector<128x8xbf16>, vector<8x8xbf16>, vector<128x8xf32> -> vector<128x8xf32>
    %155 = arith.addf %148, %154 : vector<128x8xf32>
    %c0_188 = arith.constant 0 : index
    %c2_189 = arith.constant 2 : index
    %c1_190 = arith.constant 1 : index
    %c0_191 = arith.constant 0 : index
    %156 = vector.load %arg7[%c0_188, %c2_189, %c1_190, %c0_191] : memref<2x10x10x8xf32, #tpu.memory_space<vmem>>, vector<2x8x8x8xf32>
    %157 = vector.shape_cast %156 : vector<2x8x8x8xf32> to vector<128x8xf32>
    %158 = arith.truncf %157 : vector<128x8xf32> to vector<128x8xbf16>
    %c2_192 = arith.constant 2 : index
    %c1_193 = arith.constant 1 : index
    %c0_194 = arith.constant 0 : index
    %c0_195 = arith.constant 0 : index
    %159 = vector.load %arg3[%c2_192, %c1_193, %c0_194, %c0_195] : memref<3x3x8x8xbf16, #tpu.memory_space<vmem>>, vector<1x1x8x8xbf16>
    %160 = vector.shape_cast %159 : vector<1x1x8x8xbf16> to vector<8x8xbf16>
    %cst_196 = arith.constant dense<0.000000e+00> : vector<128x8xf32>
    %161 = tpu.matmul %158, %160, %cst_196 {dimension_numbers = #tpu.dot_dimension_numbers<[1], [0], [0], [1], [0, 0, 1, 1], [], []>} : vector<128x8xbf16>, vector<8x8xbf16>, vector<128x8xf32> -> vector<128x8xf32>
    %162 = arith.addf %155, %161 : vector<128x8xf32>
    %c0_197 = arith.constant 0 : index
    %c2_198 = arith.constant 2 : index
    %c2_199 = arith.constant 2 : index
    %c0_200 = arith.constant 0 : index
    %163 = vector.load %arg7[%c0_197, %c2_198, %c2_199, %c0_200] : memref<2x10x10x8xf32, #tpu.memory_space<vmem>>, vector<2x8x8x8xf32>
    %164 = vector.shape_cast %163 : vector<2x8x8x8xf32> to vector<128x8xf32>
    %165 = arith.truncf %164 : vector<128x8xf32> to vector<128x8xbf16>
    %c2_201 = arith.constant 2 : index
    %c2_202 = arith.constant 2 : index
    %c0_203 = arith.constant 0 : index
    %c0_204 = arith.constant 0 : index
    %166 = vector.load %arg3[%c2_201, %c2_202, %c0_203, %c0_204] : memref<3x3x8x8xbf16, #tpu.memory_space<vmem>>, vector<1x1x8x8xbf16>
    %167 = vector.shape_cast %166 : vector<1x1x8x8xbf16> to vector<8x8xbf16>
    %cst_205 = arith.constant dense<0.000000e+00> : vector<128x8xf32>
    %168 = tpu.matmul %165, %167, %cst_205 {dimension_numbers = #tpu.dot_dimension_numbers<[1], [0], [0], [1], [0, 0, 1, 1], [], []>} : vector<128x8xbf16>, vector<8x8xbf16>, vector<128x8xf32> -> vector<128x8xf32>
    %169 = arith.addf %162, %168 : vector<128x8xf32>
    %cst_206 = arith.constant dense<0.000000e+00> : vector<1x8xf32>
    %170 = tpu.matmul %7, %169, %cst_206 {dimension_numbers = #tpu.dot_dimension_numbers<[1], [0], [0], [1], [0, 0, 1, 1], [], []>} : vector<1x128xf32>, vector<128x8xf32>, vector<1x8xf32> -> vector<1x8xf32>
    %171 = arith.mulf %169, %169 : vector<128x8xf32>
    %cst_207 = arith.constant dense<0.000000e+00> : vector<1x8xf32>
    %172 = tpu.matmul %7, %171, %cst_207 {dimension_numbers = #tpu.dot_dimension_numbers<[1], [0], [0], [1], [0, 0, 1, 1], [], []>} : vector<1x128xf32>, vector<128x8xf32>, vector<1x8xf32> -> vector<1x8xf32>
    %cst_208 = arith.constant 7.812500e-03 : f32
    %173 = vector.broadcast %cst_208 : f32 to vector<1x8xf32>
    %174 = arith.mulf %170, %173 : vector<1x8xf32>
    %cst_209 = arith.constant 7.812500e-03 : f32
    %175 = vector.broadcast %cst_209 : f32 to vector<1x8xf32>
    %176 = arith.mulf %172, %175 : vector<1x8xf32>
    %177 = arith.mulf %174, %174 : vector<1x8xf32>
    %178 = arith.subf %176, %177 : vector<1x8xf32>
    %cst_210 = arith.constant 9.99999974E-6 : f32
    %179 = vector.broadcast %cst_210 : f32 to vector<1x8xf32>
    %180 = arith.addf %178, %179 : vector<1x8xf32>
    %181 = math.rsqrt %180 : vector<1x8xf32>
    %182 = arith.mulf %3, %181 : vector<1x8xf32>
    %183 = arith.mulf %174, %182 : vector<1x8xf32>
    %184 = arith.subf %4, %183 : vector<1x8xf32>
    %185 = vector.broadcast %182 : vector<1x8xf32> to vector<128x8xf32>
    %186 = arith.mulf %169, %185 : vector<128x8xf32>
    %187 = vector.broadcast %184 : vector<1x8xf32> to vector<128x8xf32>
    %188 = arith.addf %186, %187 : vector<128x8xf32>
    %c1_211 = arith.constant 1 : index
    %c1_212 = arith.constant 1 : index
    %c0_213 = arith.constant 0 : index
    %c0_214 = arith.constant 0 : index
    %c0_215 = arith.constant 0 : index
    %c0_216 = arith.constant 0 : index
    %189 = vector.load %arg1[%c1_211, %c1_212, %c0_213, %c0_214, %c0_215, %c0_216] : memref<2x2x2x9x9x4xf32, #tpu.memory_space<vmem>>, vector<1x1x2x8x8x4xf32>
    %190 = vector.shape_cast %189 : vector<1x1x2x8x8x4xf32> to vector<2x8x8x4xf32>
    %191 = vector.shape_cast %190 : vector<2x8x8x4xf32> to vector<128x4xf32>
    %192 = arith.truncf %191 : vector<128x4xf32> to vector<128x4xbf16>
    %c0_217 = arith.constant 0 : index
    %c0_218 = arith.constant 0 : index
    %193 = vector.load %arg4[%c0_217, %c0_218] : memref<4x8xbf16, #tpu.memory_space<vmem>>, vector<4x8xbf16>
    %cst_219 = arith.constant dense<0.000000e+00> : vector<128x8xf32>
    %194 = tpu.matmul %192, %193, %cst_219 {dimension_numbers = #tpu.dot_dimension_numbers<[1], [0], [0], [1], [0, 0, 1, 1], [], []>} : vector<128x4xbf16>, vector<4x8xbf16>, vector<128x8xf32> -> vector<128x8xf32>
    %cst_220 = arith.constant dense<0.000000e+00> : vector<1x8xf32>
    %195 = tpu.matmul %7, %194, %cst_220 {dimension_numbers = #tpu.dot_dimension_numbers<[1], [0], [0], [1], [0, 0, 1, 1], [], []>} : vector<1x128xf32>, vector<128x8xf32>, vector<1x8xf32> -> vector<1x8xf32>
    %196 = arith.mulf %194, %194 : vector<128x8xf32>
    %cst_221 = arith.constant dense<0.000000e+00> : vector<1x8xf32>
    %197 = tpu.matmul %7, %196, %cst_221 {dimension_numbers = #tpu.dot_dimension_numbers<[1], [0], [0], [1], [0, 0, 1, 1], [], []>} : vector<1x128xf32>, vector<128x8xf32>, vector<1x8xf32> -> vector<1x8xf32>
    %cst_222 = arith.constant 7.812500e-03 : f32
    %198 = vector.broadcast %cst_222 : f32 to vector<1x8xf32>
    %199 = arith.mulf %195, %198 : vector<1x8xf32>
    %cst_223 = arith.constant 7.812500e-03 : f32
    %200 = vector.broadcast %cst_223 : f32 to vector<1x8xf32>
    %201 = arith.mulf %197, %200 : vector<1x8xf32>
    %202 = arith.mulf %199, %199 : vector<1x8xf32>
    %203 = arith.subf %201, %202 : vector<1x8xf32>
    %cst_224 = arith.constant 9.99999974E-6 : f32
    %204 = vector.broadcast %cst_224 : f32 to vector<1x8xf32>
    %205 = arith.addf %203, %204 : vector<1x8xf32>
    %206 = math.rsqrt %205 : vector<1x8xf32>
    %207 = arith.mulf %5, %206 : vector<1x8xf32>
    %208 = arith.mulf %199, %207 : vector<1x8xf32>
    %209 = arith.subf %6, %208 : vector<1x8xf32>
    %210 = vector.broadcast %207 : vector<1x8xf32> to vector<128x8xf32>
    %211 = arith.mulf %194, %210 : vector<128x8xf32>
    %212 = vector.broadcast %209 : vector<1x8xf32> to vector<128x8xf32>
    %213 = arith.addf %211, %212 : vector<128x8xf32>
    %214 = arith.addf %188, %213 : vector<128x8xf32>
    %cst_225 = arith.constant 0.000000e+00 : f32
    %215 = vector.broadcast %cst_225 : f32 to vector<128x8xf32>
    %216 = arith.maximumf %214, %215 : vector<128x8xf32>
    %c0_226 = arith.constant 0 : index
    %c0_227 = arith.constant 0 : index
    %217 = vector.load %arg6[%c0_226, %c0_227] : memref<128x8xf32, #tpu.memory_space<vmem>>, vector<128x8xf32>
    tpu.vector_store %arg6[%c0_226, %c0_227], %216 {strides = array<i32>} : memref<128x8xf32, #tpu.memory_space<vmem>>, vector<128x8xf32>,
    return
  }
  func.func @transform_0(%arg0: i32) -> (i32, i32, i32, i32, i32, i32) {
    %c0_i32 = arith.constant 0 : i32
    %c0_i32_0 = arith.constant 0 : i32
    %c0_i32_1 = arith.constant 0 : i32
    %c0_i32_2 = arith.constant 0 : i32
    %c0_i32_3 = arith.constant 0 : i32
    %c0_i32_4 = arith.constant 0 : i32
    %c0_i32_5 = arith.constant 0 : i32
    return %c0_i32, %c0_i32_0, %c0_i32_1, %c0_i32_2, %c0_i32_3, %c0_i32_4 : i32, i32, i32, i32, i32, i32
  }
  func.func @transform_1(%arg0: i32) -> (i32, i32, i32, i32) {
    %c0_i32 = arith.constant 0 : i32
    %c0_i32_0 = arith.constant 0 : i32
    %c0_i32_1 = arith.constant 0 : i32
    %c0_i32_2 = arith.constant 0 : i32
    %c0_i32_3 = arith.constant 0 : i32
    return %c0_i32, %c0_i32_0, %c0_i32_1, %c0_i32_2 : i32, i32, i32, i32
  }
  func.func @transform_2(%arg0: i32) -> (i32, i32, i32, i32) {
    %c0_i32 = arith.constant 0 : i32
    %c0_i32_0 = arith.constant 0 : i32
    %c0_i32_1 = arith.constant 0 : i32
    %c0_i32_2 = arith.constant 0 : i32
    %c0_i32_3 = arith.constant 0 : i32
    return %c0_i32, %c0_i32_0, %c0_i32_1, %c0_i32_2 : i32, i32, i32, i32
  }
  func.func @transform_3(%arg0: i32) -> (i32, i32) {
    %c0_i32 = arith.constant 0 : i32
    %c0_i32_0 = arith.constant 0 : i32
    %c0_i32_1 = arith.constant 0 : i32
    return %c0_i32, %c0_i32_0 : i32, i32
  }
  func.func @transform_4(%arg0: i32) -> (i32, i32) {
    %c0_i32 = arith.constant 0 : i32
    %c0_i32_0 = arith.constant 0 : i32
    %c0_i32_1 = arith.constant 0 : i32
    return %c0_i32, %c0_i32_0 : i32, i32
  }
  func.func @transform_5(%arg0: i32) -> (i32, i32) {
    %c0_i32 = arith.constant 0 : i32
    %c0_i32_0 = arith.constant 0 : i32
    %c0_i32_1 = arith.constant 0 : i32
    return %c0_i32, %c0_i32_0 : i32, i32
  }
}

</mosaic_0001>

<llo_original>
// kernel: tpu_custom_call.1
$region0: #{tpu_custom_call.1}
  #allocation0 [shape = 'u32[]', space=smem, size = 0x4, offset = 0x4, fixed_abs, tag = 'smem constant byte address 0x4 - core index']
  #allocation1 [shape = 'u32[144,128]{1,0:T(1,128)}', space=vmem, size = 0x12000, scoped, tag = 'internal scratch']
  #allocation2 [shape = 'f32[2,10,10,8]{3,2,1,0:T(8,128)}', space=vmem, size = 0x28000, scoped, tag = 'scratch operand']
  %s0 = inlined_call_operand.vmem [shape: f32[2,2,2,9,9,4], index: 0, kind: input, shape index: {}]
  %s1 = inlined_call_operand.vmem [shape: bf16[3,3,4,8], index: 1, kind: input, shape index: {}]
  %s2 = inlined_call_operand.vmem [shape: bf16[3,3,8,8], index: 2, kind: input, shape index: {}]
  %s3 = inlined_call_operand.vmem [shape: bf16[4,8], index: 3, kind: input, shape index: {}]
  %s4 = inlined_call_operand.vmem [shape: f32[6,8], index: 4, kind: input, shape index: {}]
  %s5 = inlined_call_operand.vmem [shape: f32[128,8], index: 5, kind: output, shape index: {}]
  %s6 = sld [smem:[#allocation0]]
  $region30: #{tpu_custom_call.1} parent=0
    _
  %s8 = ssub.s32 1, %s6
  %s9 = scalar_select 0, %s8, %s6
  // Predicated region
  $region2: #{tpu_custom_call.1} parent=0 // pred_check
    _
  $region3: #{tpu_custom_call.1} parent=0 // pred_check_branch
    %11 = sbr.rel (0) target = $region5
  $region4: #{tpu_custom_call.1} parent=0 // pred_region
    _
  $region5: #{tpu_custom_call.1} parent=0 // pred_fallthru
    _
  // Predicated region
  $region6: #{tpu_custom_call.1} parent=0 // pred_check
    _
  $region7: #{tpu_custom_call.1} parent=0 // pred_check_branch
    %13 = sbr.rel (0) target = $region9
  $region8: #{tpu_custom_call.1} parent=0 // pred_region
    _
  $region9: #{tpu_custom_call.1} parent=0 // pred_fallthru
    _
  // Predicated region
  $region10: #{tpu_custom_call.1} parent=0 // pred_check
    _
  $region11: #{tpu_custom_call.1} parent=0 // pred_check_branch
    %15 = sbr.rel (0) target = $region13
  $region12: #{tpu_custom_call.1} parent=0 // pred_region
    _
  $region13: #{tpu_custom_call.1} parent=0 // pred_fallthru
    _
  // Predicated region
  $region14: #{tpu_custom_call.1} parent=0 // pred_check
    _
  $region15: #{tpu_custom_call.1} parent=0 // pred_check_branch
    %17 = sbr.rel (0) target = $region17
  $region16: #{tpu_custom_call.1} parent=0 // pred_region
    _
  $region17: #{tpu_custom_call.1} parent=0 // pred_fallthru
    _
  // Predicated region
  $region18: #{tpu_custom_call.1} parent=0 // pred_check
    _
  $region19: #{tpu_custom_call.1} parent=0 // pred_check_branch
    %19 = sbr.rel (0) target = $region21
  $region20: #{tpu_custom_call.1} parent=0 // pred_region
    _
  $region21: #{tpu_custom_call.1} parent=0 // pred_fallthru
    _
  %v21 = vld [vmem:[%s4] sm:$0x3f]
  %v22 = vld [vmem:[%s0] sm:$0xff]
  %v23 = vld [vmem:[%s0 + $0x10] sm:$0xff]
  %v24 = vld [vmem:[%s0 + $0x20] sm:$0xff]
  %v25 = vld [vmem:[%s0 + $0x30] sm:$0xff]
  %v26 = vld [vmem:[%s0 + $0x40] sm:$0xff]
  %v27 = vld [vmem:[%s0 + $0x50] sm:$0xff]
  %v28 = vld [vmem:[%s0 + $0x60] sm:$0xff]
  %v29 = vld [vmem:[%s0 + $0x70] sm:$0xff]
  %v30 = vld [vmem:[%s0 + $0x90] sm:$0xff]
  %v31 = vld [vmem:[%s0 + $0xa0] sm:$0xff]
  %v32 = vld [vmem:[%s0 + $0xb0] sm:$0xff]
  %v33 = vld [vmem:[%s0 + $0xc0] sm:$0xff]
  %v34 = vld [vmem:[%s0 + $0xd0] sm:$0xff]
  %v35 = vld [vmem:[%s0 + $0xe0] sm:$0xff]
  %v36 = vld [vmem:[%s0 + $0xf0] sm:$0xff]
  %v37 = vld [vmem:[%s0 + $0x100] sm:$0xff]
  %v38 = vpack.c.bf16 %v23, %v22
  %v39 = vpack.c.bf16 %v25, %v24
  %v40 = vpack.c.bf16 %v27, %v26
  %v41 = vpack.c.bf16 %v29, %v28
  %v42 = vpack.c.bf16 %v31, %v30
  %v43 = vpack.c.bf16 %v33, %v32
  %v44 = vpack.c.bf16 %v35, %v34
  %v45 = vpack.c.bf16 %v37, %v36
  %v46 = vld [vmem:[%s1] sm:$0x3]
  %s47 = scalar_lea.vmem %s0, 288
  %v48 = vld [vmem:[%s47] sm:$0xff]
  %v49 = vld [vmem:[%s47 + $0x10] sm:$0xff]
  %v50 = vld [vmem:[%s47 + $0x20] sm:$0xff]
  %v51 = vld [vmem:[%s47 + $0x30] sm:$0xff]
  %v52 = vld [vmem:[%s47 + $0x40] sm:$0xff]
  %v53 = vld [vmem:[%s47 + $0x50] sm:$0xff]
  %v54 = vld [vmem:[%s47 + $0x60] sm:$0xff]
  %v55 = vld [vmem:[%s47 + $0x70] sm:$0xff]
  %v56 = vld [vmem:[%s47 + $0x90] sm:$0xff]
  %v57 = vld [vmem:[%s47 + $0xa0] sm:$0xff]
  %v58 = vld [vmem:[%s47 + $0xb0] sm:$0xff]
  %v59 = vld [vmem:[%s47 + $0xc0] sm:$0xff]
  %v60 = vld [vmem:[%s47 + $0xd0] sm:$0xff]
  %v61 = vld [vmem:[%s47 + $0xe0] sm:$0xff]
  %v62 = vld [vmem:[%s47 + $0xf0] sm:$0xff]
  %v63 = vld [vmem:[%s47 + $0x100] sm:$0xff]
  %v64 = vpack.c.bf16 %v49, %v48
  %v65 = vpack.c.bf16 %v51, %v50
  %v66 = vpack.c.bf16 %v53, %v52
  %v67 = vpack.c.bf16 %v55, %v54
  %v68 = vpack.c.bf16 %v57, %v56
  %v69 = vpack.c.bf16 %v59, %v58
  %v70 = vpack.c.bf16 %v61, %v60
  %v71 = vpack.c.bf16 %v63, %v62
  %s72 = scalar_lea.vmem %s1, 2
  %v73 = vld [vmem:[%s72] sm:$0x3]
  %vm74 = vcmask 31744
  %v76 = vsel %vm74, %v64, 0
  %v79 = vsel %vm74, %v65, 0
  %v82 = vsel %vm74, %v66, 0
  %v85 = vsel %vm74, %v67, 0
  %v88 = vsel %vm74, %v68, 0
  %v91 = vsel %vm74, %v69, 0
  %v94 = vsel %vm74, %v70, 0
  %v97 = vsel %vm74, %v71, 0
  %vm99 = vcmask 1041408
  %v101 = vsel %vm99, %v73, 0
  %103 = vmatprep.subr.bf16.mxu0 0
  %104 = vmatpush1.bf16.msra.mxu0 %v101
  %105 = vmatprep.subr.bf16.mxu0 0
  %106 = vmatpush1.bf16.msra.mxu0 0
  %107 = vmatprep.subr.bf16.mxu0 0
  %108 = vmatpush1.bf16.msra.mxu0 0
  %109 = vmatprep.subr.bf16.mxu0 0
  %110 = vmatpush1.bf16.msra.mxu0 0
  %111 = vmatprep.subr.bf16.mxu0 0
  %112 = vmatpush1.bf16.msra.mxu0 0
  %113 = vmatprep.subr.bf16.mxu0 0
  %114 = vmatpush1.bf16.msra.mxu0 0
  %115 = vmatprep.subr.bf16.mxu0 0
  %116 = vmatpush1.bf16.msra.mxu0 0
  %117 = vmatprep.subr.bf16.mxu0 0
  %118 = vmatpush1.bf16.msra.mxu0 0
  %119 = vmatprep.subr.bf16.mxu0 0
  %120 = vmatpush1.bf16.msra.mxu0 0
  %121 = vmatprep.subr.bf16.mxu0 0
  %122 = vmatpush1.bf16.msra.mxu0 0
  %123 = vmatprep.subr.bf16.mxu0 0
  %124 = vmatpush1.bf16.msra.mxu0 0
  %125 = vmatprep.subr.bf16.mxu0 0
  %126 = vmatpush1.bf16.msra.mxu0 0
  %127 = vmatprep.subr.bf16.mxu0 0
  %128 = vmatpush1.bf16.msra.mxu0 0
  %129 = vmatprep.subr.bf16.mxu0 0
  %130 = vmatpush1.bf16.msra.mxu0 0
  %131 = vmatprep.subr.bf16.mxu0 0
  %132 = vmatpush1.bf16.msra.mxu0 0
  %133 = vmatprep.subr.bf16.mxu0 0
  %134 = vmatpush1.bf16.msra.mxu0 0
  %135 = vmatprep.mubr.bf16.mxu0 0
  %136 = vmatmul.mubr.bf16.gmra.mrb[0].mxu0 %v76
  %v137 = vpop.f32.mrb[0].mxu0
  %v138 = vadd.f32 0.0, %v137
  %v139 = vpop.f32.mrb[0].mxu0
  %v140 = vpop.f32.mrb[0].mxu0
  %v141 = vadd.f32 0.0, %v140
  %v142 = vpop.f32.mrb[0].mxu0
  %143 = vmatprep.mubr.bf16.mxu0 0
  %144 = vmatmul.mubr.bf16.gmra.mrb[0].mxu0 %v79
  %v145 = vpop.f32.mrb[0].mxu0
  %v146 = vadd.f32 0.0, %v145
  %v147 = vpop.f32.mrb[0].mxu0
  %v148 = vpop.f32.mrb[0].mxu0
  %v149 = vadd.f32 0.0, %v148
  %v150 = vpop.f32.mrb[0].mxu0
  %151 = vmatprep.mubr.bf16.mxu0 0
  %152 = vmatmul.mubr.bf16.gmra.mrb[0].mxu0 %v82
  %v153 = vpop.f32.mrb[0].mxu0
  %v154 = vadd.f32 0.0, %v153
  %v155 = vpop.f32.mrb[0].mxu0
  %v156 = vpop.f32.mrb[0].mxu0
  %v157 = vadd.f32 0.0, %v156
  %v158 = vpop.f32.mrb[0].mxu0
  %159 = vmatprep.mubr.bf16.mxu0 0
  %160 = vmatmul.mubr.bf16.gmra.mrb[0].mxu0 %v85
  %v161 = vpop.f32.mrb[0].mxu0
  %v162 = vadd.f32 0.0, %v161
  %v163 = vpop.f32.mrb[0].mxu0
  %v164 = vpop.f32.mrb[0].mxu0
  %v165 = vadd.f32 0.0, %v164
  %v166 = vpop.f32.mrb[0].mxu0
  %167 = vmatprep.mubr.bf16.mxu0 0
  %168 = vmatmul.mubr.bf16.gmra.mrb[0].mxu0 %v88
  %v169 = vpop.f32.mrb[0].mxu0
  %v170 = vadd.f32 0.0, %v169
  %v171 = vpop.f32.mrb[0].mxu0
  %v172 = vpop.f32.mrb[0].mxu0
  %v173 = vadd.f32 0.0, %v172
  %v174 = vpop.f32.mrb[0].mxu0
  %175 = vmatprep.mubr.bf16.mxu0 0
  %176 = vmatmul.mubr.bf16.gmra.mrb[0].mxu0 %v91
  %v177 = vpop.f32.mrb[0].mxu0
  %v178 = vadd.f32 0.0, %v177
  %v179 = vpop.f32.mrb[0].mxu0
  %v180 = vpop.f32.mrb[0].mxu0
  %v181 = vadd.f32 0.0, %v180
  %v182 = vpop.f32.mrb[0].mxu0
  %183 = vmatprep.mubr.bf16.mxu0 0
  %184 = vmatmul.mubr.bf16.gmra.mrb[0].mxu0 %v94
  %v185 = vpop.f32.mrb[0].mxu0
  %v186 = vadd.f32 0.0, %v185
  %v187 = vpop.f32.mrb[0].mxu0
  %v188 = vpop.f32.mrb[0].mxu0
  %v189 = vadd.f32 0.0, %v188
  %v190 = vpop.f32.mrb[0].mxu0
  %191 = vmatprep.mubr.bf16.mxu0 0
  %192 = vmatmul.mubr.bf16.gmra.mrb[0].mxu0 %v97
  %v193 = vpop.f32.mrb[0].mxu0
  %v194 = vadd.f32 0.0, %v193
  %v195 = vpop.f32.mrb[0].mxu0
  %v196 = vpop.f32.mrb[0].mxu0
  %v197 = vadd.f32 0.0, %v196
  %v198 = vpop.f32.mrb[0].mxu0
  %199 = vdwg.mxu0
  %v201 = vsel %vm74, %v38, 0
  %v204 = vsel %vm74, %v39, 0
  %v207 = vsel %vm74, %v40, 0
  %v210 = vsel %vm74, %v41, 0
  %v213 = vsel %vm74, %v42, 0
  %v216 = vsel %vm74, %v43, 0
  %v219 = vsel %vm74, %v44, 0
  %v222 = vsel %vm74, %v45, 0
  %v225 = vsel %vm99, %v46, 0
  %227 = vmatprep.subr.bf16.mxu0 0
  %228 = vmatpush1.bf16.msra.mxu0 %v225
  %229 = vmatprep.subr.bf16.mxu0 0
  %230 = vmatpush1.bf16.msra.mxu0 0
  %231 = vmatprep.subr.bf16.mxu0 0
  %232 = vmatpush1.bf16.msra.mxu0 0
  %233 = vmatprep.subr.bf16.mxu0 0
  %234 = vmatpush1.bf16.msra.mxu0 0
  %235 = vmatprep.subr.bf16.mxu0 0
  %236 = vmatpush1.bf16.msra.mxu0 0
  %237 = vmatprep.subr.bf16.mxu0 0
  %238 = vmatpush1.bf16.msra.mxu0 0
  %239 = vmatprep.subr.bf16.mxu0 0
  %240 = vmatpush1.bf16.msra.mxu0 0
  %241 = vmatprep.subr.bf16.mxu0 0
  %242 = vmatpush1.bf16.msra.mxu0 0
  %243 = vmatprep.subr.bf16.mxu0 0
  %244 = vmatpush1.bf16.msra.mxu0 0
  %245 = vmatprep.subr.bf16.mxu0 0
  %246 = vmatpush1.bf16.msra.mxu0 0
  %247 = vmatprep.subr.bf16.mxu0 0
  %248 = vmatpush1.bf16.msra.mxu0 0
  %249 = vmatprep.subr.bf16.mxu0 0
  %250 = vmatpush1.bf16.msra.mxu0 0
  %251 = vmatprep.subr.bf16.mxu0 0
  %252 = vmatpush1.bf16.msra.mxu0 0
  %253 = vmatprep.subr.bf16.mxu0 0
  %254 = vmatpush1.bf16.msra.mxu0 0
  %255 = vmatprep.subr.bf16.mxu0 0
  %256 = vmatpush1.bf16.msra.mxu0 0
  %257 = vmatprep.subr.bf16.mxu0 0
  %258 = vmatpush1.bf16.msra.mxu0 0
  %259 = vmatprep.mubr.bf16.mxu0 0
  %260 = vmatmul.mubr.bf16.gmra.mrb[0].mxu0 %v201
  %v261 = vpop.f32.mrb[0].mxu0
  %v262 = vadd.f32 %v138, %v261
  %v263 = vpop.f32.mrb[0].mxu0
  %v264 = vpop.f32.mrb[0].mxu0
  %v265 = vadd.f32 %v141, %v264
  %v266 = vpop.f32.mrb[0].mxu0
  %267 = vmatprep.mubr.bf16.mxu0 0
  %268 = vmatmul.mubr.bf16.gmra.mrb[0].mxu0 %v204
  %v269 = vpop.f32.mrb[0].mxu0
  %v270 = vadd.f32 %v146, %v269
  %v271 = vpop.f32.mrb[0].mxu0
  %v272 = vpop.f32.mrb[0].mxu0
  %v273 = vadd.f32 %v149, %v272
  %v274 = vpop.f32.mrb[0].mxu0
  %275 = vmatprep.mubr.bf16.mxu0 0
  %276 = vmatmul.mubr.bf16.gmra.mrb[0].mxu0 %v207
  %v277 = vpop.f32.mrb[0].mxu0
  %v278 = vadd.f32 %v154, %v277
  %v279 = vpop.f32.mrb[0].mxu0
  %v280 = vpop.f32.mrb[0].mxu0
  %v281 = vadd.f32 %v157, %v280
  %v282 = vpop.f32.mrb[0].mxu0
  %283 = vmatprep.mubr.bf16.mxu0 0
  %284 = vmatmul.mubr.bf16.gmra.mrb[0].mxu0 %v210
  %v285 = vpop.f32.mrb[0].mxu0
  %v286 = vadd.f32 %v162, %v285
  %v287 = vpop.f32.mrb[0].mxu0
  %v288 = vpop.f32.mrb[0].mxu0
  %v289 = vadd.f32 %v165, %v288
  %v290 = vpop.f32.mrb[0].mxu0
  %291 = vmatprep.mubr.bf16.mxu0 0
  %292 = vmatmul.mubr.bf16.gmra.mrb[0].mxu0 %v213
  %v293 = vpop.f32.mrb[0].mxu0
  %v294 = vadd.f32 %v170, %v293
  %v295 = vpop.f32.mrb[0].mxu0
  %v296 = vpop.f32.mrb[0].mxu0
  %v297 = vadd.f32 %v173, %v296
  %v298 = vpop.f32.mrb[0].mxu0
  %299 = vmatprep.mubr.bf16.mxu0 0
  %300 = vmatmul.mubr.bf16.gmra.mrb[0].mxu0 %v216
  %v301 = vpop.f32.mrb[0].mxu0
  %v302 = vadd.f32 %v178, %v301
  %v303 = vpop.f32.mrb[0].mxu0
  %v304 = vpop.f32.mrb[0].mxu0
  %v305 = vadd.f32 %v181, %v304
  %v306 = vpop.f32.mrb[0].mxu0
  %307 = vmatprep.mubr.bf16.mxu0 0
  %308 = vmatmul.mubr.bf16.gmra.mrb[0].mxu0 %v219
  %v309 = vpop.f32.mrb[0].mxu0
  %v310 = vadd.f32 %v186, %v309
  %v311 = vpop.f32.mrb[0].mxu0
  %v312 = vpop.f32.mrb[0].mxu0
  %v313 = vadd.f32 %v189, %v312
  %v314 = vpop.f32.mrb[0].mxu0
  %315 = vmatprep.mubr.bf16.mxu0 0
  %316 = vmatmul.mubr.bf16.gmra.mrb[0].mxu0 %v222
  %v317 = vpop.f32.mrb[0].mxu0
  %v318 = vadd.f32 %v194, %v317
  %v319 = vpop.f32.mrb[0].mxu0
  %v320 = vpop.f32.mrb[0].mxu0
  %v321 = vadd.f32 %v197, %v320
  %v322 = vpop.f32.mrb[0].mxu0
  %323 = vdwg.mxu0
  %v324 = vld [vmem:[%s0 + $0x1] sm:$0xff]
  %v325 = vld [vmem:[%s0 + $0x11] sm:$0xff]
  %v326 = vld [vmem:[%s0 + $0x21] sm:$0xff]
  %v327 = vld [vmem:[%s0 + $0x31] sm:$0xff]
  %v328 = vld [vmem:[%s0 + $0x41] sm:$0xff]
  %v329 = vld [vmem:[%s0 + $0x51] sm:$0xff]
  %v330 = vld [vmem:[%s0 + $0x61] sm:$0xff]
  %v331 = vld [vmem:[%s0 + $0x71] sm:$0xff]
  %v332 = vld [vmem:[%s0 + $0x91] sm:$0xff]
  %v333 = vld [vmem:[%s0 + $0xa1] sm:$0xff]
  %v334 = vld [vmem:[%s0 + $0xb1] sm:$0xff]
  %v335 = vld [vmem:[%s0 + $0xc1] sm:$0xff]
  %v336 = vld [vmem:[%s0 + $0xd1] sm:$0xff]
  %v337 = vld [vmem:[%s0 + $0xe1] sm:$0xff]
  %v338 = vld [vmem:[%s0 + $0xf1] sm:$0xff]
  %v339 = vld [vmem:[%s0 + $0x101] sm:$0xff]
  %v340 = vpack.c.bf16 %v325, %v324
  %v341 = vpack.c.bf16 %v327, %v326
  %v342 = vpack.c.bf16 %v329, %v328
  %v343 = vpack.c.bf16 %v331, %v330
  %v344 = vpack.c.bf16 %v333, %v332
  %v345 = vpack.c.bf16 %v335, %v334
  %v346 = vpack.c.bf16 %v337, %v336
  %v347 = vpack.c.bf16 %v339, %v338
  %s348 = scalar_lea.vmem %s1, 4
  %v349 = vld [vmem:[%s348] sm:$0x3]
  %v351 = vsel %vm74, %v340, 0
  %v354 = vsel %vm74, %v341, 0
  %v357 = vsel %vm74, %v342, 0
  %v360 = vsel %vm74, %v343, 0
  %v363 = vsel %vm74, %v344, 0
  %v366 = vsel %vm74, %v345, 0
  %v369 = vsel %vm74, %v346, 0
  %v372 = vsel %vm74, %v347, 0
  %v375 = vsel %vm99, %v349, 0
  %377 = vmatprep.subr.bf16.mxu0 0
  %378 = vmatpush1.bf16.msra.mxu0 %v375
  %379 = vmatprep.subr.bf16.mxu0 0
  %380 = vmatpush1.bf16.msra.mxu0 0
  %381 = vmatprep.subr.bf16.mxu0 0
  %382 = vmatpush1.bf16.msra.mxu0 0
  %383 = vmatprep.subr.bf16.mxu0 0
  %384 = vmatpush1.bf16.msra.mxu0 0
  %385 = vmatprep.subr.bf16.mxu0 0
  %386 = vmatpush1.bf16.msra.mxu0 0
  %387 = vmatprep.subr.bf16.mxu0 0
  %388 = vmatpush1.bf16.msra.mxu0 0
  %389 = vmatprep.subr.bf16.mxu0 0
  %390 = vmatpush1.bf16.msra.mxu0 0
  %391 = vmatprep.subr.bf16.mxu0 0
  %392 = vmatpush1.bf16.msra.mxu0 0
  %393 = vmatprep.subr.bf16.mxu0 0
  %394 = vmatpush1.bf16.msra.mxu0 0
  %395 = vmatprep.subr.bf16.mxu0 0
  %396 = vmatpush1.bf16.msra.mxu0 0
  %397 = vmatprep.subr.bf16.mxu0 0
  %398 = vmatpush1.bf16.msra.mxu0 0
  %399 = vmatprep.subr.bf16.mxu0 0
  %400 = vmatpush1.bf16.msra.mxu0 0
  %401 = vmatprep.subr.bf16.mxu0 0
  %402 = vmatpush1.bf16.msra.mxu0 0
  %403 = vmatprep.subr.bf16.mxu0 0
  %404 = vmatpush1.bf16.msra.mxu0 0
  %405 = vmatprep.subr.bf16.mxu0 0
  %406 = vmatpush1.bf16.msra.mxu0 0
  %407 = vmatprep.subr.bf16.mxu0 0
  %408 = vmatpush1.bf16.msra.mxu0 0
  %409 = vmatprep.mubr.bf16.mxu0 0
  %410 = vmatmul.mubr.bf16.gmra.mrb[0].mxu0 %v351
  %v411 = vpop.f32.mrb[0].mxu0
  %v412 = vadd.f32 0.0, %v411
  %v413 = vpop.f32.mrb[0].mxu0
  %v414 = vpop.f32.mrb[0].mxu0
  %v415 = vadd.f32 0.0, %v414
  %v416 = vpop.f32.mrb[0].mxu0
  %417 = vmatprep.mubr.bf16.mxu0 0
  %418 = vmatmul.mubr.bf16.gmra.mrb[0].mxu0 %v354
  %v419 = vpop.f32.mrb[0].mxu0
  %v420 = vadd.f32 0.0, %v419
  %v421 = vpop.f32.mrb[0].mxu0
  %v422 = vpop.f32.mrb[0].mxu0
  %v423 = vadd.f32 0.0, %v422
  %v424 = vpop.f32.mrb[0].mxu0
  %425 = vmatprep.mubr.bf16.mxu0 0
  %426 = vmatmul.mubr.bf16.gmra.mrb[0].mxu0 %v357
  %v427 = vpop.f32.mrb[0].mxu0
  %v428 = vadd.f32 0.0, %v427
  %v429 = vpop.f32.mrb[0].mxu0
  %v430 = vpop.f32.mrb[0].mxu0
  %v431 = vadd.f32 0.0, %v430
  %v432 = vpop.f32.mrb[0].mxu0
  %433 = vmatprep.mubr.bf16.mxu0 0
  %434 = vmatmul.mubr.bf16.gmra.mrb[0].mxu0 %v360
  %v435 = vpop.f32.mrb[0].mxu0
  %v436 = vadd.f32 0.0, %v435
  %v437 = vpop.f32.mrb[0].mxu0
  %v438 = vpop.f32.mrb[0].mxu0
  %v439 = vadd.f32 0.0, %v438
  %v440 = vpop.f32.mrb[0].mxu0
  %441 = vmatprep.mubr.bf16.mxu0 0
  %442 = vmatmul.mubr.bf16.gmra.mrb[0].mxu0 %v363
  %v443 = vpop.f32.mrb[0].mxu0
  %v444 = vadd.f32 0.0, %v443
  %v445 = vpop.f32.mrb[0].mxu0
  %v446 = vpop.f32.mrb[0].mxu0
  %v447 = vadd.f32 0.0, %v446
  %v448 = vpop.f32.mrb[0].mxu0
  %449 = vmatprep.mubr.bf16.mxu0 0
  %450 = vmatmul.mubr.bf16.gmra.mrb[0].mxu0 %v366
  %v451 = vpop.f32.mrb[0].mxu0
  %v452 = vadd.f32 0.0, %v451
  %v453 = vpop.f32.mrb[0].mxu0
  %v454 = vpop.f32.mrb[0].mxu0
  %v455 = vadd.f32 0.0, %v454
  %v456 = vpop.f32.mrb[0].mxu0
  %457 = vmatprep.mubr.bf16.mxu0 0
  %458 = vmatmul.mubr.bf16.gmra.mrb[0].mxu0 %v369
  %v459 = vpop.f32.mrb[0].mxu0
  %v460 = vadd.f32 0.0, %v459
  %v461 = vpop.f32.mrb[0].mxu0
  %v462 = vpop.f32.mrb[0].mxu0
  %v463 = vadd.f32 0.0, %v462
  %v464 = vpop.f32.mrb[0].mxu0
  %465 = vmatprep.mubr.bf16.mxu0 0
  %466 = vmatmul.mubr.bf16.gmra.mrb[0].mxu0 %v372
  %v467 = vpop.f32.mrb[0].mxu0
  %v468 = vadd.f32 0.0, %v467
  %v469 = vpop.f32.mrb[0].mxu0
  %v470 = vpop.f32.mrb[0].mxu0
  %v471 = vadd.f32 0.0, %v470
  %v472 = vpop.f32.mrb[0].mxu0
  %473 = vdwg.mxu0
  %v474 = vadd.f32 %v262, %v412
  %v475 = vadd.f32 %v265, %v415
  %v476 = vadd.f32 %v270, %v420
  %v477 = vadd.f32 %v273, %v423
  %v478 = vadd.f32 %v278, %v428
  %v479 = vadd.f32 %v281, %v431
  %v480 = vadd.f32 %v286, %v436
  %v481 = vadd.f32 %v289, %v439
  %v482 = vadd.f32 %v294, %v444
  %v483 = vadd.f32 %v297, %v447
  %v484 = vadd.f32 %v302, %v452
  %v485 = vadd.f32 %v305, %v455
  %v486 = vadd.f32 %v310, %v460
  %v487 = vadd.f32 %v313, %v463
  %v488 = vadd.f32 %v318, %v468
  %v489 = vadd.f32 %v321, %v471
  %s490 = scalar_lea.vmem %s0, 576
  %v491 = vld [vmem:[%s490] sm:$0xff]
  %v492 = vld [vmem:[%s490 + $0x10] sm:$0xff]
  %v493 = vld [vmem:[%s490 + $0x20] sm:$0xff]
  %v494 = vld [vmem:[%s490 + $0x30] sm:$0xff]
  %v495 = vld [vmem:[%s490 + $0x40] sm:$0xff]
  %v496 = vld [vmem:[%s490 + $0x50] sm:$0xff]
  %v497 = vld [vmem:[%s490 + $0x60] sm:$0xff]
  %v498 = vld [vmem:[%s490 + $0x70] sm:$0xff]
  %v499 = vld [vmem:[%s490 + $0x90] sm:$0xff]
  %v500 = vld [vmem:[%s490 + $0xa0] sm:$0xff]
  %v501 = vld [vmem:[%s490 + $0xb0] sm:$0xff]
  %v502 = vld [vmem:[%s490 + $0xc0] sm:$0xff]
  %v503 = vld [vmem:[%s490 + $0xd0] sm:$0xff]
  %v504 = vld [vmem:[%s490 + $0xe0] sm:$0xff]
  %v505 = vld [vmem:[%s490 + $0xf0] sm:$0xff]
  %v506 = vld [vmem:[%s490 + $0x100] sm:$0xff]
  %v507 = vpack.c.bf16 %v492, %v491
  %v508 = vpack.c.bf16 %v494, %v493
  %v509 = vpack.c.bf16 %v496, %v495
  %v510 = vpack.c.bf16 %v498, %v497
  %v511 = vpack.c.bf16 %v500, %v499
  %v512 = vpack.c.bf16 %v502, %v501
  %v513 = vpack.c.bf16 %v504, %v503
  %v514 = vpack.c.bf16 %v506, %v505
  %s515 = scalar_lea.vmem %s1, 6
  %v516 = vld [vmem:[%s515] sm:$0x3]
  %v518 = vsel %vm74, %v507, 0
  %v521 = vsel %vm74, %v508, 0
  %v524 = vsel %vm74, %v509, 0
  %v527 = vsel %vm74, %v510, 0
  %v530 = vsel %vm74, %v511, 0
  %v533 = vsel %vm74, %v512, 0
  %v536 = vsel %vm74, %v513, 0
  %v539 = vsel %vm74, %v514, 0
  %v542 = vsel %vm99, %v516, 0
  %544 = vmatprep.subr.bf16.mxu0 0
  %545 = vmatpush1.bf16.msra.mxu0 %v542
  %546 = vmatprep.subr.bf16.mxu0 0
  %547 = vmatpush1.bf16.msra.mxu0 0
  %548 = vmatprep.subr.bf16.mxu0 0
  %549 = vmatpush1.bf16.msra.mxu0 0
  %550 = vmatprep.subr.bf16.mxu0 0
  %551 = vmatpush1.bf16.msra.mxu0 0
  %552 = vmatprep.subr.bf16.mxu0 0
  %553 = vmatpush1.bf16.msra.mxu0 0
  %554 = vmatprep.subr.bf16.mxu0 0
  %555 = vmatpush1.bf16.msra.mxu0 0
  %556 = vmatprep.subr.bf16.mxu0 0
  %557 = vmatpush1.bf16.msra.mxu0 0
  %558 = vmatprep.subr.bf16.mxu0 0
  %559 = vmatpush1.bf16.msra.mxu0 0
  %560 = vmatprep.subr.bf16.mxu0 0
  %561 = vmatpush1.bf16.msra.mxu0 0
  %562 = vmatprep.subr.bf16.mxu0 0
  %563 = vmatpush1.bf16.msra.mxu0 0
  %564 = vmatprep.subr.bf16.mxu0 0
  %565 = vmatpush1.bf16.msra.mxu0 0
  %566 = vmatprep.subr.bf16.mxu0 0
  %567 = vmatpush1.bf16.msra.mxu0 0
  %568 = vmatprep.subr.bf16.mxu0 0
  %569 = vmatpush1.bf16.msra.mxu0 0
  %570 = vmatprep.subr.bf16.mxu0 0
  %571 = vmatpush1.bf16.msra.mxu0 0
  %572 = vmatprep.subr.bf16.mxu0 0
  %573 = vmatpush1.bf16.msra.mxu0 0
  %574 = vmatprep.subr.bf16.mxu0 0
  %575 = vmatpush1.bf16.msra.mxu0 0
  %576 = vmatprep.mubr.bf16.mxu0 0
  %577 = vmatmul.mubr.bf16.gmra.mrb[0].mxu0 %v518
  %v578 = vpop.f32.mrb[0].mxu0
  %v579 = vadd.f32 0.0, %v578
  %v580 = vpop.f32.mrb[0].mxu0
  %v581 = vpop.f32.mrb[0].mxu0
  %v582 = vadd.f32 0.0, %v581
  %v583 = vpop.f32.mrb[0].mxu0
  %584 = vmatprep.mubr.bf16.mxu0 0
  %585 = vmatmul.mubr.bf16.gmra.mrb[0].mxu0 %v521
  %v586 = vpop.f32.mrb[0].mxu0
  %v587 = vadd.f32 0.0, %v586
  %v588 = vpop.f32.mrb[0].mxu0
  %v589 = vpop.f32.mrb[0].mxu0
  %v590 = vadd.f32 0.0, %v589
  %v591 = vpop.f32.mrb[0].mxu0
  %592 = vmatprep.mubr.bf16.mxu0 0
  %593 = vmatmul.mubr.bf16.gmra.mrb[0].mxu0 %v524
  %v594 = vpop.f32.mrb[0].mxu0
  %v595 = vadd.f32 0.0, %v594
  %v596 = vpop.f32.mrb[0].mxu0
  %v597 = vpop.f32.mrb[0].mxu0
  %v598 = vadd.f32 0.0, %v597
  %v599 = vpop.f32.mrb[0].mxu0
  %600 = vmatprep.mubr.bf16.mxu0 0
  %601 = vmatmul.mubr.bf16.gmra.mrb[0].mxu0 %v527
  %v602 = vpop.f32.mrb[0].mxu0
  %v603 = vadd.f32 0.0, %v602
  %v604 = vpop.f32.mrb[0].mxu0
  %v605 = vpop.f32.mrb[0].mxu0
  %v606 = vadd.f32 0.0, %v605
  %v607 = vpop.f32.mrb[0].mxu0
  %608 = vmatprep.mubr.bf16.mxu0 0
  %609 = vmatmul.mubr.bf16.gmra.mrb[0].mxu0 %v530
  %v610 = vpop.f32.mrb[0].mxu0
  %v611 = vadd.f32 0.0, %v610
  %v612 = vpop.f32.mrb[0].mxu0
  %v613 = vpop.f32.mrb[0].mxu0
  %v614 = vadd.f32 0.0, %v613
  %v615 = vpop.f32.mrb[0].mxu0
  %616 = vmatprep.mubr.bf16.mxu0 0
  %617 = vmatmul.mubr.bf16.gmra.mrb[0].mxu0 %v533
  %v618 = vpop.f32.mrb[0].mxu0
  %v619 = vadd.f32 0.0, %v618
  %v620 = vpop.f32.mrb[0].mxu0
  %v621 = vpop.f32.mrb[0].mxu0
  %v622 = vadd.f32 0.0, %v621
  %v623 = vpop.f32.mrb[0].mxu0
  %624 = vmatprep.mubr.bf16.mxu0 0
  %625 = vmatmul.mubr.bf16.gmra.mrb[0].mxu0 %v536
  %v626 = vpop.f32.mrb[0].mxu0
  %v627 = vadd.f32 0.0, %v626
  %v628 = vpop.f32.mrb[0].mxu0
  %v629 = vpop.f32.mrb[0].mxu0
  %v630 = vadd.f32 0.0, %v629
  %v631 = vpop.f32.mrb[0].mxu0
  %632 = vmatprep.mubr.bf16.mxu0 0
  %633 = vmatmul.mubr.bf16.gmra.mrb[0].mxu0 %v539
  %v634 = vpop.f32.mrb[0].mxu0
  %v635 = vadd.f32 0.0, %v634
  %v636 = vpop.f32.mrb[0].mxu0
  %v637 = vpop.f32.mrb[0].mxu0
  %v638 = vadd.f32 0.0, %v637
  %v639 = vpop.f32.mrb[0].mxu0
  %640 = vdwg.mxu0
  %v641 = vadd.f32 %v474, %v579
  %v642 = vadd.f32 %v475, %v582
  %v643 = vadd.f32 %v476, %v587
  %v644 = vadd.f32 %v477, %v590
  %v645 = vadd.f32 %v478, %v595
  %v646 = vadd.f32 %v479, %v598
  %v647 = vadd.f32 %v480, %v603
  %v648 = vadd.f32 %v481, %v606
  %v649 = vadd.f32 %v482, %v611
  %v650 = vadd.f32 %v483, %v614
  %v651 = vadd.f32 %v484, %v619
  %v652 = vadd.f32 %v485, %v622
  %v653 = vadd.f32 %v486, %v627
  %v654 = vadd.f32 %v487, %v630
  %v655 = vadd.f32 %v488, %v635
  %v656 = vadd.f32 %v489, %v638
  %s657 = scalar_lea.vmem %s0, 864
  %v658 = vld [vmem:[%s657] sm:$0xff]
  %v659 = vld [vmem:[%s657 + $0x10] sm:$0xff]
  %v660 = vld [vmem:[%s657 + $0x20] sm:$0xff]
  %v661 = vld [vmem:[%s657 + $0x30] sm:$0xff]
  %v662 = vld [vmem:[%s657 + $0x40] sm:$0xff]
  %v663 = vld [vmem:[%s657 + $0x50] sm:$0xff]
  %v664 = vld [vmem:[%s657 + $0x60] sm:$0xff]
  %v665 = vld [vmem:[%s657 + $0x70] sm:$0xff]
  %v666 = vld [vmem:[%s657 + $0x90] sm:$0xff]
  %v667 = vld [vmem:[%s657 + $0xa0] sm:$0xff]
  %v668 = vld [vmem:[%s657 + $0xb0] sm:$0xff]
  %v669 = vld [vmem:[%s657 + $0xc0] sm:$0xff]
  %v670 = vld [vmem:[%s657 + $0xd0] sm:$0xff]
  %v671 = vld [vmem:[%s657 + $0xe0] sm:$0xff]
  %v672 = vld [vmem:[%s657 + $0xf0] sm:$0xff]
  %v673 = vld [vmem:[%s657 + $0x100] sm:$0xff]
  %v674 = vpack.c.bf16 %v659, %v658
  %v675 = vpack.c.bf16 %v661, %v660
  %v676 = vpack.c.bf16 %v663, %v662
  %v677 = vpack.c.bf16 %v665, %v664
  %v678 = vpack.c.bf16 %v667, %v666
  %v679 = vpack.c.bf16 %v669, %v668
  %v680 = vpack.c.bf16 %v671, %v670
  %v681 = vpack.c.bf16 %v673, %v672
  %s682 = scalar_lea.vmem %s1, 8
  %v683 = vld [vmem:[%s682] sm:$0x3]
  %v685 = vsel %vm74, %v674, 0
  %v688 = vsel %vm74, %v675, 0
  %v691 = vsel %vm74, %v676, 0
  %v694 = vsel %vm74, %v677, 0
  %v697 = vsel %vm74, %v678, 0
  %v700 = vsel %vm74, %v679, 0
  %v703 = vsel %vm74, %v680, 0
  %v706 = vsel %vm74, %v681, 0
  %v709 = vsel %vm99, %v683, 0
  %711 = vmatprep.subr.bf16.mxu0 0
  %712 = vmatpush1.bf16.msra.mxu0 %v709
  %713 = vmatprep.subr.bf16.mxu0 0
  %714 = vmatpush1.bf16.msra.mxu0 0
  %715 = vmatprep.subr.bf16.mxu0 0
  %716 = vmatpush1.bf16.msra.mxu0 0
  %717 = vmatprep.subr.bf16.mxu0 0
  %718 = vmatpush1.bf16.msra.mxu0 0
  %719 = vmatprep.subr.bf16.mxu0 0
  %720 = vmatpush1.bf16.msra.mxu0 0
  %721 = vmatprep.subr.bf16.mxu0 0
  %722 = vmatpush1.bf16.msra.mxu0 0
  %723 = vmatprep.subr.bf16.mxu0 0
  %724 = vmatpush1.bf16.msra.mxu0 0
  %725 = vmatprep.subr.bf16.mxu0 0
  %726 = vmatpush1.bf16.msra.mxu0 0
  %727 = vmatprep.subr.bf16.mxu0 0
  %728 = vmatpush1.bf16.msra.mxu0 0
  %729 = vmatprep.subr.bf16.mxu0 0
  %730 = vmatpush1.bf16.msra.mxu0 0
  %731 = vmatprep.subr.bf16.mxu0 0
  %732 = vmatpush1.bf16.msra.mxu0 0
  %733 = vmatprep.subr.bf16.mxu0 0
  %734 = vmatpush1.bf16.msra.mxu0 0
  %735 = vmatprep.subr.bf16.mxu0 0
  %736 = vmatpush1.bf16.msra.mxu0 0
  %737 = vmatprep.subr.bf16.mxu0 0
  %738 = vmatpush1.bf16.msra.mxu0 0
  %739 = vmatprep.subr.bf16.mxu0 0
  %740 = vmatpush1.bf16.msra.mxu0 0
  %741 = vmatprep.subr.bf16.mxu0 0
  %742 = vmatpush1.bf16.msra.mxu0 0
  %743 = vmatprep.mubr.bf16.mxu0 0
  %744 = vmatmul.mubr.bf16.gmra.mrb[0].mxu0 %v685
  %v745 = vpop.f32.mrb[0].mxu0
  %v746 = vadd.f32 0.0, %v745
  %v747 = vpop.f32.mrb[0].mxu0
  %v748 = vpop.f32.mrb[0].mxu0
  %v749 = vadd.f32 0.0, %v748
  %v750 = vpop.f32.mrb[0].mxu0
  %751 = vmatprep.mubr.bf16.mxu0 0
  %752 = vmatmul.mubr.bf16.gmra.mrb[0].mxu0 %v688
  %v753 = vpop.f32.mrb[0].mxu0
  %v754 = vadd.f32 0.0, %v753
  %v755 = vpop.f32.mrb[0].mxu0
  %v756 = vpop.f32.mrb[0].mxu0
  %v757 = vadd.f32 0.0, %v756
  %v758 = vpop.f32.mrb[0].mxu0
  %759 = vmatprep.mubr.bf16.mxu0 0
  %760 = vmatmul.mubr.bf16.gmra.mrb[0].mxu0 %v691
  %v761 = vpop.f32.mrb[0].mxu0
  %v762 = vadd.f32 0.0, %v761
  %v763 = vpop.f32.mrb[0].mxu0
  %v764 = vpop.f32.mrb[0].mxu0
  %v765 = vadd.f32 0.0, %v764
  %v766 = vpop.f32.mrb[0].mxu0
  %767 = vmatprep.mubr.bf16.mxu0 0
  %768 = vmatmul.mubr.bf16.gmra.mrb[0].mxu0 %v694
  %v769 = vpop.f32.mrb[0].mxu0
  %v770 = vadd.f32 0.0, %v769
  %v771 = vpop.f32.mrb[0].mxu0
  %v772 = vpop.f32.mrb[0].mxu0
  %v773 = vadd.f32 0.0, %v772
  %v774 = vpop.f32.mrb[0].mxu0
  %775 = vmatprep.mubr.bf16.mxu0 0
  %776 = vmatmul.mubr.bf16.gmra.mrb[0].mxu0 %v697
  %v777 = vpop.f32.mrb[0].mxu0
  %v778 = vadd.f32 0.0, %v777
  %v779 = vpop.f32.mrb[0].mxu0
  %v780 = vpop.f32.mrb[0].mxu0
  %v781 = vadd.f32 0.0, %v780
  %v782 = vpop.f32.mrb[0].mxu0
  %783 = vmatprep.mubr.bf16.mxu0 0
  %784 = vmatmul.mubr.bf16.gmra.mrb[0].mxu0 %v700
  %v785 = vpop.f32.mrb[0].mxu0
  %v786 = vadd.f32 0.0, %v785
  %v787 = vpop.f32.mrb[0].mxu0
  %v788 = vpop.f32.mrb[0].mxu0
  %v789 = vadd.f32 0.0, %v788
  %v790 = vpop.f32.mrb[0].mxu0
  %791 = vmatprep.mubr.bf16.mxu0 0
  %792 = vmatmul.mubr.bf16.gmra.mrb[0].mxu0 %v703
  %v793 = vpop.f32.mrb[0].mxu0
  %v794 = vadd.f32 0.0, %v793
  %v795 = vpop.f32.mrb[0].mxu0
  %v796 = vpop.f32.mrb[0].mxu0
  %v797 = vadd.f32 0.0, %v796
  %v798 = vpop.f32.mrb[0].mxu0
  %799 = vmatprep.mubr.bf16.mxu0 0
  %800 = vmatmul.mubr.bf16.gmra.mrb[0].mxu0 %v706
  %v801 = vpop.f32.mrb[0].mxu0
  %v802 = vadd.f32 0.0, %v801
  %v803 = vpop.f32.mrb[0].mxu0
  %v804 = vpop.f32.mrb[0].mxu0
  %v805 = vadd.f32 0.0, %v804
  %v806 = vpop.f32.mrb[0].mxu0
  %807 = vdwg.mxu0
  %v808 = vadd.f32 %v641, %v746
  %v809 = vadd.f32 %v642, %v749
  %v810 = vadd.f32 %v643, %v754
  %v811 = vadd.f32 %v644, %v757
  %v812 = vadd.f32 %v645, %v762
  %v813 = vadd.f32 %v646, %v765
  %v814 = vadd.f32 %v647, %v770
  %v815 = vadd.f32 %v648, %v773
  %v816 = vadd.f32 %v649, %v778
  %v817 = vadd.f32 %v650, %v781
  %v818 = vadd.f32 %v651, %v786
  %v819 = vadd.f32 %v652, %v789
  %v820 = vadd.f32 %v653, %v794
  %v821 = vadd.f32 %v654, %v797
  %v822 = vadd.f32 %v655, %v802
  %v823 = vadd.f32 %v656, %v805
  %v824 = vld [vmem:[%s490 + $0x1] sm:$0xff]
  %v825 = vld [vmem:[%s490 + $0x11] sm:$0xff]
  %v826 = vld [vmem:[%s490 + $0x21] sm:$0xff]
  %v827 = vld [vmem:[%s490 + $0x31] sm:$0xff]
  %v828 = vld [vmem:[%s490 + $0x41] sm:$0xff]
  %v829 = vld [vmem:[%s490 + $0x51] sm:$0xff]
  %v830 = vld [vmem:[%s490 + $0x61] sm:$0xff]
  %v831 = vld [vmem:[%s490 + $0x71] sm:$0xff]
  %v832 = vld [vmem:[%s490 + $0x91] sm:$0xff]
  %v833 = vld [vmem:[%s490 + $0xa1] sm:$0xff]
  %v834 = vld [vmem:[%s490 + $0xb1] sm:$0xff]
  %v835 = vld [vmem:[%s490 + $0xc1] sm:$0xff]
  %v836 = vld [vmem:[%s490 + $0xd1] sm:$0xff]
  %v837 = vld [vmem:[%s490 + $0xe1] sm:$0xff]
  %v838 = vld [vmem:[%s490 + $0xf1] sm:$0xff]
  %v839 = vld [vmem:[%s490 + $0x101] sm:$0xff]
  %v840 = vpack.c.bf16 %v825, %v824
  %v841 = vpack.c.bf16 %v827, %v826
  %v842 = vpack.c.bf16 %v829, %v828
  %v843 = vpack.c.bf16 %v831, %v830
  %v844 = vpack.c.bf16 %v833, %v832
  %v845 = vpack.c.bf16 %v835, %v834
  %v846 = vpack.c.bf16 %v837, %v836
  %v847 = vpack.c.bf16 %v839, %v838
  %s848 = scalar_lea.vmem %s1, 10
  %v849 = vld [vmem:[%s848] sm:$0x3]
  %v851 = vsel %vm74, %v840, 0
  %v854 = vsel %vm74, %v841, 0
  %v857 = vsel %vm74, %v842, 0
  %v860 = vsel %vm74, %v843, 0
  %v863 = vsel %vm74, %v844, 0
  %v866 = vsel %vm74, %v845, 0
  %v869 = vsel %vm74, %v846, 0
  %v872 = vsel %vm74, %v847, 0
  %v875 = vsel %vm99, %v849, 0
  %877 = vmatprep.subr.bf16.mxu0 0
  %878 = vmatpush1.bf16.msra.mxu0 %v875
  %879 = vmatprep.subr.bf16.mxu0 0
  %880 = vmatpush1.bf16.msra.mxu0 0
  %881 = vmatprep.subr.bf16.mxu0 0
  %882 = vmatpush1.bf16.msra.mxu0 0
  %883 = vmatprep.subr.bf16.mxu0 0
  %884 = vmatpush1.bf16.msra.mxu0 0
  %885 = vmatprep.subr.bf16.mxu0 0
  %886 = vmatpush1.bf16.msra.mxu0 0
  %887 = vmatprep.subr.bf16.mxu0 0
  %888 = vmatpush1.bf16.msra.mxu0 0
  %889 = vmatprep.subr.bf16.mxu0 0
  %890 = vmatpush1.bf16.msra.mxu0 0
  %891 = vmatprep.subr.bf16.mxu0 0
  %892 = vmatpush1.bf16.msra.mxu0 0
  %893 = vmatprep.subr.bf16.mxu0 0
  %894 = vmatpush1.bf16.msra.mxu0 0
  %895 = vmatprep.subr.bf16.mxu0 0
  %896 = vmatpush1.bf16.msra.mxu0 0
  %897 = vmatprep.subr.bf16.mxu0 0
  %898 = vmatpush1.bf16.msra.mxu0 0
  %899 = vmatprep.subr.bf16.mxu0 0
  %900 = vmatpush1.bf16.msra.mxu0 0
  %901 = vmatprep.subr.bf16.mxu0 0
  %902 = vmatpush1.bf16.msra.mxu0 0
  %903 = vmatprep.subr.bf16.mxu0 0
  %904 = vmatpush1.bf16.msra.mxu0 0
  %905 = vmatprep.subr.bf16.mxu0 0
  %906 = vmatpush1.bf16.msra.mxu0 0
  %907 = vmatprep.subr.bf16.mxu0 0
  %908 = vmatpush1.bf16.msra.mxu0 0
  %909 = vmatprep.mubr.bf16.mxu0 0
  %910 = vmatmul.mubr.bf16.gmra.mrb[0].mxu0 %v851
  %v911 = vpop.f32.mrb[0].mxu0
  %v912 = vadd.f32 0.0, %v911
  %v913 = vpop.f32.mrb[0].mxu0
  %v914 = vpop.f32.mrb[0].mxu0
  %v915 = vadd.f32 0.0, %v914
  %v916 = vpop.f32.mrb[0].mxu0
  %917 = vmatprep.mubr.bf16.mxu0 0
  %918 = vmatmul.mubr.bf16.gmra.mrb[0].mxu0 %v854
  %v919 = vpop.f32.mrb[0].mxu0
  %v920 = vadd.f32 0.0, %v919
  %v921 = vpop.f32.mrb[0].mxu0
  %v922 = vpop.f32.mrb[0].mxu0
  %v923 = vadd.f32 0.0, %v922
  %v924 = vpop.f32.mrb[0].mxu0
  %925 = vmatprep.mubr.bf16.mxu0 0
  %926 = vmatmul.mubr.bf16.gmra.mrb[0].mxu0 %v857
  %v927 = vpop.f32.mrb[0].mxu0
  %v928 = vadd.f32 0.0, %v927
  %v929 = vpop.f32.mrb[0].mxu0
  %v930 = vpop.f32.mrb[0].mxu0
  %v931 = vadd.f32 0.0, %v930
  %v932 = vpop.f32.mrb[0].mxu0
  %933 = vmatprep.mubr.bf16.mxu0 0
  %934 = vmatmul.mubr.bf16.gmra.mrb[0].mxu0 %v860
  %v935 = vpop.f32.mrb[0].mxu0
  %v936 = vadd.f32 0.0, %v935
  %v937 = vpop.f32.mrb[0].mxu0
  %v938 = vpop.f32.mrb[0].mxu0
  %v939 = vadd.f32 0.0, %v938
  %v940 = vpop.f32.mrb[0].mxu0
  %941 = vmatprep.mubr.bf16.mxu0 0
  %942 = vmatmul.mubr.bf16.gmra.mrb[0].mxu0 %v863
  %v943 = vpop.f32.mrb[0].mxu0
  %v944 = vadd.f32 0.0, %v943
  %v945 = vpop.f32.mrb[0].mxu0
  %v946 = vpop.f32.mrb[0].mxu0
  %v947 = vadd.f32 0.0, %v946
  %v948 = vpop.f32.mrb[0].mxu0
  %949 = vmatprep.mubr.bf16.mxu0 0
  %950 = vmatmul.mubr.bf16.gmra.mrb[0].mxu0 %v866
  %v951 = vpop.f32.mrb[0].mxu0
  %v952 = vadd.f32 0.0, %v951
  %v953 = vpop.f32.mrb[0].mxu0
  %v954 = vpop.f32.mrb[0].mxu0
  %v955 = vadd.f32 0.0, %v954
  %v956 = vpop.f32.mrb[0].mxu0
  %957 = vmatprep.mubr.bf16.mxu0 0
  %958 = vmatmul.mubr.bf16.gmra.mrb[0].mxu0 %v869
  %v959 = vpop.f32.mrb[0].mxu0
  %v960 = vadd.f32 0.0, %v959
  %v961 = vpop.f32.mrb[0].mxu0
  %v962 = vpop.f32.mrb[0].mxu0
  %v963 = vadd.f32 0.0, %v962
  %v964 = vpop.f32.mrb[0].mxu0
  %965 = vmatprep.mubr.bf16.mxu0 0
  %966 = vmatmul.mubr.bf16.gmra.mrb[0].mxu0 %v872
  %v967 = vpop.f32.mrb[0].mxu0
  %v968 = vadd.f32 0.0, %v967
  %v969 = vpop.f32.mrb[0].mxu0
  %v970 = vpop.f32.mrb[0].mxu0
  %v971 = vadd.f32 0.0, %v970
  %v972 = vpop.f32.mrb[0].mxu0
  %973 = vdwg.mxu0
  %v974 = vadd.f32 %v808, %v912
  %v975 = vadd.f32 %v809, %v915
  %v976 = vadd.f32 %v810, %v920
  %v977 = vadd.f32 %v811, %v923
  %v978 = vadd.f32 %v812, %v928
  %v979 = vadd.f32 %v813, %v931
  %v980 = vadd.f32 %v814, %v936
  %v981 = vadd.f32 %v815, %v939
  %v982 = vadd.f32 %v816, %v944
  %v983 = vadd.f32 %v817, %v947
  %v984 = vadd.f32 %v818, %v952
  %v985 = vadd.f32 %v819, %v955
  %v986 = vadd.f32 %v820, %v960
  %v987 = vadd.f32 %v821, %v963
  %v988 = vadd.f32 %v822, %v968
  %v989 = vadd.f32 %v823, %v971
  %s990 = scalar_lea.vmem %s0, 16
  %v991 = vld [vmem:[%s990] sm:$0xff]
  %v992 = vld [vmem:[%s990 + $0x10] sm:$0xff]
  %v993 = vld [vmem:[%s990 + $0x20] sm:$0xff]
  %v994 = vld [vmem:[%s990 + $0x30] sm:$0xff]
  %v995 = vld [vmem:[%s990 + $0x40] sm:$0xff]
  %v996 = vld [vmem:[%s990 + $0x50] sm:$0xff]
  %v997 = vld [vmem:[%s990 + $0x60] sm:$0xff]
  %v998 = vld [vmem:[%s990 + $0x70] sm:$0xff]
  %v999 = vld [vmem:[%s990 + $0x90] sm:$0xff]
  %v1000 = vld [vmem:[%s990 + $0xa0] sm:$0xff]
  %v1001 = vld [vmem:[%s990 + $0xb0] sm:$0xff]
  %v1002 = vld [vmem:[%s990 + $0xc0] sm:$0xff]
  %v1003 = vld [vmem:[%s990 + $0xd0] sm:$0xff]
  %v1004 = vld [vmem:[%s990 + $0xe0] sm:$0xff]
  %v1005 = vld [vmem:[%s990 + $0xf0] sm:$0xff]
  %v1006 = vld [vmem:[%s990 + $0x100] sm:$0xff]
  %v1007 = vpack.c.bf16 %v992, %v991
  %v1008 = vpack.c.bf16 %v994, %v993
  %v1009 = vpack.c.bf16 %v996, %v995
  %v1010 = vpack.c.bf16 %v998, %v997
  %v1011 = vpack.c.bf16 %v1000, %v999
  %v1012 = vpack.c.bf16 %v1002, %v1001
  %v1013 = vpack.c.bf16 %v1004, %v1003
  %v1014 = vpack.c.bf16 %v1006, %v1005
  %s1015 = scalar_lea.vmem %s1, 12
  %v1016 = vld [vmem:[%s1015] sm:$0x3]
  %v1018 = vsel %vm74, %v1007, 0
  %v1021 = vsel %vm74, %v1008, 0
  %v1024 = vsel %vm74, %v1009, 0
  %v1027 = vsel %vm74, %v1010, 0
  %v1030 = vsel %vm74, %v1011, 0
  %v1033 = vsel %vm74, %v1012, 0
  %v1036 = vsel %vm74, %v1013, 0
  %v1039 = vsel %vm74, %v1014, 0
  %v1042 = vsel %vm99, %v1016, 0
  %1044 = vmatprep.subr.bf16.mxu0 0
  %1045 = vmatpush1.bf16.msra.mxu0 %v1042
  %1046 = vmatprep.subr.bf16.mxu0 0
  %1047 = vmatpush1.bf16.msra.mxu0 0
  %1048 = vmatprep.subr.bf16.mxu0 0
  %1049 = vmatpush1.bf16.msra.mxu0 0
  %1050 = vmatprep.subr.bf16.mxu0 0
  %1051 = vmatpush1.bf16.msra.mxu0 0
  %1052 = vmatprep.subr.bf16.mxu0 0
  %1053 = vmatpush1.bf16.msra.mxu0 0
  %1054 = vmatprep.subr.bf16.mxu0 0
  %1055 = vmatpush1.bf16.msra.mxu0 0
  %1056 = vmatprep.subr.bf16.mxu0 0
  %1057 = vmatpush1.bf16.msra.mxu0 0
  %1058 = vmatprep.subr.bf16.mxu0 0
  %1059 = vmatpush1.bf16.msra.mxu0 0
  %1060 = vmatprep.subr.bf16.mxu0 0
  %1061 = vmatpush1.bf16.msra.mxu0 0
  %1062 = vmatprep.subr.bf16.mxu0 0
  %1063 = vmatpush1.bf16.msra.mxu0 0
  %1064 = vmatprep.subr.bf16.mxu0 0
  %1065 = vmatpush1.bf16.msra.mxu0 0
  %1066 = vmatprep.subr.bf16.mxu0 0
  %1067 = vmatpush1.bf16.msra.mxu0 0
  %1068 = vmatprep.subr.bf16.mxu0 0
  %1069 = vmatpush1.bf16.msra.mxu0 0
  %1070 = vmatprep.subr.bf16.mxu0 0
  %1071 = vmatpush1.bf16.msra.mxu0 0
  %1072 = vmatprep.subr.bf16.mxu0 0
  %1073 = vmatpush1.bf16.msra.mxu0 0
  %1074 = vmatprep.subr.bf16.mxu0 0
  %1075 = vmatpush1.bf16.msra.mxu0 0
  %1076 = vmatprep.mubr.bf16.mxu0 0
  %1077 = vmatmul.mubr.bf16.gmra.mrb[0].mxu0 %v1018
  %v1078 = vpop.f32.mrb[0].mxu0
  %v1079 = vadd.f32 0.0, %v1078
  %v1080 = vpop.f32.mrb[0].mxu0
  %v1081 = vpop.f32.mrb[0].mxu0
  %v1082 = vadd.f32 0.0, %v1081
  %v1083 = vpop.f32.mrb[0].mxu0
  %1084 = vmatprep.mubr.bf16.mxu0 0
  %1085 = vmatmul.mubr.bf16.gmra.mrb[0].mxu0 %v1021
  %v1086 = vpop.f32.mrb[0].mxu0
  %v1087 = vadd.f32 0.0, %v1086
  %v1088 = vpop.f32.mrb[0].mxu0
  %v1089 = vpop.f32.mrb[0].mxu0
  %v1090 = vadd.f32 0.0, %v1089
  %v1091 = vpop.f32.mrb[0].mxu0
  %1092 = vmatprep.mubr.bf16.mxu0 0
  %1093 = vmatmul.mubr.bf16.gmra.mrb[0].mxu0 %v1024
  %v1094 = vpop.f32.mrb[0].mxu0
  %v1095 = vadd.f32 0.0, %v1094
  %v1096 = vpop.f32.mrb[0].mxu0
  %v1097 = vpop.f32.mrb[0].mxu0
  %v1098 = vadd.f32 0.0, %v1097
  %v1099 = vpop.f32.mrb[0].mxu0
  %1100 = vmatprep.mubr.bf16.mxu0 0
  %1101 = vmatmul.mubr.bf16.gmra.mrb[0].mxu0 %v1027
  %v1102 = vpop.f32.mrb[0].mxu0
  %v1103 = vadd.f32 0.0, %v1102
  %v1104 = vpop.f32.mrb[0].mxu0
  %v1105 = vpop.f32.mrb[0].mxu0
  %v1106 = vadd.f32 0.0, %v1105
  %v1107 = vpop.f32.mrb[0].mxu0
  %1108 = vmatprep.mubr.bf16.mxu0 0
  %1109 = vmatmul.mubr.bf16.gmra.mrb[0].mxu0 %v1030
  %v1110 = vpop.f32.mrb[0].mxu0
  %v1111 = vadd.f32 0.0, %v1110
  %v1112 = vpop.f32.mrb[0].mxu0
  %v1113 = vpop.f32.mrb[0].mxu0
  %v1114 = vadd.f32 0.0, %v1113
  %v1115 = vpop.f32.mrb[0].mxu0
  %1116 = vmatprep.mubr.bf16.mxu0 0
  %1117 = vmatmul.mubr.bf16.gmra.mrb[0].mxu0 %v1033
  %v1118 = vpop.f32.mrb[0].mxu0
  %v1119 = vadd.f32 0.0, %v1118
  %v1120 = vpop.f32.mrb[0].mxu0
  %v1121 = vpop.f32.mrb[0].mxu0
  %v1122 = vadd.f32 0.0, %v1121
  %v1123 = vpop.f32.mrb[0].mxu0
  %1124 = vmatprep.mubr.bf16.mxu0 0
  %1125 = vmatmul.mubr.bf16.gmra.mrb[0].mxu0 %v1036
  %v1126 = vpop.f32.mrb[0].mxu0
  %v1127 = vadd.f32 0.0, %v1126
  %v1128 = vpop.f32.mrb[0].mxu0
  %v1129 = vpop.f32.mrb[0].mxu0
  %v1130 = vadd.f32 0.0, %v1129
  %v1131 = vpop.f32.mrb[0].mxu0
  %1132 = vmatprep.mubr.bf16.mxu0 0
  %1133 = vmatmul.mubr.bf16.gmra.mrb[0].mxu0 %v1039
  %v1134 = vpop.f32.mrb[0].mxu0
  %v1135 = vadd.f32 0.0, %v1134
  %v1136 = vpop.f32.mrb[0].mxu0
  %v1137 = vpop.f32.mrb[0].mxu0
  %v1138 = vadd.f32 0.0, %v1137
  %v1139 = vpop.f32.mrb[0].mxu0
  %1140 = vdwg.mxu0
  %v1141 = vadd.f32 %v974, %v1079
  %v1142 = vadd.f32 %v975, %v1082
  %v1143 = vadd.f32 %v976, %v1087
  %v1144 = vadd.f32 %v977, %v1090
  %v1145 = vadd.f32 %v978, %v1095
  %v1146 = vadd.f32 %v979, %v1098
  %v1147 = vadd.f32 %v980, %v1103
  %v1148 = vadd.f32 %v981, %v1106
  %v1149 = vadd.f32 %v982, %v1111
  %v1150 = vadd.f32 %v983, %v1114
  %v1151 = vadd.f32 %v984, %v1119
  %v1152 = vadd.f32 %v985, %v1122
  %v1153 = vadd.f32 %v986, %v1127
  %v1154 = vadd.f32 %v987, %v1130
  %v1155 = vadd.f32 %v988, %v1135
  %v1156 = vadd.f32 %v989, %v1138
  %s1157 = scalar_lea.vmem %s0, 304
  %v1158 = vld [vmem:[%s1157] sm:$0xff]
  %v1159 = vld [vmem:[%s1157 + $0x10] sm:$0xff]
  %v1160 = vld [vmem:[%s1157 + $0x20] sm:$0xff]
  %v1161 = vld [vmem:[%s1157 + $0x30] sm:$0xff]
  %v1162 = vld [vmem:[%s1157 + $0x40] sm:$0xff]
  %v1163 = vld [vmem:[%s1157 + $0x50] sm:$0xff]
  %v1164 = vld [vmem:[%s1157 + $0x60] sm:$0xff]
  %v1165 = vld [vmem:[%s1157 + $0x70] sm:$0xff]
  %v1166 = vld [vmem:[%s1157 + $0x90] sm:$0xff]
  %v1167 = vld [vmem:[%s1157 + $0xa0] sm:$0xff]
  %v1168 = vld [vmem:[%s1157 + $0xb0] sm:$0xff]
  %v1169 = vld [vmem:[%s1157 + $0xc0] sm:$0xff]
  %v1170 = vld [vmem:[%s1157 + $0xd0] sm:$0xff]
  %v1171 = vld [vmem:[%s1157 + $0xe0] sm:$0xff]
  %v1172 = vld [vmem:[%s1157 + $0xf0] sm:$0xff]
  %v1173 = vld [vmem:[%s1157 + $0x100] sm:$0xff]
  %v1174 = vpack.c.bf16 %v1159, %v1158
  %v1175 = vpack.c.bf16 %v1161, %v1160
  %v1176 = vpack.c.bf16 %v1163, %v1162
  %v1177 = vpack.c.bf16 %v1165, %v1164
  %v1178 = vpack.c.bf16 %v1167, %v1166
  %v1179 = vpack.c.bf16 %v1169, %v1168
  %v1180 = vpack.c.bf16 %v1171, %v1170
  %v1181 = vpack.c.bf16 %v1173, %v1172
  %s1182 = scalar_lea.vmem %s1, 14
  %v1183 = vld [vmem:[%s1182] sm:$0x3]
  %v1185 = vsel %vm74, %v1174, 0
  %v1188 = vsel %vm74, %v1175, 0
  %v1191 = vsel %vm74, %v1176, 0
  %v1194 = vsel %vm74, %v1177, 0
  %v1197 = vsel %vm74, %v1178, 0
  %v1200 = vsel %vm74, %v1179, 0
  %v1203 = vsel %vm74, %v1180, 0
  %v1206 = vsel %vm74, %v1181, 0
  %v1209 = vsel %vm99, %v1183, 0
  %1211 = vmatprep.subr.bf16.mxu0 0
  %1212 = vmatpush1.bf16.msra.mxu0 %v1209
  %1213 = vmatprep.subr.bf16.mxu0 0
  %1214 = vmatpush1.bf16.msra.mxu0 0
  %1215 = vmatprep.subr.bf16.mxu0 0
  %1216 = vmatpush1.bf16.msra.mxu0 0
  %1217 = vmatprep.subr.bf16.mxu0 0
  %1218 = vmatpush1.bf16.msra.mxu0 0
  %1219 = vmatprep.subr.bf16.mxu0 0
  %1220 = vmatpush1.bf16.msra.mxu0 0
  %1221 = vmatprep.subr.bf16.mxu0 0
  %1222 = vmatpush1.bf16.msra.mxu0 0
  %1223 = vmatprep.subr.bf16.mxu0 0
  %1224 = vmatpush1.bf16.msra.mxu0 0
  %1225 = vmatprep.subr.bf16.mxu0 0
  %1226 = vmatpush1.bf16.msra.mxu0 0
  %1227 = vmatprep.subr.bf16.mxu0 0
  %1228 = vmatpush1.bf16.msra.mxu0 0
  %1229 = vmatprep.subr.bf16.mxu0 0
  %1230 = vmatpush1.bf16.msra.mxu0 0
  %1231 = vmatprep.subr.bf16.mxu0 0
  %1232 = vmatpush1.bf16.msra.mxu0 0
  %1233 = vmatprep.subr.bf16.mxu0 0
  %1234 = vmatpush1.bf16.msra.mxu0 0
  %1235 = vmatprep.subr.bf16.mxu0 0
  %1236 = vmatpush1.bf16.msra.mxu0 0
  %1237 = vmatprep.subr.bf16.mxu0 0
  %1238 = vmatpush1.bf16.msra.mxu0 0
  %1239 = vmatprep.subr.bf16.mxu0 0
  %1240 = vmatpush1.bf16.msra.mxu0 0
  %1241 = vmatprep.subr.bf16.mxu0 0
  %1242 = vmatpush1.bf16.msra.mxu0 0
  %1243 = vmatprep.mubr.bf16.mxu0 0
  %1244 = vmatmul.mubr.bf16.gmra.mrb[0].mxu0 %v1185
  %v1245 = vpop.f32.mrb[0].mxu0
  %v1246 = vadd.f32 0.0, %v1245
  %v1247 = vpop.f32.mrb[0].mxu0
  %v1248 = vpop.f32.mrb[0].mxu0
  %v1249 = vadd.f32 0.0, %v1248
  %v1250 = vpop.f32.mrb[0].mxu0
  %1251 = vmatprep.mubr.bf16.mxu0 0
  %1252 = vmatmul.mubr.bf16.gmra.mrb[0].mxu0 %v1188
  %v1253 = vpop.f32.mrb[0].mxu0
  %v1254 = vadd.f32 0.0, %v1253
  %v1255 = vpop.f32.mrb[0].mxu0
  %v1256 = vpop.f32.mrb[0].mxu0
  %v1257 = vadd.f32 0.0, %v1256
  %v1258 = vpop.f32.mrb[0].mxu0
  %1259 = vmatprep.mubr.bf16.mxu0 0
  %1260 = vmatmul.mubr.bf16.gmra.mrb[0].mxu0 %v1191
  %v1261 = vpop.f32.mrb[0].mxu0
  %v1262 = vadd.f32 0.0, %v1261
  %v1263 = vpop.f32.mrb[0].mxu0
  %v1264 = vpop.f32.mrb[0].mxu0
  %v1265 = vadd.f32 0.0, %v1264
  %v1266 = vpop.f32.mrb[0].mxu0
  %1267 = vmatprep.mubr.bf16.mxu0 0
  %1268 = vmatmul.mubr.bf16.gmra.mrb[0].mxu0 %v1194
  %v1269 = vpop.f32.mrb[0].mxu0
  %v1270 = vadd.f32 0.0, %v1269
  %v1271 = vpop.f32.mrb[0].mxu0
  %v1272 = vpop.f32.mrb[0].mxu0
  %v1273 = vadd.f32 0.0, %v1272
  %v1274 = vpop.f32.mrb[0].mxu0
  %1275 = vmatprep.mubr.bf16.mxu0 0
  %1276 = vmatmul.mubr.bf16.gmra.mrb[0].mxu0 %v1197
  %v1277 = vpop.f32.mrb[0].mxu0
  %v1278 = vadd.f32 0.0, %v1277
  %v1279 = vpop.f32.mrb[0].mxu0
  %v1280 = vpop.f32.mrb[0].mxu0
  %v1281 = vadd.f32 0.0, %v1280
  %v1282 = vpop.f32.mrb[0].mxu0
  %1283 = vmatprep.mubr.bf16.mxu0 0
  %1284 = vmatmul.mubr.bf16.gmra.mrb[0].mxu0 %v1200
  %v1285 = vpop.f32.mrb[0].mxu0
  %v1286 = vadd.f32 0.0, %v1285
  %v1287 = vpop.f32.mrb[0].mxu0
  %v1288 = vpop.f32.mrb[0].mxu0
  %v1289 = vadd.f32 0.0, %v1288
  %v1290 = vpop.f32.mrb[0].mxu0
  %1291 = vmatprep.mubr.bf16.mxu0 0
  %1292 = vmatmul.mubr.bf16.gmra.mrb[0].mxu0 %v1203
  %v1293 = vpop.f32.mrb[0].mxu0
  %v1294 = vadd.f32 0.0, %v1293
  %v1295 = vpop.f32.mrb[0].mxu0
  %v1296 = vpop.f32.mrb[0].mxu0
  %v1297 = vadd.f32 0.0, %v1296
  %v1298 = vpop.f32.mrb[0].mxu0
  %1299 = vmatprep.mubr.bf16.mxu0 0
  %1300 = vmatmul.mubr.bf16.gmra.mrb[0].mxu0 %v1206
  %v1301 = vpop.f32.mrb[0].mxu0
  %v1302 = vadd.f32 0.0, %v1301
  %v1303 = vpop.f32.mrb[0].mxu0
  %v1304 = vpop.f32.mrb[0].mxu0
  %v1305 = vadd.f32 0.0, %v1304
  %v1306 = vpop.f32.mrb[0].mxu0
  %1307 = vdwg.mxu0
  %v1308 = vadd.f32 %v1141, %v1246
  %v1309 = vadd.f32 %v1142, %v1249
  %v1310 = vadd.f32 %v1143, %v1254
  %v1311 = vadd.f32 %v1144, %v1257
  %v1312 = vadd.f32 %v1145, %v1262
  %v1313 = vadd.f32 %v1146, %v1265
  %v1314 = vadd.f32 %v1147, %v1270
  %v1315 = vadd.f32 %v1148, %v1273
  %v1316 = vadd.f32 %v1149, %v1278
  %v1317 = vadd.f32 %v1150, %v1281
  %v1318 = vadd.f32 %v1151, %v1286
  %v1319 = vadd.f32 %v1152, %v1289
  %v1320 = vadd.f32 %v1153, %v1294
  %v1321 = vadd.f32 %v1154, %v1297
  %v1322 = vadd.f32 %v1155, %v1302
  %v1323 = vadd.f32 %v1156, %v1305
  %v1324 = vld [vmem:[%s990 + $0x1] sm:$0xff]
  %v1325 = vld [vmem:[%s990 + $0x11] sm:$0xff]
  %v1326 = vld [vmem:[%s990 + $0x21] sm:$0xff]
  %v1327 = vld [vmem:[%s990 + $0x31] sm:$0xff]
  %v1328 = vld [vmem:[%s990 + $0x41] sm:$0xff]
  %v1329 = vld [vmem:[%s990 + $0x51] sm:$0xff]
  %v1330 = vld [vmem:[%s990 + $0x61] sm:$0xff]
  %v1331 = vld [vmem:[%s990 + $0x71] sm:$0xff]
  %v1332 = vld [vmem:[%s990 + $0x91] sm:$0xff]
  %v1333 = vld [vmem:[%s990 + $0xa1] sm:$0xff]
  %v1334 = vld [vmem:[%s990 + $0xb1] sm:$0xff]
  %v1335 = vld [vmem:[%s990 + $0xc1] sm:$0xff]
  %v1336 = vld [vmem:[%s990 + $0xd1] sm:$0xff]
  %v1337 = vld [vmem:[%s990 + $0xe1] sm:$0xff]
  %v1338 = vld [vmem:[%s990 + $0xf1] sm:$0xff]
  %v1339 = vld [vmem:[%s990 + $0x101] sm:$0xff]
  %v1340 = vpack.c.bf16 %v1325, %v1324
  %v1341 = vpack.c.bf16 %v1327, %v1326
  %v1342 = vpack.c.bf16 %v1329, %v1328
  %v1343 = vpack.c.bf16 %v1331, %v1330
  %v1344 = vpack.c.bf16 %v1333, %v1332
  %v1345 = vpack.c.bf16 %v1335, %v1334
  %v1346 = vpack.c.bf16 %v1337, %v1336
  %v1347 = vpack.c.bf16 %v1339, %v1338
  %s1348 = scalar_lea.vmem %s1, 16
  %v1349 = vld [vmem:[%s1348] sm:$0x3]
  %v1351 = vsel %vm74, %v1340, 0
  %v1354 = vsel %vm74, %v1341, 0
  %v1357 = vsel %vm74, %v1342, 0
  %v1360 = vsel %vm74, %v1343, 0
  %v1363 = vsel %vm74, %v1344, 0
  %v1366 = vsel %vm74, %v1345, 0
  %v1369 = vsel %vm74, %v1346, 0
  %v1372 = vsel %vm74, %v1347, 0
  %v1375 = vsel %vm99, %v1349, 0
  %1377 = vmatprep.subr.bf16.mxu0 0
  %1378 = vmatpush1.bf16.msra.mxu0 %v1375
  %1379 = vmatprep.subr.bf16.mxu0 0
  %1380 = vmatpush1.bf16.msra.mxu0 0
  %1381 = vmatprep.subr.bf16.mxu0 0
  %1382 = vmatpush1.bf16.msra.mxu0 0
  %1383 = vmatprep.subr.bf16.mxu0 0
  %1384 = vmatpush1.bf16.msra.mxu0 0
  %1385 = vmatprep.subr.bf16.mxu0 0
  %1386 = vmatpush1.bf16.msra.mxu0 0
  %1387 = vmatprep.subr.bf16.mxu0 0
  %1388 = vmatpush1.bf16.msra.mxu0 0
  %1389 = vmatprep.subr.bf16.mxu0 0
  %1390 = vmatpush1.bf16.msra.mxu0 0
  %1391 = vmatprep.subr.bf16.mxu0 0
  %1392 = vmatpush1.bf16.msra.mxu0 0
  %1393 = vmatprep.subr.bf16.mxu0 0
  %1394 = vmatpush1.bf16.msra.mxu0 0
  %1395 = vmatprep.subr.bf16.mxu0 0
  %1396 = vmatpush1.bf16.msra.mxu0 0
  %1397 = vmatprep.subr.bf16.mxu0 0
  %1398 = vmatpush1.bf16.msra.mxu0 0
  %1399 = vmatprep.subr.bf16.mxu0 0
  %1400 = vmatpush1.bf16.msra.mxu0 0
  %1401 = vmatprep.subr.bf16.mxu0 0
  %1402 = vmatpush1.bf16.msra.mxu0 0
  %1403 = vmatprep.subr.bf16.mxu0 0
  %1404 = vmatpush1.bf16.msra.mxu0 0
  %1405 = vmatprep.subr.bf16.mxu0 0
  %1406 = vmatpush1.bf16.msra.mxu0 0
  %1407 = vmatprep.subr.bf16.mxu0 0
  %1408 = vmatpush1.bf16.msra.mxu0 0
  %1409 = vmatprep.mubr.bf16.mxu0 0
  %1410 = vmatmul.mubr.bf16.gmra.mrb[0].mxu0 %v1351
  %v1411 = vpop.f32.mrb[0].mxu0
  %v1412 = vadd.f32 0.0, %v1411
  %v1413 = vpop.f32.mrb[0].mxu0
  %v1414 = vpop.f32.mrb[0].mxu0
  %v1415 = vadd.f32 0.0, %v1414
  %v1416 = vpop.f32.mrb[0].mxu0
  %1417 = vmatprep.mubr.bf16.mxu0 0
  %1418 = vmatmul.mubr.bf16.gmra.mrb[0].mxu0 %v1354
  %v1419 = vpop.f32.mrb[0].mxu0
  %v1420 = vadd.f32 0.0, %v1419
  %v1421 = vpop.f32.mrb[0].mxu0
  %v1422 = vpop.f32.mrb[0].mxu0
  %v1423 = vadd.f32 0.0, %v1422
  %v1424 = vpop.f32.mrb[0].mxu0
  %1425 = vmatprep.mubr.bf16.mxu0 0
  %1426 = vmatmul.mubr.bf16.gmra.mrb[0].mxu0 %v1357
  %v1427 = vpop.f32.mrb[0].mxu0
  %v1428 = vadd.f32 0.0, %v1427
  %v1429 = vpop.f32.mrb[0].mxu0
  %v1430 = vpop.f32.mrb[0].mxu0
  %v1431 = vadd.f32 0.0, %v1430
  %v1432 = vpop.f32.mrb[0].mxu0
  %1433 = vmatprep.mubr.bf16.mxu0 0
  %1434 = vmatmul.mubr.bf16.gmra.mrb[0].mxu0 %v1360
  %v1435 = vpop.f32.mrb[0].mxu0
  %v1436 = vadd.f32 0.0, %v1435
  %v1437 = vpop.f32.mrb[0].mxu0
  %v1438 = vpop.f32.mrb[0].mxu0
  %v1439 = vadd.f32 0.0, %v1438
  %v1440 = vpop.f32.mrb[0].mxu0
  %1441 = vmatprep.mubr.bf16.mxu0 0
  %1442 = vmatmul.mubr.bf16.gmra.mrb[0].mxu0 %v1363
  %v1443 = vpop.f32.mrb[0].mxu0
  %v1444 = vadd.f32 0.0, %v1443
  %v1445 = vpop.f32.mrb[0].mxu0
  %v1446 = vpop.f32.mrb[0].mxu0
  %v1447 = vadd.f32 0.0, %v1446
  %v1448 = vpop.f32.mrb[0].mxu0
  %1449 = vmatprep.mubr.bf16.mxu0 0
  %1450 = vmatmul.mubr.bf16.gmra.mrb[0].mxu0 %v1366
  %v1451 = vpop.f32.mrb[0].mxu0
  %v1452 = vadd.f32 0.0, %v1451
  %v1453 = vpop.f32.mrb[0].mxu0
  %v1454 = vpop.f32.mrb[0].mxu0
  %v1455 = vadd.f32 0.0, %v1454
  %v1456 = vpop.f32.mrb[0].mxu0
  %1457 = vmatprep.mubr.bf16.mxu0 0
  %1458 = vmatmul.mubr.bf16.gmra.mrb[0].mxu0 %v1369
  %v1459 = vpop.f32.mrb[0].mxu0
  %v1460 = vadd.f32 0.0, %v1459
  %v1461 = vpop.f32.mrb[0].mxu0
  %v1462 = vpop.f32.mrb[0].mxu0
  %v1463 = vadd.f32 0.0, %v1462
  %v1464 = vpop.f32.mrb[0].mxu0
  %1465 = vmatprep.mubr.bf16.mxu0 0
  %1466 = vmatmul.mubr.bf16.gmra.mrb[0].mxu0 %v1372
  %v1467 = vpop.f32.mrb[0].mxu0
  %v1468 = vadd.f32 0.0, %v1467
  %v1469 = vpop.f32.mrb[0].mxu0
  %v1470 = vpop.f32.mrb[0].mxu0
  %v1471 = vadd.f32 0.0, %v1470
  %v1472 = vpop.f32.mrb[0].mxu0
  %1473 = vdwg.mxu0
  %v1474 = vadd.f32 %v1308, %v1412
  %v1475 = vadd.f32 %v1309, %v1415
  %v1476 = vadd.f32 %v1310, %v1420
  %v1477 = vadd.f32 %v1311, %v1423
  %v1478 = vadd.f32 %v1312, %v1428
  %v1479 = vadd.f32 %v1313, %v1431
  %v1480 = vadd.f32 %v1314, %v1436
  %v1481 = vadd.f32 %v1315, %v1439
  %v1482 = vadd.f32 %v1316, %v1444
  %v1483 = vadd.f32 %v1317, %v1447
  %v1484 = vadd.f32 %v1318, %v1452
  %v1485 = vadd.f32 %v1319, %v1455
  %v1486 = vadd.f32 %v1320, %v1460
  %v1487 = vadd.f32 %v1321, %v1463
  %v1488 = vadd.f32 %v1322, %v1468
  %v1489 = vadd.f32 %v1323, %v1471
  %1490 = vmatprep.subr.mxu0 0.0
  %1491 = vmatpush1.msra.mxu0 %v1474
  %1492 = vmatprep.subr.mxu0 0.0
  %1493 = vmatpush1.msra.mxu0 %v1475
  %1494 = vmatprep.subr.mxu0 0.0
  %1495 = vmatpush1.msra.mxu0 %v1476
  %1496 = vmatprep.subr.mxu0 0.0
  %1497 = vmatpush1.msra.mxu0 %v1477
  %1498 = vmatprep.subr.mxu0 0.0
  %1499 = vmatpush1.msra.mxu0 %v1478
  %1500 = vmatprep.subr.mxu0 0.0
  %1501 = vmatpush1.msra.mxu0 %v1479
  %1502 = vmatprep.subr.mxu0 0.0
  %1503 = vmatpush1.msra.mxu0 %v1480
  %1504 = vmatprep.subr.mxu0 0.0
  %1505 = vmatpush1.msra.mxu0 %v1481
  %1506 = vmatprep.subr.mxu0 0.0
  %1507 = vmatpush1.msra.mxu0 %v1482
  %1508 = vmatprep.subr.mxu0 0.0
  %1509 = vmatpush1.msra.mxu0 %v1483
  %1510 = vmatprep.subr.mxu0 0.0
  %1511 = vmatpush1.msra.mxu0 %v1484
  %1512 = vmatprep.subr.mxu0 0.0
  %1513 = vmatpush1.msra.mxu0 %v1485
  %1514 = vmatprep.subr.mxu0 0.0
  %1515 = vmatpush1.msra.mxu0 %v1486
  %1516 = vmatprep.subr.mxu0 0.0
  %1517 = vmatpush1.msra.mxu0 %v1487
  %1518 = vmatprep.subr.mxu0 0.0
  %1519 = vmatpush1.msra.mxu0 %v1488
  %1520 = vmatprep.subr.mxu0 0.0
  %1521 = vmatpush1.msra.mxu0 %v1489
  %1522 = vmatprep.subr.mxu0 0.0
  %1523 = vmatpush1.msra.mxu0 0.0
  %1524 = vmatprep.subr.mxu0 0.0
  %1525 = vmatpush1.msra.mxu0 0.0
  %1526 = vmatprep.subr.mxu0 0.0
  %1527 = vmatpush1.msra.mxu0 0.0
  %1528 = vmatprep.subr.mxu0 0.0
  %1529 = vmatpush1.msra.mxu0 0.0
  %1530 = vmatprep.subr.mxu0 0.0
  %1531 = vmatpush1.msra.mxu0 0.0
  %1532 = vmatprep.subr.mxu0 0.0
  %1533 = vmatpush1.msra.mxu0 0.0
  %1534 = vmatprep.subr.mxu0 0.0
  %1535 = vmatpush1.msra.mxu0 0.0
  %1536 = vmatprep.subr.mxu0 0.0
  %1537 = vmatpush1.msra.mxu0 0.0
  %1538 = vmatprep.subr.mxu0 0.0
  %1539 = vmatpush1.msra.mxu0 0.0
  %1540 = vmatprep.subr.mxu0 0.0
  %1541 = vmatpush1.msra.mxu0 0.0
  %1542 = vmatprep.subr.mxu0 0.0
  %1543 = vmatpush1.msra.mxu0 0.0
  %1544 = vmatprep.subr.mxu0 0.0
  %1545 = vmatpush1.msra.mxu0 0.0
  %1546 = vmatprep.subr.mxu0 0.0
  %1547 = vmatpush1.msra.mxu0 0.0
  %1548 = vmatprep.subr.mxu0 0.0
  %1549 = vmatpush1.msra.mxu0 0.0
  %1550 = vmatprep.subr.mxu0 0.0
  %1551 = vmatpush1.msra.mxu0 0.0
  %1552 = vmatprep.subr.mxu0 0.0
  %1553 = vmatpush1.msra.mxu0 0.0
  %1554 = vmatprep.mubr.f32.mxu0 0.0
  %1555 = vmatmul.mubr.f32.gmra.mrb[0].mxu0 1.0
  %v1556 = vpop.f32.mrb[0].mxu0
  %v1557 = vadd.f32 0.0, %v1556
  %v1558 = vpop.f32.mrb[0].mxu0
  %1559 = vdwg.mxu0
  %v1560 = vmul.f32 %v1474, %v1474
  %v1561 = vmul.f32 %v1475, %v1475
  %v1562 = vmul.f32 %v1476, %v1476
  %v1563 = vmul.f32 %v1477, %v1477
  %v1564 = vmul.f32 %v1478, %v1478
  %v1565 = vmul.f32 %v1479, %v1479
  %v1566 = vmul.f32 %v1480, %v1480
  %v1567 = vmul.f32 %v1481, %v1481
  %v1568 = vmul.f32 %v1482, %v1482
  %v1569 = vmul.f32 %v1483, %v1483
  %v1570 = vmul.f32 %v1484, %v1484
  %v1571 = vmul.f32 %v1485, %v1485
  %v1572 = vmul.f32 %v1486, %v1486
  %v1573 = vmul.f32 %v1487, %v1487
  %v1574 = vmul.f32 %v1488, %v1488
  %v1575 = vmul.f32 %v1489, %v1489
  %1576 = vmatprep.subr.mxu0 0.0
  %1577 = vmatpush1.msra.mxu0 %v1560
  %1578 = vmatprep.subr.mxu0 0.0
  %1579 = vmatpush1.msra.mxu0 %v1561
  %1580 = vmatprep.subr.mxu0 0.0
  %1581 = vmatpush1.msra.mxu0 %v1562
  %1582 = vmatprep.subr.mxu0 0.0
  %1583 = vmatpush1.msra.mxu0 %v1563
  %1584 = vmatprep.subr.mxu0 0.0
  %1585 = vmatpush1.msra.mxu0 %v1564
  %1586 = vmatprep.subr.mxu0 0.0
  %1587 = vmatpush1.msra.mxu0 %v1565
  %1588 = vmatprep.subr.mxu0 0.0
  %1589 = vmatpush1.msra.mxu0 %v1566
  %1590 = vmatprep.subr.mxu0 0.0
  %1591 = vmatpush1.msra.mxu0 %v1567
  %1592 = vmatprep.subr.mxu0 0.0
  %1593 = vmatpush1.msra.mxu0 %v1568
  %1594 = vmatprep.subr.mxu0 0.0
  %1595 = vmatpush1.msra.mxu0 %v1569
  %1596 = vmatprep.subr.mxu0 0.0
  %1597 = vmatpush1.msra.mxu0 %v1570
  %1598 = vmatprep.subr.mxu0 0.0
  %1599 = vmatpush1.msra.mxu0 %v1571
  %1600 = vmatprep.subr.mxu0 0.0
  %1601 = vmatpush1.msra.mxu0 %v1572
  %1602 = vmatprep.subr.mxu0 0.0
  %1603 = vmatpush1.msra.mxu0 %v1573
  %1604 = vmatprep.subr.mxu0 0.0
  %1605 = vmatpush1.msra.mxu0 %v1574
  %1606 = vmatprep.subr.mxu0 0.0
  %1607 = vmatpush1.msra.mxu0 %v1575
  %1608 = vmatprep.subr.mxu0 0.0
  %1609 = vmatpush1.msra.mxu0 0.0
  %1610 = vmatprep.subr.mxu0 0.0
  %1611 = vmatpush1.msra.mxu0 0.0
  %1612 = vmatprep.subr.mxu0 0.0
  %1613 = vmatpush1.msra.mxu0 0.0
  %1614 = vmatprep.subr.mxu0 0.0
  %1615 = vmatpush1.msra.mxu0 0.0
  %1616 = vmatprep.subr.mxu0 0.0
  %1617 = vmatpush1.msra.mxu0 0.0
  %1618 = vmatprep.subr.mxu0 0.0
  %1619 = vmatpush1.msra.mxu0 0.0
  %1620 = vmatprep.subr.mxu0 0.0
  %1621 = vmatpush1.msra.mxu0 0.0
  %1622 = vmatprep.subr.mxu0 0.0
  %1623 = vmatpush1.msra.mxu0 0.0
  %1624 = vmatprep.subr.mxu0 0.0
  %1625 = vmatpush1.msra.mxu0 0.0
  %1626 = vmatprep.subr.mxu0 0.0
  %1627 = vmatpush1.msra.mxu0 0.0
  %1628 = vmatprep.subr.mxu0 0.0
  %1629 = vmatpush1.msra.mxu0 0.0
  %1630 = vmatprep.subr.mxu0 0.0
  %1631 = vmatpush1.msra.mxu0 0.0
  %1632 = vmatprep.subr.mxu0 0.0
  %1633 = vmatpush1.msra.mxu0 0.0
  %1634 = vmatprep.subr.mxu0 0.0
  %1635 = vmatpush1.msra.mxu0 0.0
  %1636 = vmatprep.subr.mxu0 0.0
  %1637 = vmatpush1.msra.mxu0 0.0
  %1638 = vmatprep.subr.mxu0 0.0
  %1639 = vmatpush1.msra.mxu0 0.0
  %1640 = vmatprep.mubr.f32.mxu0 0.0
  %1641 = vmatmul.mubr.f32.gmra.mrb[0].mxu0 1.0
  %v1642 = vpop.f32.mrb[0].mxu0
  %v1643 = vadd.f32 0.0, %v1642
  %v1644 = vpop.f32.mrb[0].mxu0
  %1645 = vdwg.mxu0
  %v1646 = vmul.f32 %v1557, 0.0078125
  %v1647 = vmul.f32 %v1643, 0.0078125
  %v1648 = vmul.f32 %v1646, %v1646
  %v1649 = vsub.f32 %v1647, %v1648
  %v1650 = vadd.f32 %v1649, 1e-05
  %v1651 = vrsqrt.pop %v1650
  %v1652 = vmul.f32 %v21, %v1651
  %v1653 = vmul.f32 %v1646, %v1652
  %v1655 = vrot.slane %v1653, 7
  %v1657 = vsub.f32 %v21, %v1655
  %v1658 = vlaneseq
  %v1659 = vshrl.u32 %v1658, 7
  %v1660 = vsub.s32 0, %v1659
  %v1661 = vrot.slane %v1652, %v1660
  %v1662 = vmul.f32 %v1474, %v1661
  %v1663 = vmul.f32 %v1475, %v1661
  %v1664 = vmul.f32 %v1476, %v1661
  %v1665 = vmul.f32 %v1477, %v1661
  %v1666 = vmul.f32 %v1478, %v1661
  %v1667 = vmul.f32 %v1479, %v1661
  %v1668 = vmul.f32 %v1480, %v1661
  %v1669 = vmul.f32 %v1481, %v1661
  %v1670 = vmul.f32 %v1482, %v1661
  %v1671 = vmul.f32 %v1483, %v1661
  %v1672 = vmul.f32 %v1484, %v1661
  %v1673 = vmul.f32 %v1485, %v1661
  %v1674 = vmul.f32 %v1486, %v1661
  %v1675 = vmul.f32 %v1487, %v1661
  %v1676 = vmul.f32 %v1488, %v1661
  %v1677 = vmul.f32 %v1489, %v1661
  %v1678 = vlaneseq
  %v1679 = vshrl.u32 %v1678, 7
  %v1680 = vsub.s32 1, %v1679
  %v1681 = vrot.slane %v1657, %v1680
  %v1682 = vadd.f32 %v1662, %v1681
  %v1683 = vadd.f32 %v1663, %v1681
  %v1684 = vadd.f32 %v1664, %v1681
  %v1685 = vadd.f32 %v1665, %v1681
  %v1686 = vadd.f32 %v1666, %v1681
  %v1687 = vadd.f32 %v1667, %v1681
  %v1688 = vadd.f32 %v1668, %v1681
  %v1689 = vadd.f32 %v1669, %v1681
  %v1690 = vadd.f32 %v1670, %v1681
  %v1691 = vadd.f32 %v1671, %v1681
  %v1692 = vadd.f32 %v1672, %v1681
  %v1693 = vadd.f32 %v1673, %v1681
  %v1694 = vadd.f32 %v1674, %v1681
  %v1695 = vadd.f32 %v1675, %v1681
  %v1696 = vadd.f32 %v1676, %v1681
  %v1697 = vadd.f32 %v1677, %v1681
  %v1698 = vmax.f32 %v1682, 0.0
  %v1699 = vmax.f32 %v1683, 0.0
  %v1700 = vmax.f32 %v1684, 0.0
  %v1701 = vmax.f32 %v1685, 0.0
  %v1702 = vmax.f32 %v1686, 0.0
  %v1703 = vmax.f32 %v1687, 0.0
  %v1704 = vmax.f32 %v1688, 0.0
  %v1705 = vmax.f32 %v1689, 0.0
  %v1706 = vmax.f32 %v1690, 0.0
  %v1707 = vmax.f32 %v1691, 0.0
  %v1708 = vmax.f32 %v1692, 0.0
  %v1709 = vmax.f32 %v1693, 0.0
  %v1710 = vmax.f32 %v1694, 0.0
  %v1711 = vmax.f32 %v1695, 0.0
  %v1712 = vmax.f32 %v1696, 0.0
  %v1713 = vmax.f32 %v1697, 0.0
  %vm1714 = vcmask 64512
  %1715 = vst.msk [vmem:[#allocation2] sm:$0xff] %vm1714, 0.0
  %vm1716 = vcmask 58368
  %1717 = vst.msk [vmem:[#allocation2 + $0x8] sm:$0x3] %vm1716, 0.0
  %1718 = vst.msk [vmem:[#allocation2 + $0xa0] sm:$0xff] %vm1714, 0.0
  %1719 = vst.msk [vmem:[#allocation2 + $0xa8] sm:$0x3] %vm1716, 0.0
  %s1720 = scalar_lea.vmem [#allocation2], 144
  %1721 = vst.msk [vmem:[%s1720] sm:$0xff] %vm1714, 0.0
  %1722 = vst.msk [vmem:[%s1720 + $0x8] sm:$0x3] %vm1716, 0.0
  %1723 = vst.msk [vmem:[%s1720 + $0xa0] sm:$0xff] %vm1714, 0.0
  %1724 = vst.msk [vmem:[%s1720 + $0xa8] sm:$0x3] %vm1716, 0.0
  %vm1725 = vcmask 57344
  %1726 = vst.msk [vmem:[#allocation2] sm:$0x1] %vm1725, 0.0
  %1727 = vst.msk [vmem:[#allocation2 + $0x10] sm:$0x1] %vm1725, 0.0
  %1728 = vst.msk [vmem:[#allocation2 + $0x20] sm:$0x1] %vm1725, 0.0
  %1729 = vst.msk [vmem:[#allocation2 + $0x30] sm:$0x1] %vm1725, 0.0
  %1730 = vst.msk [vmem:[#allocation2 + $0x40] sm:$0x1] %vm1725, 0.0
  %1731 = vst.msk [vmem:[#allocation2 + $0x50] sm:$0x1] %vm1725, 0.0
  %1732 = vst.msk [vmem:[#allocation2 + $0x60] sm:$0x1] %vm1725, 0.0
  %1733 = vst.msk [vmem:[#allocation2 + $0x70] sm:$0x1] %vm1725, 0.0
  %1734 = vst.msk [vmem:[#allocation2 + $0x80] sm:$0x1] %vm1725, 0.0
  %1735 = vst.msk [vmem:[#allocation2 + $0x90] sm:$0x1] %vm1725, 0.0
  %1736 = vst.msk [vmem:[#allocation2 + $0xa0] sm:$0x1] %vm1725, 0.0
  %1737 = vst.msk [vmem:[#allocation2 + $0xb0] sm:$0x1] %vm1725, 0.0
  %1738 = vst.msk [vmem:[#allocation2 + $0xc0] sm:$0x1] %vm1725, 0.0
  %1739 = vst.msk [vmem:[#allocation2 + $0xd0] sm:$0x1] %vm1725, 0.0
  %1740 = vst.msk [vmem:[#allocation2 + $0xe0] sm:$0x1] %vm1725, 0.0
  %1741 = vst.msk [vmem:[#allocation2 + $0xf0] sm:$0x1] %vm1725, 0.0
  %1742 = vst.msk [vmem:[#allocation2 + $0x100] sm:$0x1] %vm1725, 0.0
  %1743 = vst.msk [vmem:[#allocation2 + $0x110] sm:$0x1] %vm1725, 0.0
  %1744 = vst.msk [vmem:[#allocation2 + $0x120] sm:$0x1] %vm1725, 0.0
  %1745 = vst.msk [vmem:[#allocation2 + $0x130] sm:$0x1] %vm1725, 0.0
  %1746 = vst.msk [vmem:[#allocation2 + $0x9] sm:$0x1] %vm1725, 0.0
  %1747 = vst.msk [vmem:[#allocation2 + $0x19] sm:$0x1] %vm1725, 0.0
  %1748 = vst.msk [vmem:[#allocation2 + $0x29] sm:$0x1] %vm1725, 0.0
  %1749 = vst.msk [vmem:[#allocation2 + $0x39] sm:$0x1] %vm1725, 0.0
  %1750 = vst.msk [vmem:[#allocation2 + $0x49] sm:$0x1] %vm1725, 0.0
  %1751 = vst.msk [vmem:[#allocation2 + $0x59] sm:$0x1] %vm1725, 0.0
  %1752 = vst.msk [vmem:[#allocation2 + $0x69] sm:$0x1] %vm1725, 0.0
  %1753 = vst.msk [vmem:[#allocation2 + $0x79] sm:$0x1] %vm1725, 0.0
  %1754 = vst.msk [vmem:[#allocation2 + $0x89] sm:$0x1] %vm1725, 0.0
  %1755 = vst.msk [vmem:[#allocation2 + $0x99] sm:$0x1] %vm1725, 0.0
  %1756 = vst.msk [vmem:[#allocation2 + $0xa9] sm:$0x1] %vm1725, 0.0
  %1757 = vst.msk [vmem:[#allocation2 + $0xb9] sm:$0x1] %vm1725, 0.0
  %1758 = vst.msk [vmem:[#allocation2 + $0xc9] sm:$0x1] %vm1725, 0.0
  %1759 = vst.msk [vmem:[#allocation2 + $0xd9] sm:$0x1] %vm1725, 0.0
  %1760 = vst.msk [vmem:[#allocation2 + $0xe9] sm:$0x1] %vm1725, 0.0
  %1761 = vst.msk [vmem:[#allocation2 + $0xf9] sm:$0x1] %vm1725, 0.0
  %1762 = vst.msk [vmem:[#allocation2 + $0x109] sm:$0x1] %vm1725, 0.0
  %1763 = vst.msk [vmem:[#allocation2 + $0x119] sm:$0x1] %vm1725, 0.0
  %1764 = vst.msk [vmem:[#allocation2 + $0x129] sm:$0x1] %vm1725, 0.0
  %1765 = vst.msk [vmem:[#allocation2 + $0x139] sm:$0x1] %vm1725, 0.0
  %s1766 = scalar_lea.vmem [#allocation2], 16
  %1767 = vst.msk [vmem:[%s1766 + $0x1] sm:$0xff] %vm1714, %v1698
  %1768 = vst.msk [vmem:[%s1766 + $0x11] sm:$0xff] %vm1714, %v1699
  %1769 = vst.msk [vmem:[%s1766 + $0x21] sm:$0xff] %vm1714, %v1700
  %1770 = vst.msk [vmem:[%s1766 + $0x31] sm:$0xff] %vm1714, %v1701
  %1771 = vst.msk [vmem:[%s1766 + $0x41] sm:$0xff] %vm1714, %v1702
  %1772 = vst.msk [vmem:[%s1766 + $0x51] sm:$0xff] %vm1714, %v1703
  %1773 = vst.msk [vmem:[%s1766 + $0x61] sm:$0xff] %vm1714, %v1704
  %1774 = vst.msk [vmem:[%s1766 + $0x71] sm:$0xff] %vm1714, %v1705
  %1775 = vst.msk [vmem:[%s1766 + $0xa1] sm:$0xff] %vm1714, %v1706
  %1776 = vst.msk [vmem:[%s1766 + $0xb1] sm:$0xff] %vm1714, %v1707
  %1777 = vst.msk [vmem:[%s1766 + $0xc1] sm:$0xff] %vm1714, %v1708
  %1778 = vst.msk [vmem:[%s1766 + $0xd1] sm:$0xff] %vm1714, %v1709
  %1779 = vst.msk [vmem:[%s1766 + $0xe1] sm:$0xff] %vm1714, %v1710
  %1780 = vst.msk [vmem:[%s1766 + $0xf1] sm:$0xff] %vm1714, %v1711
  %1781 = vst.msk [vmem:[%s1766 + $0x101] sm:$0xff] %vm1714, %v1712
  %1782 = vst.msk [vmem:[%s1766 + $0x111] sm:$0xff] %vm1714, %v1713
  %v1783 = vld [vmem:[#allocation2] sm:$0xff]
  %v1784 = vld [vmem:[#allocation2 + $0x10] sm:$0xff]
  %v1785 = vld [vmem:[#allocation2 + $0x20] sm:$0xff]
  %v1786 = vld [vmem:[#allocation2 + $0x30] sm:$0xff]
  %v1787 = vld [vmem:[#allocation2 + $0x40] sm:$0xff]
  %v1788 = vld [vmem:[#allocation2 + $0x50] sm:$0xff]
  %v1789 = vld [vmem:[#allocation2 + $0x60] sm:$0xff]
  %v1790 = vld [vmem:[#allocation2 + $0x70] sm:$0xff]
  %v1791 = vld [vmem:[#allocation2 + $0xa0] sm:$0xff]
  %v1792 = vld [vmem:[#allocation2 + $0xb0] sm:$0xff]
  %v1793 = vld [vmem:[#allocation2 + $0xc0] sm:$0xff]
  %v1794 = vld [vmem:[#allocation2 + $0xd0] sm:$0xff]
  %v1795 = vld [vmem:[#allocation2 + $0xe0] sm:$0xff]
  %v1796 = vld [vmem:[#allocation2 + $0xf0] sm:$0xff]
  %v1797 = vld [vmem:[#allocation2 + $0x100] sm:$0xff]
  %v1798 = vld [vmem:[#allocation2 + $0x110] sm:$0xff]
  %v1799 = vpack.c.bf16 %v1784, %v1783
  %v1800 = vpack.c.bf16 %v1786, %v1785
  %v1801 = vpack.c.bf16 %v1788, %v1787
  %v1802 = vpack.c.bf16 %v1790, %v1789
  %v1803 = vpack.c.bf16 %v1792, %v1791
  %v1804 = vpack.c.bf16 %v1794, %v1793
  %v1805 = vpack.c.bf16 %v1796, %v1795
  %v1806 = vpack.c.bf16 %v1798, %v1797
  %v1807 = vld [vmem:[%s2] sm:$0xf]
  %v1808 = vld [vmem:[#allocation2 + $0x1] sm:$0xff]
  %v1809 = vld [vmem:[#allocation2 + $0x11] sm:$0xff]
  %v1810 = vld [vmem:[#allocation2 + $0x21] sm:$0xff]
  %v1811 = vld [vmem:[#allocation2 + $0x31] sm:$0xff]
  %v1812 = vld [vmem:[#allocation2 + $0x41] sm:$0xff]
  %v1813 = vld [vmem:[#allocation2 + $0x51] sm:$0xff]
  %v1814 = vld [vmem:[#allocation2 + $0x61] sm:$0xff]
  %v1815 = vld [vmem:[#allocation2 + $0x71] sm:$0xff]
  %v1816 = vld [vmem:[#allocation2 + $0xa1] sm:$0xff]
  %v1817 = vld [vmem:[#allocation2 + $0xb1] sm:$0xff]
  %v1818 = vld [vmem:[#allocation2 + $0xc1] sm:$0xff]
  %v1819 = vld [vmem:[#allocation2 + $0xd1] sm:$0xff]
  %v1820 = vld [vmem:[#allocation2 + $0xe1] sm:$0xff]
  %v1821 = vld [vmem:[#allocation2 + $0xf1] sm:$0xff]
  %v1822 = vld [vmem:[#allocation2 + $0x101] sm:$0xff]
  %v1823 = vld [vmem:[#allocation2 + $0x111] sm:$0xff]
  %v1824 = vpack.c.bf16 %v1809, %v1808
  %v1825 = vpack.c.bf16 %v1811, %v1810
  %v1826 = vpack.c.bf16 %v1813, %v1812
  %v1827 = vpack.c.bf16 %v1815, %v1814
  %v1828 = vpack.c.bf16 %v1817, %v1816
  %v1829 = vpack.c.bf16 %v1819, %v1818
  %v1830 = vpack.c.bf16 %v1821, %v1820
  %v1831 = vpack.c.bf16 %v1823, %v1822
  %s1832 = scalar_lea.vmem %s2, 4
  %v1833 = vld [vmem:[%s1832] sm:$0xf]
  %v1835 = vsel %vm1714, %v1824, 0
  %v1838 = vsel %vm1714, %v1825, 0
  %v1841 = vsel %vm1714, %v1826, 0
  %v1844 = vsel %vm1714, %v1827, 0
  %v1847 = vsel %vm1714, %v1828, 0
  %v1850 = vsel %vm1714, %v1829, 0
  %v1853 = vsel %vm1714, %v1830, 0
  %v1856 = vsel %vm1714, %v1831, 0
  %vm1858 = vcmask 1043456
  %v1860 = vsel %vm1858, %v1833, 0
  %1862 = vmatprep.subr.bf16.mxu0 0
  %1863 = vmatpush1.bf16.msra.mxu0 %v1860
  %1864 = vmatprep.subr.bf16.mxu0 0
  %1865 = vmatpush1.bf16.msra.mxu0 0
  %1866 = vmatprep.subr.bf16.mxu0 0
  %1867 = vmatpush1.bf16.msra.mxu0 0
  %1868 = vmatprep.subr.bf16.mxu0 0
  %1869 = vmatpush1.bf16.msra.mxu0 0
  %1870 = vmatprep.subr.bf16.mxu0 0
  %1871 = vmatpush1.bf16.msra.mxu0 0
  %1872 = vmatprep.subr.bf16.mxu0 0
  %1873 = vmatpush1.bf16.msra.mxu0 0
  %1874 = vmatprep.subr.bf16.mxu0 0
  %1875 = vmatpush1.bf16.msra.mxu0 0
  %1876 = vmatprep.subr.bf16.mxu0 0
  %1877 = vmatpush1.bf16.msra.mxu0 0
  %1878 = vmatprep.subr.bf16.mxu0 0
  %1879 = vmatpush1.bf16.msra.mxu0 0
  %1880 = vmatprep.subr.bf16.mxu0 0
  %1881 = vmatpush1.bf16.msra.mxu0 0
  %1882 = vmatprep.subr.bf16.mxu0 0
  %1883 = vmatpush1.bf16.msra.mxu0 0
  %1884 = vmatprep.subr.bf16.mxu0 0
  %1885 = vmatpush1.bf16.msra.mxu0 0
  %1886 = vmatprep.subr.bf16.mxu0 0
  %1887 = vmatpush1.bf16.msra.mxu0 0
  %1888 = vmatprep.subr.bf16.mxu0 0
  %1889 = vmatpush1.bf16.msra.mxu0 0
  %1890 = vmatprep.subr.bf16.mxu0 0
  %1891 = vmatpush1.bf16.msra.mxu0 0
  %1892 = vmatprep.subr.bf16.mxu0 0
  %1893 = vmatpush1.bf16.msra.mxu0 0
  %1894 = vmatprep.mubr.bf16.mxu0 0
  %1895 = vmatmul.mubr.bf16.gmra.mrb[0].mxu0 %v1835
  %v1896 = vpop.f32.mrb[0].mxu0
  %v1897 = vadd.f32 0.0, %v1896
  %v1898 = vpop.f32.mrb[0].mxu0
  %v1899 = vpop.f32.mrb[0].mxu0
  %v1900 = vadd.f32 0.0, %v1899
  %v1901 = vpop.f32.mrb[0].mxu0
  %1902 = vmatprep.mubr.bf16.mxu0 0
  %1903 = vmatmul.mubr.bf16.gmra.mrb[0].mxu0 %v1838
  %v1904 = vpop.f32.mrb[0].mxu0
  %v1905 = vadd.f32 0.0, %v1904
  %v1906 = vpop.f32.mrb[0].mxu0
  %v1907 = vpop.f32.mrb[0].mxu0
  %v1908 = vadd.f32 0.0, %v1907
  %v1909 = vpop.f32.mrb[0].mxu0
  %1910 = vmatprep.mubr.bf16.mxu0 0
  %1911 = vmatmul.mubr.bf16.gmra.mrb[0].mxu0 %v1841
  %v1912 = vpop.f32.mrb[0].mxu0
  %v1913 = vadd.f32 0.0, %v1912
  %v1914 = vpop.f32.mrb[0].mxu0
  %v1915 = vpop.f32.mrb[0].mxu0
  %v1916 = vadd.f32 0.0, %v1915
  %v1917 = vpop.f32.mrb[0].mxu0
  %1918 = vmatprep.mubr.bf16.mxu0 0
  %1919 = vmatmul.mubr.bf16.gmra.mrb[0].mxu0 %v1844
  %v1920 = vpop.f32.mrb[0].mxu0
  %v1921 = vadd.f32 0.0, %v1920
  %v1922 = vpop.f32.mrb[0].mxu0
  %v1923 = vpop.f32.mrb[0].mxu0
  %v1924 = vadd.f32 0.0, %v1923
  %v1925 = vpop.f32.mrb[0].mxu0
  %1926 = vmatprep.mubr.bf16.mxu0 0
  %1927 = vmatmul.mubr.bf16.gmra.mrb[0].mxu0 %v1847
  %v1928 = vpop.f32.mrb[0].mxu0
  %v1929 = vadd.f32 0.0, %v1928
  %v1930 = vpop.f32.mrb[0].mxu0
  %v1931 = vpop.f32.mrb[0].mxu0
  %v1932 = vadd.f32 0.0, %v1931
  %v1933 = vpop.f32.mrb[0].mxu0
  %1934 = vmatprep.mubr.bf16.mxu0 0
  %1935 = vmatmul.mubr.bf16.gmra.mrb[0].mxu0 %v1850
  %v1936 = vpop.f32.mrb[0].mxu0
  %v1937 = vadd.f32 0.0, %v1936
  %v1938 = vpop.f32.mrb[0].mxu0
  %v1939 = vpop.f32.mrb[0].mxu0
  %v1940 = vadd.f32 0.0, %v1939
  %v1941 = vpop.f32.mrb[0].mxu0
  %1942 = vmatprep.mubr.bf16.mxu0 0
  %1943 = vmatmul.mubr.bf16.gmra.mrb[0].mxu0 %v1853
  %v1944 = vpop.f32.mrb[0].mxu0
  %v1945 = vadd.f32 0.0, %v1944
  %v1946 = vpop.f32.mrb[0].mxu0
  %v1947 = vpop.f32.mrb[0].mxu0
  %v1948 = vadd.f32 0.0, %v1947
  %v1949 = vpop.f32.mrb[0].mxu0
  %1950 = vmatprep.mubr.bf16.mxu0 0
  %1951 = vmatmul.mubr.bf16.gmra.mrb[0].mxu0 %v1856
  %v1952 = vpop.f32.mrb[0].mxu0
  %v1953 = vadd.f32 0.0, %v1952
  %v1954 = vpop.f32.mrb[0].mxu0
  %v1955 = vpop.f32.mrb[0].mxu0
  %v1956 = vadd.f32 0.0, %v1955
  %v1957 = vpop.f32.mrb[0].mxu0
  %1958 = vdwg.mxu0
  %v1960 = vsel %vm1714, %v1799, 0
  %v1963 = vsel %vm1714, %v1800, 0
  %v1966 = vsel %vm1714, %v1801, 0
  %v1969 = vsel %vm1714, %v1802, 0
  %v1972 = vsel %vm1714, %v1803, 0
  %v1975 = vsel %vm1714, %v1804, 0
  %v1978 = vsel %vm1714, %v1805, 0
  %v1981 = vsel %vm1714, %v1806, 0
  %v1984 = vsel %vm1858, %v1807, 0
  %1986 = vmatprep.subr.bf16.mxu0 0
  %1987 = vmatpush1.bf16.msra.mxu0 %v1984
  %1988 = vmatprep.subr.bf16.mxu0 0
  %1989 = vmatpush1.bf16.msra.mxu0 0
  %1990 = vmatprep.subr.bf16.mxu0 0
  %1991 = vmatpush1.bf16.msra.mxu0 0
  %1992 = vmatprep.subr.bf16.mxu0 0
  %1993 = vmatpush1.bf16.msra.mxu0 0
  %1994 = vmatprep.subr.bf16.mxu0 0
  %1995 = vmatpush1.bf16.msra.mxu0 0
  %1996 = vmatprep.subr.bf16.mxu0 0
  %1997 = vmatpush1.bf16.msra.mxu0 0
  %1998 = vmatprep.subr.bf16.mxu0 0
  %1999 = vmatpush1.bf16.msra.mxu0 0
  %2000 = vmatprep.subr.bf16.mxu0 0
  %2001 = vmatpush1.bf16.msra.mxu0 0
  %2002 = vmatprep.subr.bf16.mxu0 0
  %2003 = vmatpush1.bf16.msra.mxu0 0
  %2004 = vmatprep.subr.bf16.mxu0 0
  %2005 = vmatpush1.bf16.msra.mxu0 0
  %2006 = vmatprep.subr.bf16.mxu0 0
  %2007 = vmatpush1.bf16.msra.mxu0 0
  %2008 = vmatprep.subr.bf16.mxu0 0
  %2009 = vmatpush1.bf16.msra.mxu0 0
  %2010 = vmatprep.subr.bf16.mxu0 0
  %2011 = vmatpush1.bf16.msra.mxu0 0
  %2012 = vmatprep.subr.bf16.mxu0 0
  %2013 = vmatpush1.bf16.msra.mxu0 0
  %2014 = vmatprep.subr.bf16.mxu0 0
  %2015 = vmatpush1.bf16.msra.mxu0 0
  %2016 = vmatprep.subr.bf16.mxu0 0
  %2017 = vmatpush1.bf16.msra.mxu0 0
  %2018 = vmatprep.mubr.bf16.mxu0 0
  %2019 = vmatmul.mubr.bf16.gmra.mrb[0].mxu0 %v1960
  %v2020 = vpop.f32.mrb[0].mxu0
  %v2021 = vadd.f32 %v1897, %v2020
  %v2022 = vpop.f32.mrb[0].mxu0
  %v2023 = vpop.f32.mrb[0].mxu0
  %v2024 = vadd.f32 %v1900, %v2023
  %v2025 = vpop.f32.mrb[0].mxu0
  %2026 = vmatprep.mubr.bf16.mxu0 0
  %2027 = vmatmul.mubr.bf16.gmra.mrb[0].mxu0 %v1963
  %v2028 = vpop.f32.mrb[0].mxu0
  %v2029 = vadd.f32 %v1905, %v2028
  %v2030 = vpop.f32.mrb[0].mxu0
  %v2031 = vpop.f32.mrb[0].mxu0
  %v2032 = vadd.f32 %v1908, %v2031
  %v2033 = vpop.f32.mrb[0].mxu0
  %2034 = vmatprep.mubr.bf16.mxu0 0
  %2035 = vmatmul.mubr.bf16.gmra.mrb[0].mxu0 %v1966
  %v2036 = vpop.f32.mrb[0].mxu0
  %v2037 = vadd.f32 %v1913, %v2036
  %v2038 = vpop.f32.mrb[0].mxu0
  %v2039 = vpop.f32.mrb[0].mxu0
  %v2040 = vadd.f32 %v1916, %v2039
  %v2041 = vpop.f32.mrb[0].mxu0
  %2042 = vmatprep.mubr.bf16.mxu0 0
  %2043 = vmatmul.mubr.bf16.gmra.mrb[0].mxu0 %v1969
  %v2044 = vpop.f32.mrb[0].mxu0
  %v2045 = vadd.f32 %v1921, %v2044
  %v2046 = vpop.f32.mrb[0].mxu0
  %v2047 = vpop.f32.mrb[0].mxu0
  %v2048 = vadd.f32 %v1924, %v2047
  %v2049 = vpop.f32.mrb[0].mxu0
  %2050 = vmatprep.mubr.bf16.mxu0 0
  %2051 = vmatmul.mubr.bf16.gmra.mrb[0].mxu0 %v1972
  %v2052 = vpop.f32.mrb[0].mxu0
  %v2053 = vadd.f32 %v1929, %v2052
  %v2054 = vpop.f32.mrb[0].mxu0
  %v2055 = vpop.f32.mrb[0].mxu0
  %v2056 = vadd.f32 %v1932, %v2055
  %v2057 = vpop.f32.mrb[0].mxu0
  %2058 = vmatprep.mubr.bf16.mxu0 0
  %2059 = vmatmul.mubr.bf16.gmra.mrb[0].mxu0 %v1975
  %v2060 = vpop.f32.mrb[0].mxu0
  %v2061 = vadd.f32 %v1937, %v2060
  %v2062 = vpop.f32.mrb[0].mxu0
  %v2063 = vpop.f32.mrb[0].mxu0
  %v2064 = vadd.f32 %v1940, %v2063
  %v2065 = vpop.f32.mrb[0].mxu0
  %2066 = vmatprep.mubr.bf16.mxu0 0
  %2067 = vmatmul.mubr.bf16.gmra.mrb[0].mxu0 %v1978
  %v2068 = vpop.f32.mrb[0].mxu0
  %v2069 = vadd.f32 %v1945, %v2068
  %v2070 = vpop.f32.mrb[0].mxu0
  %v2071 = vpop.f32.mrb[0].mxu0
  %v2072 = vadd.f32 %v1948, %v2071
  %v2073 = vpop.f32.mrb[0].mxu0
  %2074 = vmatprep.mubr.bf16.mxu0 0
  %2075 = vmatmul.mubr.bf16.gmra.mrb[0].mxu0 %v1981
  %v2076 = vpop.f32.mrb[0].mxu0
  %v2077 = vadd.f32 %v1953, %v2076
  %v2078 = vpop.f32.mrb[0].mxu0
  %v2079 = vpop.f32.mrb[0].mxu0
  %v2080 = vadd.f32 %v1956, %v2079
  %v2081 = vpop.f32.mrb[0].mxu0
  %2082 = vdwg.mxu0
  %v2083 = vld [vmem:[#allocation2 + $0x2] sm:$0xff]
  %v2084 = vld [vmem:[#allocation2 + $0x12] sm:$0xff]
  %v2085 = vld [vmem:[#allocation2 + $0x22] sm:$0xff]
  %v2086 = vld [vmem:[#allocation2 + $0x32] sm:$0xff]
  %v2087 = vld [vmem:[#allocation2 + $0x42] sm:$0xff]
  %v2088 = vld [vmem:[#allocation2 + $0x52] sm:$0xff]
  %v2089 = vld [vmem:[#allocation2 + $0x62] sm:$0xff]
  %v2090 = vld [vmem:[#allocation2 + $0x72] sm:$0xff]
  %v2091 = vld [vmem:[#allocation2 + $0xa2] sm:$0xff]
  %v2092 = vld [vmem:[#allocation2 + $0xb2] sm:$0xff]
  %v2093 = vld [vmem:[#allocation2 + $0xc2] sm:$0xff]
  %v2094 = vld [vmem:[#allocation2 + $0xd2] sm:$0xff]
  %v2095 = vld [vmem:[#allocation2 + $0xe2] sm:$0xff]
  %v2096 = vld [vmem:[#allocation2 + $0xf2] sm:$0xff]
  %v2097 = vld [vmem:[#allocation2 + $0x102] sm:$0xff]
  %v2098 = vld [vmem:[#allocation2 + $0x112] sm:$0xff]
  %v2099 = vpack.c.bf16 %v2084, %v2083
  %v2100 = vpack.c.bf16 %v2086, %v2085
  %v2101 = vpack.c.bf16 %v2088, %v2087
  %v2102 = vpack.c.bf16 %v2090, %v2089
  %v2103 = vpack.c.bf16 %v2092, %v2091
  %v2104 = vpack.c.bf16 %v2094, %v2093
  %v2105 = vpack.c.bf16 %v2096, %v2095
  %v2106 = vpack.c.bf16 %v2098, %v2097
  %s2107 = scalar_lea.vmem %s2, 8
  %v2108 = vld [vmem:[%s2107] sm:$0xf]
  %v2110 = vsel %vm1714, %v2099, 0
  %v2113 = vsel %vm1714, %v2100, 0
  %v2116 = vsel %vm1714, %v2101, 0
  %v2119 = vsel %vm1714, %v2102, 0
  %v2122 = vsel %vm1714, %v2103, 0
  %v2125 = vsel %vm1714, %v2104, 0
  %v2128 = vsel %vm1714, %v2105, 0
  %v2131 = vsel %vm1714, %v2106, 0
  %v2134 = vsel %vm1858, %v2108, 0
  %2136 = vmatprep.subr.bf16.mxu0 0
  %2137 = vmatpush1.bf16.msra.mxu0 %v2134
  %2138 = vmatprep.subr.bf16.mxu0 0
  %2139 = vmatpush1.bf16.msra.mxu0 0
  %2140 = vmatprep.subr.bf16.mxu0 0
  %2141 = vmatpush1.bf16.msra.mxu0 0
  %2142 = vmatprep.subr.bf16.mxu0 0
  %2143 = vmatpush1.bf16.msra.mxu0 0
  %2144 = vmatprep.subr.bf16.mxu0 0
  %2145 = vmatpush1.bf16.msra.mxu0 0
  %2146 = vmatprep.subr.bf16.mxu0 0
  %2147 = vmatpush1.bf16.msra.mxu0 0
  %2148 = vmatprep.subr.bf16.mxu0 0
  %2149 = vmatpush1.bf16.msra.mxu0 0
  %2150 = vmatprep.subr.bf16.mxu0 0
  %2151 = vmatpush1.bf16.msra.mxu0 0
  %2152 = vmatprep.subr.bf16.mxu0 0
  %2153 = vmatpush1.bf16.msra.mxu0 0
  %2154 = vmatprep.subr.bf16.mxu0 0
  %2155 = vmatpush1.bf16.msra.mxu0 0
  %2156 = vmatprep.subr.bf16.mxu0 0
  %2157 = vmatpush1.bf16.msra.mxu0 0
  %2158 = vmatprep.subr.bf16.mxu0 0
  %2159 = vmatpush1.bf16.msra.mxu0 0
  %2160 = vmatprep.subr.bf16.mxu0 0
  %2161 = vmatpush1.bf16.msra.mxu0 0
  %2162 = vmatprep.subr.bf16.mxu0 0
  %2163 = vmatpush1.bf16.msra.mxu0 0
  %2164 = vmatprep.subr.bf16.mxu0 0
  %2165 = vmatpush1.bf16.msra.mxu0 0
  %2166 = vmatprep.subr.bf16.mxu0 0
  %2167 = vmatpush1.bf16.msra.mxu0 0
  %2168 = vmatprep.mubr.bf16.mxu0 0
  %2169 = vmatmul.mubr.bf16.gmra.mrb[0].mxu0 %v2110
  %v2170 = vpop.f32.mrb[0].mxu0
  %v2171 = vadd.f32 0.0, %v2170
  %v2172 = vpop.f32.mrb[0].mxu0
  %v2173 = vpop.f32.mrb[0].mxu0
  %v2174 = vadd.f32 0.0, %v2173
  %v2175 = vpop.f32.mrb[0].mxu0
  %2176 = vmatprep.mubr.bf16.mxu0 0
  %2177 = vmatmul.mubr.bf16.gmra.mrb[0].mxu0 %v2113
  %v2178 = vpop.f32.mrb[0].mxu0
  %v2179 = vadd.f32 0.0, %v2178
  %v2180 = vpop.f32.mrb[0].mxu0
  %v2181 = vpop.f32.mrb[0].mxu0
  %v2182 = vadd.f32 0.0, %v2181
  %v2183 = vpop.f32.mrb[0].mxu0
  %2184 = vmatprep.mubr.bf16.mxu0 0
  %2185 = vmatmul.mubr.bf16.gmra.mrb[0].mxu0 %v2116
  %v2186 = vpop.f32.mrb[0].mxu0
  %v2187 = vadd.f32 0.0, %v2186
  %v2188 = vpop.f32.mrb[0].mxu0
  %v2189 = vpop.f32.mrb[0].mxu0
  %v2190 = vadd.f32 0.0, %v2189
  %v2191 = vpop.f32.mrb[0].mxu0
  %2192 = vmatprep.mubr.bf16.mxu0 0
  %2193 = vmatmul.mubr.bf16.gmra.mrb[0].mxu0 %v2119
  %v2194 = vpop.f32.mrb[0].mxu0
  %v2195 = vadd.f32 0.0, %v2194
  %v2196 = vpop.f32.mrb[0].mxu0
  %v2197 = vpop.f32.mrb[0].mxu0
  %v2198 = vadd.f32 0.0, %v2197
  %v2199 = vpop.f32.mrb[0].mxu0
  %2200 = vmatprep.mubr.bf16.mxu0 0
  %2201 = vmatmul.mubr.bf16.gmra.mrb[0].mxu0 %v2122
  %v2202 = vpop.f32.mrb[0].mxu0
  %v2203 = vadd.f32 0.0, %v2202
  %v2204 = vpop.f32.mrb[0].mxu0
  %v2205 = vpop.f32.mrb[0].mxu0
  %v2206 = vadd.f32 0.0, %v2205
  %v2207 = vpop.f32.mrb[0].mxu0
  %2208 = vmatprep.mubr.bf16.mxu0 0
  %2209 = vmatmul.mubr.bf16.gmra.mrb[0].mxu0 %v2125
  %v2210 = vpop.f32.mrb[0].mxu0
  %v2211 = vadd.f32 0.0, %v2210
  %v2212 = vpop.f32.mrb[0].mxu0
  %v2213 = vpop.f32.mrb[0].mxu0
  %v2214 = vadd.f32 0.0, %v2213
  %v2215 = vpop.f32.mrb[0].mxu0
  %2216 = vmatprep.mubr.bf16.mxu0 0
  %2217 = vmatmul.mubr.bf16.gmra.mrb[0].mxu0 %v2128
  %v2218 = vpop.f32.mrb[0].mxu0
  %v2219 = vadd.f32 0.0, %v2218
  %v2220 = vpop.f32.mrb[0].mxu0
  %v2221 = vpop.f32.mrb[0].mxu0
  %v2222 = vadd.f32 0.0, %v2221
  %v2223 = vpop.f32.mrb[0].mxu0
  %2224 = vmatprep.mubr.bf16.mxu0 0
  %2225 = vmatmul.mubr.bf16.gmra.mrb[0].mxu0 %v2131
  %v2226 = vpop.f32.mrb[0].mxu0
  %v2227 = vadd.f32 0.0, %v2226
  %v2228 = vpop.f32.mrb[0].mxu0
  %v2229 = vpop.f32.mrb[0].mxu0
  %v2230 = vadd.f32 0.0, %v2229
  %v2231 = vpop.f32.mrb[0].mxu0
  %2232 = vdwg.mxu0
  %v2233 = vadd.f32 %v2021, %v2171
  %v2234 = vadd.f32 %v2024, %v2174
  %v2235 = vadd.f32 %v2029, %v2179
  %v2236 = vadd.f32 %v2032, %v2182
  %v2237 = vadd.f32 %v2037, %v2187
  %v2238 = vadd.f32 %v2040, %v2190
  %v2239 = vadd.f32 %v2045, %v2195
  %v2240 = vadd.f32 %v2048, %v2198
  %v2241 = vadd.f32 %v2053, %v2203
  %v2242 = vadd.f32 %v2056, %v2206
  %v2243 = vadd.f32 %v2061, %v2211
  %v2244 = vadd.f32 %v2064, %v2214
  %v2245 = vadd.f32 %v2069, %v2219
  %v2246 = vadd.f32 %v2072, %v2222
  %v2247 = vadd.f32 %v2077, %v2227
  %v2248 = vadd.f32 %v2080, %v2230
  %v2249 = vld [vmem:[%s1766] sm:$0xff]
  %v2250 = vld [vmem:[%s1766 + $0x10] sm:$0xff]
  %v2251 = vld [vmem:[%s1766 + $0x20] sm:$0xff]
  %v2252 = vld [vmem:[%s1766 + $0x30] sm:$0xff]
  %v2253 = vld [vmem:[%s1766 + $0x40] sm:$0xff]
  %v2254 = vld [vmem:[%s1766 + $0x50] sm:$0xff]
  %v2255 = vld [vmem:[%s1766 + $0x60] sm:$0xff]
  %v2256 = vld [vmem:[%s1766 + $0x70] sm:$0xff]
  %v2257 = vld [vmem:[%s1766 + $0xa0] sm:$0xff]
  %v2258 = vld [vmem:[%s1766 + $0xb0] sm:$0xff]
  %v2259 = vld [vmem:[%s1766 + $0xc0] sm:$0xff]
  %v2260 = vld [vmem:[%s1766 + $0xd0] sm:$0xff]
  %v2261 = vld [vmem:[%s1766 + $0xe0] sm:$0xff]
  %v2262 = vld [vmem:[%s1766 + $0xf0] sm:$0xff]
  %v2263 = vld [vmem:[%s1766 + $0x100] sm:$0xff]
  %v2264 = vld [vmem:[%s1766 + $0x110] sm:$0xff]
  %v2265 = vpack.c.bf16 %v2250, %v2249
  %v2266 = vpack.c.bf16 %v2252, %v2251
  %v2267 = vpack.c.bf16 %v2254, %v2253
  %v2268 = vpack.c.bf16 %v2256, %v2255
  %v2269 = vpack.c.bf16 %v2258, %v2257
  %v2270 = vpack.c.bf16 %v2260, %v2259
  %v2271 = vpack.c.bf16 %v2262, %v2261
  %v2272 = vpack.c.bf16 %v2264, %v2263
  %s2273 = scalar_lea.vmem %s2, 12
  %v2274 = vld [vmem:[%s2273] sm:$0xf]
  %v2276 = vsel %vm1714, %v2265, 0
  %v2279 = vsel %vm1714, %v2266, 0
  %v2282 = vsel %vm1714, %v2267, 0
  %v2285 = vsel %vm1714, %v2268, 0
  %v2288 = vsel %vm1714, %v2269, 0
  %v2291 = vsel %vm1714, %v2270, 0
  %v2294 = vsel %vm1714, %v2271, 0
  %v2297 = vsel %vm1714, %v2272, 0
  %v2300 = vsel %vm1858, %v2274, 0
  %2302 = vmatprep.subr.bf16.mxu0 0
  %2303 = vmatpush1.bf16.msra.mxu0 %v2300
  %2304 = vmatprep.subr.bf16.mxu0 0
  %2305 = vmatpush1.bf16.msra.mxu0 0
  %2306 = vmatprep.subr.bf16.mxu0 0
  %2307 = vmatpush1.bf16.msra.mxu0 0
  %2308 = vmatprep.subr.bf16.mxu0 0
  %2309 = vmatpush1.bf16.msra.mxu0 0
  %2310 = vmatprep.subr.bf16.mxu0 0
  %2311 = vmatpush1.bf16.msra.mxu0 0
  %2312 = vmatprep.subr.bf16.mxu0 0
  %2313 = vmatpush1.bf16.msra.mxu0 0
  %2314 = vmatprep.subr.bf16.mxu0 0
  %2315 = vmatpush1.bf16.msra.mxu0 0
  %2316 = vmatprep.subr.bf16.mxu0 0
  %2317 = vmatpush1.bf16.msra.mxu0 0
  %2318 = vmatprep.subr.bf16.mxu0 0
  %2319 = vmatpush1.bf16.msra.mxu0 0
  %2320 = vmatprep.subr.bf16.mxu0 0
  %2321 = vmatpush1.bf16.msra.mxu0 0
  %2322 = vmatprep.subr.bf16.mxu0 0
  %2323 = vmatpush1.bf16.msra.mxu0 0
  %2324 = vmatprep.subr.bf16.mxu0 0
  %2325 = vmatpush1.bf16.msra.mxu0 0
  %2326 = vmatprep.subr.bf16.mxu0 0
  %2327 = vmatpush1.bf16.msra.mxu0 0
  %2328 = vmatprep.subr.bf16.mxu0 0
  %2329 = vmatpush1.bf16.msra.mxu0 0
  %2330 = vmatprep.subr.bf16.mxu0 0
  %2331 = vmatpush1.bf16.msra.mxu0 0
  %2332 = vmatprep.subr.bf16.mxu0 0
  %2333 = vmatpush1.bf16.msra.mxu0 0
  %2334 = vmatprep.mubr.bf16.mxu0 0
  %2335 = vmatmul.mubr.bf16.gmra.mrb[0].mxu0 %v2276
  %v2336 = vpop.f32.mrb[0].mxu0
  %v2337 = vadd.f32 0.0, %v2336
  %v2338 = vpop.f32.mrb[0].mxu0
  %v2339 = vpop.f32.mrb[0].mxu0
  %v2340 = vadd.f32 0.0, %v2339
  %v2341 = vpop.f32.mrb[0].mxu0
  %2342 = vmatprep.mubr.bf16.mxu0 0
  %2343 = vmatmul.mubr.bf16.gmra.mrb[0].mxu0 %v2279
  %v2344 = vpop.f32.mrb[0].mxu0
  %v2345 = vadd.f32 0.0, %v2344
  %v2346 = vpop.f32.mrb[0].mxu0
  %v2347 = vpop.f32.mrb[0].mxu0
  %v2348 = vadd.f32 0.0, %v2347
  %v2349 = vpop.f32.mrb[0].mxu0
  %2350 = vmatprep.mubr.bf16.mxu0 0
  %2351 = vmatmul.mubr.bf16.gmra.mrb[0].mxu0 %v2282
  %v2352 = vpop.f32.mrb[0].mxu0
  %v2353 = vadd.f32 0.0, %v2352
  %v2354 = vpop.f32.mrb[0].mxu0
  %v2355 = vpop.f32.mrb[0].mxu0
  %v2356 = vadd.f32 0.0, %v2355
  %v2357 = vpop.f32.mrb[0].mxu0
  %2358 = vmatprep.mubr.bf16.mxu0 0
  %2359 = vmatmul.mubr.bf16.gmra.mrb[0].mxu0 %v2285
  %v2360 = vpop.f32.mrb[0].mxu0
  %v2361 = vadd.f32 0.0, %v2360
  %v2362 = vpop.f32.mrb[0].mxu0
  %v2363 = vpop.f32.mrb[0].mxu0
  %v2364 = vadd.f32 0.0, %v2363
  %v2365 = vpop.f32.mrb[0].mxu0
  %2366 = vmatprep.mubr.bf16.mxu0 0
  %2367 = vmatmul.mubr.bf16.gmra.mrb[0].mxu0 %v2288
  %v2368 = vpop.f32.mrb[0].mxu0
  %v2369 = vadd.f32 0.0, %v2368
  %v2370 = vpop.f32.mrb[0].mxu0
  %v2371 = vpop.f32.mrb[0].mxu0
  %v2372 = vadd.f32 0.0, %v2371
  %v2373 = vpop.f32.mrb[0].mxu0
  %2374 = vmatprep.mubr.bf16.mxu0 0
  %2375 = vmatmul.mubr.bf16.gmra.mrb[0].mxu0 %v2291
  %v2376 = vpop.f32.mrb[0].mxu0
  %v2377 = vadd.f32 0.0, %v2376
  %v2378 = vpop.f32.mrb[0].mxu0
  %v2379 = vpop.f32.mrb[0].mxu0
  %v2380 = vadd.f32 0.0, %v2379
  %v2381 = vpop.f32.mrb[0].mxu0
  %2382 = vmatprep.mubr.bf16.mxu0 0
  %2383 = vmatmul.mubr.bf16.gmra.mrb[0].mxu0 %v2294
  %v2384 = vpop.f32.mrb[0].mxu0
  %v2385 = vadd.f32 0.0, %v2384
  %v2386 = vpop.f32.mrb[0].mxu0
  %v2387 = vpop.f32.mrb[0].mxu0
  %v2388 = vadd.f32 0.0, %v2387
  %v2389 = vpop.f32.mrb[0].mxu0
  %2390 = vmatprep.mubr.bf16.mxu0 0
  %2391 = vmatmul.mubr.bf16.gmra.mrb[0].mxu0 %v2297
  %v2392 = vpop.f32.mrb[0].mxu0
  %v2393 = vadd.f32 0.0, %v2392
  %v2394 = vpop.f32.mrb[0].mxu0
  %v2395 = vpop.f32.mrb[0].mxu0
  %v2396 = vadd.f32 0.0, %v2395
  %v2397 = vpop.f32.mrb[0].mxu0
  %2398 = vdwg.mxu0
  %v2399 = vadd.f32 %v2233, %v2337
  %v2400 = vadd.f32 %v2234, %v2340
  %v2401 = vadd.f32 %v2235, %v2345
  %v2402 = vadd.f32 %v2236, %v2348
  %v2403 = vadd.f32 %v2237, %v2353
  %v2404 = vadd.f32 %v2238, %v2356
  %v2405 = vadd.f32 %v2239, %v2361
  %v2406 = vadd.f32 %v2240, %v2364
  %v2407 = vadd.f32 %v2241, %v2369
  %v2408 = vadd.f32 %v2242, %v2372
  %v2409 = vadd.f32 %v2243, %v2377
  %v2410 = vadd.f32 %v2244, %v2380
  %v2411 = vadd.f32 %v2245, %v2385
  %v2412 = vadd.f32 %v2246, %v2388
  %v2413 = vadd.f32 %v2247, %v2393
  %v2414 = vadd.f32 %v2248, %v2396
  %v2415 = vld [vmem:[%s1766 + $0x1] sm:$0xff]
  %v2416 = vld [vmem:[%s1766 + $0x11] sm:$0xff]
  %v2417 = vld [vmem:[%s1766 + $0x21] sm:$0xff]
  %v2418 = vld [vmem:[%s1766 + $0x31] sm:$0xff]
  %v2419 = vld [vmem:[%s1766 + $0x41] sm:$0xff]
  %v2420 = vld [vmem:[%s1766 + $0x51] sm:$0xff]
  %v2421 = vld [vmem:[%s1766 + $0x61] sm:$0xff]
  %v2422 = vld [vmem:[%s1766 + $0x71] sm:$0xff]
  %v2423 = vld [vmem:[%s1766 + $0xa1] sm:$0xff]
  %v2424 = vld [vmem:[%s1766 + $0xb1] sm:$0xff]
  %v2425 = vld [vmem:[%s1766 + $0xc1] sm:$0xff]
  %v2426 = vld [vmem:[%s1766 + $0xd1] sm:$0xff]
  %v2427 = vld [vmem:[%s1766 + $0xe1] sm:$0xff]
  %v2428 = vld [vmem:[%s1766 + $0xf1] sm:$0xff]
  %v2429 = vld [vmem:[%s1766 + $0x101] sm:$0xff]
  %v2430 = vld [vmem:[%s1766 + $0x111] sm:$0xff]
  %v2431 = vpack.c.bf16 %v2416, %v2415
  %v2432 = vpack.c.bf16 %v2418, %v2417
  %v2433 = vpack.c.bf16 %v2420, %v2419
  %v2434 = vpack.c.bf16 %v2422, %v2421
  %v2435 = vpack.c.bf16 %v2424, %v2423
  %v2436 = vpack.c.bf16 %v2426, %v2425
  %v2437 = vpack.c.bf16 %v2428, %v2427
  %v2438 = vpack.c.bf16 %v2430, %v2429
  %s2439 = scalar_lea.vmem %s2, 16
  %v2440 = vld [vmem:[%s2439] sm:$0xf]
  %v2442 = vsel %vm1714, %v2431, 0
  %v2445 = vsel %vm1714, %v2432, 0
  %v2448 = vsel %vm1714, %v2433, 0
  %v2451 = vsel %vm1714, %v2434, 0
  %v2454 = vsel %vm1714, %v2435, 0
  %v2457 = vsel %vm1714, %v2436, 0
  %v2460 = vsel %vm1714, %v2437, 0
  %v2463 = vsel %vm1714, %v2438, 0
  %v2466 = vsel %vm1858, %v2440, 0
  %2468 = vmatprep.subr.bf16.mxu0 0
  %2469 = vmatpush1.bf16.msra.mxu0 %v2466
  %2470 = vmatprep.subr.bf16.mxu0 0
  %2471 = vmatpush1.bf16.msra.mxu0 0
  %2472 = vmatprep.subr.bf16.mxu0 0
  %2473 = vmatpush1.bf16.msra.mxu0 0
  %2474 = vmatprep.subr.bf16.mxu0 0
  %2475 = vmatpush1.bf16.msra.mxu0 0
  %2476 = vmatprep.subr.bf16.mxu0 0
  %2477 = vmatpush1.bf16.msra.mxu0 0
  %2478 = vmatprep.subr.bf16.mxu0 0
  %2479 = vmatpush1.bf16.msra.mxu0 0
  %2480 = vmatprep.subr.bf16.mxu0 0
  %2481 = vmatpush1.bf16.msra.mxu0 0
  %2482 = vmatprep.subr.bf16.mxu0 0
  %2483 = vmatpush1.bf16.msra.mxu0 0
  %2484 = vmatprep.subr.bf16.mxu0 0
  %2485 = vmatpush1.bf16.msra.mxu0 0
  %2486 = vmatprep.subr.bf16.mxu0 0
  %2487 = vmatpush1.bf16.msra.mxu0 0
  %2488 = vmatprep.subr.bf16.mxu0 0
  %2489 = vmatpush1.bf16.msra.mxu0 0
  %2490 = vmatprep.subr.bf16.mxu0 0
  %2491 = vmatpush1.bf16.msra.mxu0 0
  %2492 = vmatprep.subr.bf16.mxu0 0
  %2493 = vmatpush1.bf16.msra.mxu0 0
  %2494 = vmatprep.subr.bf16.mxu0 0
  %2495 = vmatpush1.bf16.msra.mxu0 0
  %2496 = vmatprep.subr.bf16.mxu0 0
  %2497 = vmatpush1.bf16.msra.mxu0 0
  %2498 = vmatprep.subr.bf16.mxu0 0
  %2499 = vmatpush1.bf16.msra.mxu0 0
  %2500 = vmatprep.mubr.bf16.mxu0 0
  %2501 = vmatmul.mubr.bf16.gmra.mrb[0].mxu0 %v2442
  %v2502 = vpop.f32.mrb[0].mxu0
  %v2503 = vadd.f32 0.0, %v2502
  %v2504 = vpop.f32.mrb[0].mxu0
  %v2505 = vpop.f32.mrb[0].mxu0
  %v2506 = vadd.f32 0.0, %v2505
  %v2507 = vpop.f32.mrb[0].mxu0
  %2508 = vmatprep.mubr.bf16.mxu0 0
  %2509 = vmatmul.mubr.bf16.gmra.mrb[0].mxu0 %v2445
  %v2510 = vpop.f32.mrb[0].mxu0
  %v2511 = vadd.f32 0.0, %v2510
  %v2512 = vpop.f32.mrb[0].mxu0
  %v2513 = vpop.f32.mrb[0].mxu0
  %v2514 = vadd.f32 0.0, %v2513
  %v2515 = vpop.f32.mrb[0].mxu0
  %2516 = vmatprep.mubr.bf16.mxu0 0
  %2517 = vmatmul.mubr.bf16.gmra.mrb[0].mxu0 %v2448
  %v2518 = vpop.f32.mrb[0].mxu0
  %v2519 = vadd.f32 0.0, %v2518
  %v2520 = vpop.f32.mrb[0].mxu0
  %v2521 = vpop.f32.mrb[0].mxu0
  %v2522 = vadd.f32 0.0, %v2521
  %v2523 = vpop.f32.mrb[0].mxu0
  %2524 = vmatprep.mubr.bf16.mxu0 0
  %2525 = vmatmul.mubr.bf16.gmra.mrb[0].mxu0 %v2451
  %v2526 = vpop.f32.mrb[0].mxu0
  %v2527 = vadd.f32 0.0, %v2526
  %v2528 = vpop.f32.mrb[0].mxu0
  %v2529 = vpop.f32.mrb[0].mxu0
  %v2530 = vadd.f32 0.0, %v2529
  %v2531 = vpop.f32.mrb[0].mxu0
  %2532 = vmatprep.mubr.bf16.mxu0 0
  %2533 = vmatmul.mubr.bf16.gmra.mrb[0].mxu0 %v2454
  %v2534 = vpop.f32.mrb[0].mxu0
  %v2535 = vadd.f32 0.0, %v2534
  %v2536 = vpop.f32.mrb[0].mxu0
  %v2537 = vpop.f32.mrb[0].mxu0
  %v2538 = vadd.f32 0.0, %v2537
  %v2539 = vpop.f32.mrb[0].mxu0
  %2540 = vmatprep.mubr.bf16.mxu0 0
  %2541 = vmatmul.mubr.bf16.gmra.mrb[0].mxu0 %v2457
  %v2542 = vpop.f32.mrb[0].mxu0
  %v2543 = vadd.f32 0.0, %v2542
  %v2544 = vpop.f32.mrb[0].mxu0
  %v2545 = vpop.f32.mrb[0].mxu0
  %v2546 = vadd.f32 0.0, %v2545
  %v2547 = vpop.f32.mrb[0].mxu0
  %2548 = vmatprep.mubr.bf16.mxu0 0
  %2549 = vmatmul.mubr.bf16.gmra.mrb[0].mxu0 %v2460
  %v2550 = vpop.f32.mrb[0].mxu0
  %v2551 = vadd.f32 0.0, %v2550
  %v2552 = vpop.f32.mrb[0].mxu0
  %v2553 = vpop.f32.mrb[0].mxu0
  %v2554 = vadd.f32 0.0, %v2553
  %v2555 = vpop.f32.mrb[0].mxu0
  %2556 = vmatprep.mubr.bf16.mxu0 0
  %2557 = vmatmul.mubr.bf16.gmra.mrb[0].mxu0 %v2463
  %v2558 = vpop.f32.mrb[0].mxu0
  %v2559 = vadd.f32 0.0, %v2558
  %v2560 = vpop.f32.mrb[0].mxu0
  %v2561 = vpop.f32.mrb[0].mxu0
  %v2562 = vadd.f32 0.0, %v2561
  %v2563 = vpop.f32.mrb[0].mxu0
  %2564 = vdwg.mxu0
  %v2565 = vadd.f32 %v2399, %v2503
  %v2566 = vadd.f32 %v2400, %v2506
  %v2567 = vadd.f32 %v2401, %v2511
  %v2568 = vadd.f32 %v2402, %v2514
  %v2569 = vadd.f32 %v2403, %v2519
  %v2570 = vadd.f32 %v2404, %v2522
  %v2571 = vadd.f32 %v2405, %v2527
  %v2572 = vadd.f32 %v2406, %v2530
  %v2573 = vadd.f32 %v2407, %v2535
  %v2574 = vadd.f32 %v2408, %v2538
  %v2575 = vadd.f32 %v2409, %v2543
  %v2576 = vadd.f32 %v2410, %v2546
  %v2577 = vadd.f32 %v2411, %v2551
  %v2578 = vadd.f32 %v2412, %v2554
  %v2579 = vadd.f32 %v2413, %v2559
  %v2580 = vadd.f32 %v2414, %v2562
  %v2581 = vld [vmem:[%s1766 + $0x2] sm:$0xff]
  %v2582 = vld [vmem:[%s1766 + $0x12] sm:$0xff]
  %v2583 = vld [vmem:[%s1766 + $0x22] sm:$0xff]
  %v2584 = vld [vmem:[%s1766 + $0x32] sm:$0xff]
  %v2585 = vld [vmem:[%s1766 + $0x42] sm:$0xff]
  %v2586 = vld [vmem:[%s1766 + $0x52] sm:$0xff]
  %v2587 = vld [vmem:[%s1766 + $0x62] sm:$0xff]
  %v2588 = vld [vmem:[%s1766 + $0x72] sm:$0xff]
  %v2589 = vld [vmem:[%s1766 + $0xa2] sm:$0xff]
  %v2590 = vld [vmem:[%s1766 + $0xb2] sm:$0xff]
  %v2591 = vld [vmem:[%s1766 + $0xc2] sm:$0xff]
  %v2592 = vld [vmem:[%s1766 + $0xd2] sm:$0xff]
  %v2593 = vld [vmem:[%s1766 + $0xe2] sm:$0xff]
  %v2594 = vld [vmem:[%s1766 + $0xf2] sm:$0xff]
  %v2595 = vld [vmem:[%s1766 + $0x102] sm:$0xff]
  %v2596 = vld [vmem:[%s1766 + $0x112] sm:$0xff]
  %v2597 = vpack.c.bf16 %v2582, %v2581
  %v2598 = vpack.c.bf16 %v2584, %v2583
  %v2599 = vpack.c.bf16 %v2586, %v2585
  %v2600 = vpack.c.bf16 %v2588, %v2587
  %v2601 = vpack.c.bf16 %v2590, %v2589
  %v2602 = vpack.c.bf16 %v2592, %v2591
  %v2603 = vpack.c.bf16 %v2594, %v2593
  %v2604 = vpack.c.bf16 %v2596, %v2595
  %s2605 = scalar_lea.vmem %s2, 20
  %v2606 = vld [vmem:[%s2605] sm:$0xf]
  %v2608 = vsel %vm1714, %v2597, 0
  %v2611 = vsel %vm1714, %v2598, 0
  %v2614 = vsel %vm1714, %v2599, 0
  %v2617 = vsel %vm1714, %v2600, 0
  %v2620 = vsel %vm1714, %v2601, 0
  %v2623 = vsel %vm1714, %v2602, 0
  %v2626 = vsel %vm1714, %v2603, 0
  %v2629 = vsel %vm1714, %v2604, 0
  %v2632 = vsel %vm1858, %v2606, 0
  %2634 = vmatprep.subr.bf16.mxu0 0
  %2635 = vmatpush1.bf16.msra.mxu0 %v2632
  %2636 = vmatprep.subr.bf16.mxu0 0
  %2637 = vmatpush1.bf16.msra.mxu0 0
  %2638 = vmatprep.subr.bf16.mxu0 0
  %2639 = vmatpush1.bf16.msra.mxu0 0
  %2640 = vmatprep.subr.bf16.mxu0 0
  %2641 = vmatpush1.bf16.msra.mxu0 0
  %2642 = vmatprep.subr.bf16.mxu0 0
  %2643 = vmatpush1.bf16.msra.mxu0 0
  %2644 = vmatprep.subr.bf16.mxu0 0
  %2645 = vmatpush1.bf16.msra.mxu0 0
  %2646 = vmatprep.subr.bf16.mxu0 0
  %2647 = vmatpush1.bf16.msra.mxu0 0
  %2648 = vmatprep.subr.bf16.mxu0 0
  %2649 = vmatpush1.bf16.msra.mxu0 0
  %2650 = vmatprep.subr.bf16.mxu0 0
  %2651 = vmatpush1.bf16.msra.mxu0 0
  %2652 = vmatprep.subr.bf16.mxu0 0
  %2653 = vmatpush1.bf16.msra.mxu0 0
  %2654 = vmatprep.subr.bf16.mxu0 0
  %2655 = vmatpush1.bf16.msra.mxu0 0
  %2656 = vmatprep.subr.bf16.mxu0 0
  %2657 = vmatpush1.bf16.msra.mxu0 0
  %2658 = vmatprep.subr.bf16.mxu0 0
  %2659 = vmatpush1.bf16.msra.mxu0 0
  %2660 = vmatprep.subr.bf16.mxu0 0
  %2661 = vmatpush1.bf16.msra.mxu0 0
  %2662 = vmatprep.subr.bf16.mxu0 0
  %2663 = vmatpush1.bf16.msra.mxu0 0
  %2664 = vmatprep.subr.bf16.mxu0 0
  %2665 = vmatpush1.bf16.msra.mxu0 0
  %2666 = vmatprep.mubr.bf16.mxu0 0
  %2667 = vmatmul.mubr.bf16.gmra.mrb[0].mxu0 %v2608
  %v2668 = vpop.f32.mrb[0].mxu0
  %v2669 = vadd.f32 0.0, %v2668
  %v2670 = vpop.f32.mrb[0].mxu0
  %v2671 = vpop.f32.mrb[0].mxu0
  %v2672 = vadd.f32 0.0, %v2671
  %v2673 = vpop.f32.mrb[0].mxu0
  %2674 = vmatprep.mubr.bf16.mxu0 0
  %2675 = vmatmul.mubr.bf16.gmra.mrb[0].mxu0 %v2611
  %v2676 = vpop.f32.mrb[0].mxu0
  %v2677 = vadd.f32 0.0, %v2676
  %v2678 = vpop.f32.mrb[0].mxu0
  %v2679 = vpop.f32.mrb[0].mxu0
  %v2680 = vadd.f32 0.0, %v2679
  %v2681 = vpop.f32.mrb[0].mxu0
  %2682 = vmatprep.mubr.bf16.mxu0 0
  %2683 = vmatmul.mubr.bf16.gmra.mrb[0].mxu0 %v2614
  %v2684 = vpop.f32.mrb[0].mxu0
  %v2685 = vadd.f32 0.0, %v2684
  %v2686 = vpop.f32.mrb[0].mxu0
  %v2687 = vpop.f32.mrb[0].mxu0
  %v2688 = vadd.f32 0.0, %v2687
  %v2689 = vpop.f32.mrb[0].mxu0
  %2690 = vmatprep.mubr.bf16.mxu0 0
  %2691 = vmatmul.mubr.bf16.gmra.mrb[0].mxu0 %v2617
  %v2692 = vpop.f32.mrb[0].mxu0
  %v2693 = vadd.f32 0.0, %v2692
  %v2694 = vpop.f32.mrb[0].mxu0
  %v2695 = vpop.f32.mrb[0].mxu0
  %v2696 = vadd.f32 0.0, %v2695
  %v2697 = vpop.f32.mrb[0].mxu0
  %2698 = vmatprep.mubr.bf16.mxu0 0
  %2699 = vmatmul.mubr.bf16.gmra.mrb[0].mxu0 %v2620
  %v2700 = vpop.f32.mrb[0].mxu0
  %v2701 = vadd.f32 0.0, %v2700
  %v2702 = vpop.f32.mrb[0].mxu0
  %v2703 = vpop.f32.mrb[0].mxu0
  %v2704 = vadd.f32 0.0, %v2703
  %v2705 = vpop.f32.mrb[0].mxu0
  %2706 = vmatprep.mubr.bf16.mxu0 0
  %2707 = vmatmul.mubr.bf16.gmra.mrb[0].mxu0 %v2623
  %v2708 = vpop.f32.mrb[0].mxu0
  %v2709 = vadd.f32 0.0, %v2708
  %v2710 = vpop.f32.mrb[0].mxu0
  %v2711 = vpop.f32.mrb[0].mxu0
  %v2712 = vadd.f32 0.0, %v2711
  %v2713 = vpop.f32.mrb[0].mxu0
  %2714 = vmatprep.mubr.bf16.mxu0 0
  %2715 = vmatmul.mubr.bf16.gmra.mrb[0].mxu0 %v2626
  %v2716 = vpop.f32.mrb[0].mxu0
  %v2717 = vadd.f32 0.0, %v2716
  %v2718 = vpop.f32.mrb[0].mxu0
  %v2719 = vpop.f32.mrb[0].mxu0
  %v2720 = vadd.f32 0.0, %v2719
  %v2721 = vpop.f32.mrb[0].mxu0
  %2722 = vmatprep.mubr.bf16.mxu0 0
  %2723 = vmatmul.mubr.bf16.gmra.mrb[0].mxu0 %v2629
  %v2724 = vpop.f32.mrb[0].mxu0
  %v2725 = vadd.f32 0.0, %v2724
  %v2726 = vpop.f32.mrb[0].mxu0
  %v2727 = vpop.f32.mrb[0].mxu0
  %v2728 = vadd.f32 0.0, %v2727
  %v2729 = vpop.f32.mrb[0].mxu0
  %2730 = vdwg.mxu0
  %v2731 = vadd.f32 %v2565, %v2669
  %v2732 = vadd.f32 %v2566, %v2672
  %v2733 = vadd.f32 %v2567, %v2677
  %v2734 = vadd.f32 %v2568, %v2680
  %v2735 = vadd.f32 %v2569, %v2685
  %v2736 = vadd.f32 %v2570, %v2688
  %v2737 = vadd.f32 %v2571, %v2693
  %v2738 = vadd.f32 %v2572, %v2696
  %v2739 = vadd.f32 %v2573, %v2701
  %v2740 = vadd.f32 %v2574, %v2704
  %v2741 = vadd.f32 %v2575, %v2709
  %v2742 = vadd.f32 %v2576, %v2712
  %v2743 = vadd.f32 %v2577, %v2717
  %v2744 = vadd.f32 %v2578, %v2720
  %v2745 = vadd.f32 %v2579, %v2725
  %v2746 = vadd.f32 %v2580, %v2728
  %s2747 = scalar_lea.vmem [#allocation2], 32
  %v2748 = vld [vmem:[%s2747] sm:$0xff]
  %v2749 = vld [vmem:[%s2747 + $0x10] sm:$0xff]
  %v2750 = vld [vmem:[%s2747 + $0x20] sm:$0xff]
  %v2751 = vld [vmem:[%s2747 + $0x30] sm:$0xff]
  %v2752 = vld [vmem:[%s2747 + $0x40] sm:$0xff]
  %v2753 = vld [vmem:[%s2747 + $0x50] sm:$0xff]
  %v2754 = vld [vmem:[%s2747 + $0x60] sm:$0xff]
  %v2755 = vld [vmem:[%s2747 + $0x70] sm:$0xff]
  %v2756 = vld [vmem:[%s2747 + $0xa0] sm:$0xff]
  %v2757 = vld [vmem:[%s2747 + $0xb0] sm:$0xff]
  %v2758 = vld [vmem:[%s2747 + $0xc0] sm:$0xff]
  %v2759 = vld [vmem:[%s2747 + $0xd0] sm:$0xff]
  %v2760 = vld [vmem:[%s2747 + $0xe0] sm:$0xff]
  %v2761 = vld [vmem:[%s2747 + $0xf0] sm:$0xff]
  %v2762 = vld [vmem:[%s2747 + $0x100] sm:$0xff]
  %v2763 = vld [vmem:[%s2747 + $0x110] sm:$0xff]
  %v2764 = vpack.c.bf16 %v2749, %v2748
  %v2765 = vpack.c.bf16 %v2751, %v2750
  %v2766 = vpack.c.bf16 %v2753, %v2752
  %v2767 = vpack.c.bf16 %v2755, %v2754
  %v2768 = vpack.c.bf16 %v2757, %v2756
  %v2769 = vpack.c.bf16 %v2759, %v2758
  %v2770 = vpack.c.bf16 %v2761, %v2760
  %v2771 = vpack.c.bf16 %v2763, %v2762
  %s2772 = scalar_lea.vmem %s2, 24
  %v2773 = vld [vmem:[%s2772] sm:$0xf]
  %v2775 = vsel %vm1714, %v2764, 0
  %v2778 = vsel %vm1714, %v2765, 0
  %v2781 = vsel %vm1714, %v2766, 0
  %v2784 = vsel %vm1714, %v2767, 0
  %v2787 = vsel %vm1714, %v2768, 0
  %v2790 = vsel %vm1714, %v2769, 0
  %v2793 = vsel %vm1714, %v2770, 0
  %v2796 = vsel %vm1714, %v2771, 0
  %v2799 = vsel %vm1858, %v2773, 0
  %2801 = vmatprep.subr.bf16.mxu0 0
  %2802 = vmatpush1.bf16.msra.mxu0 %v2799
  %2803 = vmatprep.subr.bf16.mxu0 0
  %2804 = vmatpush1.bf16.msra.mxu0 0
  %2805 = vmatprep.subr.bf16.mxu0 0
  %2806 = vmatpush1.bf16.msra.mxu0 0
  %2807 = vmatprep.subr.bf16.mxu0 0
  %2808 = vmatpush1.bf16.msra.mxu0 0
  %2809 = vmatprep.subr.bf16.mxu0 0
  %2810 = vmatpush1.bf16.msra.mxu0 0
  %2811 = vmatprep.subr.bf16.mxu0 0
  %2812 = vmatpush1.bf16.msra.mxu0 0
  %2813 = vmatprep.subr.bf16.mxu0 0
  %2814 = vmatpush1.bf16.msra.mxu0 0
  %2815 = vmatprep.subr.bf16.mxu0 0
  %2816 = vmatpush1.bf16.msra.mxu0 0
  %2817 = vmatprep.subr.bf16.mxu0 0
  %2818 = vmatpush1.bf16.msra.mxu0 0
  %2819 = vmatprep.subr.bf16.mxu0 0
  %2820 = vmatpush1.bf16.msra.mxu0 0
  %2821 = vmatprep.subr.bf16.mxu0 0
  %2822 = vmatpush1.bf16.msra.mxu0 0
  %2823 = vmatprep.subr.bf16.mxu0 0
  %2824 = vmatpush1.bf16.msra.mxu0 0
  %2825 = vmatprep.subr.bf16.mxu0 0
  %2826 = vmatpush1.bf16.msra.mxu0 0
  %2827 = vmatprep.subr.bf16.mxu0 0
  %2828 = vmatpush1.bf16.msra.mxu0 0
  %2829 = vmatprep.subr.bf16.mxu0 0
  %2830 = vmatpush1.bf16.msra.mxu0 0
  %2831 = vmatprep.subr.bf16.mxu0 0
  %2832 = vmatpush1.bf16.msra.mxu0 0
  %2833 = vmatprep.mubr.bf16.mxu0 0
  %2834 = vmatmul.mubr.bf16.gmra.mrb[0].mxu0 %v2775
  %v2835 = vpop.f32.mrb[0].mxu0
  %v2836 = vadd.f32 0.0, %v2835
  %v2837 = vpop.f32.mrb[0].mxu0
  %v2838 = vpop.f32.mrb[0].mxu0
  %v2839 = vadd.f32 0.0, %v2838
  %v2840 = vpop.f32.mrb[0].mxu0
  %2841 = vmatprep.mubr.bf16.mxu0 0
  %2842 = vmatmul.mubr.bf16.gmra.mrb[0].mxu0 %v2778
  %v2843 = vpop.f32.mrb[0].mxu0
  %v2844 = vadd.f32 0.0, %v2843
  %v2845 = vpop.f32.mrb[0].mxu0
  %v2846 = vpop.f32.mrb[0].mxu0
  %v2847 = vadd.f32 0.0, %v2846
  %v2848 = vpop.f32.mrb[0].mxu0
  %2849 = vmatprep.mubr.bf16.mxu0 0
  %2850 = vmatmul.mubr.bf16.gmra.mrb[0].mxu0 %v2781
  %v2851 = vpop.f32.mrb[0].mxu0
  %v2852 = vadd.f32 0.0, %v2851
  %v2853 = vpop.f32.mrb[0].mxu0
  %v2854 = vpop.f32.mrb[0].mxu0
  %v2855 = vadd.f32 0.0, %v2854
  %v2856 = vpop.f32.mrb[0].mxu0
  %2857 = vmatprep.mubr.bf16.mxu0 0
  %2858 = vmatmul.mubr.bf16.gmra.mrb[0].mxu0 %v2784
  %v2859 = vpop.f32.mrb[0].mxu0
  %v2860 = vadd.f32 0.0, %v2859
  %v2861 = vpop.f32.mrb[0].mxu0
  %v2862 = vpop.f32.mrb[0].mxu0
  %v2863 = vadd.f32 0.0, %v2862
  %v2864 = vpop.f32.mrb[0].mxu0
  %2865 = vmatprep.mubr.bf16.mxu0 0
  %2866 = vmatmul.mubr.bf16.gmra.mrb[0].mxu0 %v2787
  %v2867 = vpop.f32.mrb[0].mxu0
  %v2868 = vadd.f32 0.0, %v2867
  %v2869 = vpop.f32.mrb[0].mxu0
  %v2870 = vpop.f32.mrb[0].mxu0
  %v2871 = vadd.f32 0.0, %v2870
  %v2872 = vpop.f32.mrb[0].mxu0
  %2873 = vmatprep.mubr.bf16.mxu0 0
  %2874 = vmatmul.mubr.bf16.gmra.mrb[0].mxu0 %v2790
  %v2875 = vpop.f32.mrb[0].mxu0
  %v2876 = vadd.f32 0.0, %v2875
  %v2877 = vpop.f32.mrb[0].mxu0
  %v2878 = vpop.f32.mrb[0].mxu0
  %v2879 = vadd.f32 0.0, %v2878
  %v2880 = vpop.f32.mrb[0].mxu0
  %2881 = vmatprep.mubr.bf16.mxu0 0
  %2882 = vmatmul.mubr.bf16.gmra.mrb[0].mxu0 %v2793
  %v2883 = vpop.f32.mrb[0].mxu0
  %v2884 = vadd.f32 0.0, %v2883
  %v2885 = vpop.f32.mrb[0].mxu0
  %v2886 = vpop.f32.mrb[0].mxu0
  %v2887 = vadd.f32 0.0, %v2886
  %v2888 = vpop.f32.mrb[0].mxu0
  %2889 = vmatprep.mubr.bf16.mxu0 0
  %2890 = vmatmul.mubr.bf16.gmra.mrb[0].mxu0 %v2796
  %v2891 = vpop.f32.mrb[0].mxu0
  %v2892 = vadd.f32 0.0, %v2891
  %v2893 = vpop.f32.mrb[0].mxu0
  %v2894 = vpop.f32.mrb[0].mxu0
  %v2895 = vadd.f32 0.0, %v2894
  %v2896 = vpop.f32.mrb[0].mxu0
  %2897 = vdwg.mxu0
  %v2898 = vadd.f32 %v2731, %v2836
  %v2899 = vadd.f32 %v2732, %v2839
  %v2900 = vadd.f32 %v2733, %v2844
  %v2901 = vadd.f32 %v2734, %v2847
  %v2902 = vadd.f32 %v2735, %v2852
  %v2903 = vadd.f32 %v2736, %v2855
  %v2904 = vadd.f32 %v2737, %v2860
  %v2905 = vadd.f32 %v2738, %v2863
  %v2906 = vadd.f32 %v2739, %v2868
  %v2907 = vadd.f32 %v2740, %v2871
  %v2908 = vadd.f32 %v2741, %v2876
  %v2909 = vadd.f32 %v2742, %v2879
  %v2910 = vadd.f32 %v2743, %v2884
  %v2911 = vadd.f32 %v2744, %v2887
  %v2912 = vadd.f32 %v2745, %v2892
  %v2913 = vadd.f32 %v2746, %v2895
  %v2914 = vld [vmem:[%s2747 + $0x1] sm:$0xff]
  %v2915 = vld [vmem:[%s2747 + $0x11] sm:$0xff]
  %v2916 = vld [vmem:[%s2747 + $0x21] sm:$0xff]
  %v2917 = vld [vmem:[%s2747 + $0x31] sm:$0xff]
  %v2918 = vld [vmem:[%s2747 + $0x41] sm:$0xff]
  %v2919 = vld [vmem:[%s2747 + $0x51] sm:$0xff]
  %v2920 = vld [vmem:[%s2747 + $0x61] sm:$0xff]
  %v2921 = vld [vmem:[%s2747 + $0x71] sm:$0xff]
  %v2922 = vld [vmem:[%s2747 + $0xa1] sm:$0xff]
  %v2923 = vld [vmem:[%s2747 + $0xb1] sm:$0xff]
  %v2924 = vld [vmem:[%s2747 + $0xc1] sm:$0xff]
  %v2925 = vld [vmem:[%s2747 + $0xd1] sm:$0xff]
  %v2926 = vld [vmem:[%s2747 + $0xe1] sm:$0xff]
  %v2927 = vld [vmem:[%s2747 + $0xf1] sm:$0xff]
  %v2928 = vld [vmem:[%s2747 + $0x101] sm:$0xff]
  %v2929 = vld [vmem:[%s2747 + $0x111] sm:$0xff]
  %v2930 = vpack.c.bf16 %v2915, %v2914
  %v2931 = vpack.c.bf16 %v2917, %v2916
  %v2932 = vpack.c.bf16 %v2919, %v2918
  %v2933 = vpack.c.bf16 %v2921, %v2920
  %v2934 = vpack.c.bf16 %v2923, %v2922
  %v2935 = vpack.c.bf16 %v2925, %v2924
  %v2936 = vpack.c.bf16 %v2927, %v2926
  %v2937 = vpack.c.bf16 %v2929, %v2928
  %s2938 = scalar_lea.vmem %s2, 28
  %v2939 = vld [vmem:[%s2938] sm:$0xf]
  %v2941 = vsel %vm1714, %v2930, 0
  %v2944 = vsel %vm1714, %v2931, 0
  %v2947 = vsel %vm1714, %v2932, 0
  %v2950 = vsel %vm1714, %v2933, 0
  %v2953 = vsel %vm1714, %v2934, 0
  %v2956 = vsel %vm1714, %v2935, 0
  %v2959 = vsel %vm1714, %v2936, 0
  %v2962 = vsel %vm1714, %v2937, 0
  %v2965 = vsel %vm1858, %v2939, 0
  %2967 = vmatprep.subr.bf16.mxu0 0
  %2968 = vmatpush1.bf16.msra.mxu0 %v2965
  %2969 = vmatprep.subr.bf16.mxu0 0
  %2970 = vmatpush1.bf16.msra.mxu0 0
  %2971 = vmatprep.subr.bf16.mxu0 0
  %2972 = vmatpush1.bf16.msra.mxu0 0
  %2973 = vmatprep.subr.bf16.mxu0 0
  %2974 = vmatpush1.bf16.msra.mxu0 0
  %2975 = vmatprep.subr.bf16.mxu0 0
  %2976 = vmatpush1.bf16.msra.mxu0 0
  %2977 = vmatprep.subr.bf16.mxu0 0
  %2978 = vmatpush1.bf16.msra.mxu0 0
  %2979 = vmatprep.subr.bf16.mxu0 0
  %2980 = vmatpush1.bf16.msra.mxu0 0
  %2981 = vmatprep.subr.bf16.mxu0 0
  %2982 = vmatpush1.bf16.msra.mxu0 0
  %2983 = vmatprep.subr.bf16.mxu0 0
  %2984 = vmatpush1.bf16.msra.mxu0 0
  %2985 = vmatprep.subr.bf16.mxu0 0
  %2986 = vmatpush1.bf16.msra.mxu0 0
  %2987 = vmatprep.subr.bf16.mxu0 0
  %2988 = vmatpush1.bf16.msra.mxu0 0
  %2989 = vmatprep.subr.bf16.mxu0 0
  %2990 = vmatpush1.bf16.msra.mxu0 0
  %2991 = vmatprep.subr.bf16.mxu0 0
  %2992 = vmatpush1.bf16.msra.mxu0 0
  %2993 = vmatprep.subr.bf16.mxu0 0
  %2994 = vmatpush1.bf16.msra.mxu0 0
  %2995 = vmatprep.subr.bf16.mxu0 0
  %2996 = vmatpush1.bf16.msra.mxu0 0
  %2997 = vmatprep.subr.bf16.mxu0 0
  %2998 = vmatpush1.bf16.msra.mxu0 0
  %2999 = vmatprep.mubr.bf16.mxu0 0
  %3000 = vmatmul.mubr.bf16.gmra.mrb[0].mxu0 %v2941
  %v3001 = vpop.f32.mrb[0].mxu0
  %v3002 = vadd.f32 0.0, %v3001
  %v3003 = vpop.f32.mrb[0].mxu0
  %v3004 = vpop.f32.mrb[0].mxu0
  %v3005 = vadd.f32 0.0, %v3004
  %v3006 = vpop.f32.mrb[0].mxu0
  %3007 = vmatprep.mubr.bf16.mxu0 0
  %3008 = vmatmul.mubr.bf16.gmra.mrb[0].mxu0 %v2944
  %v3009 = vpop.f32.mrb[0].mxu0
  %v3010 = vadd.f32 0.0, %v3009
  %v3011 = vpop.f32.mrb[0].mxu0
  %v3012 = vpop.f32.mrb[0].mxu0
  %v3013 = vadd.f32 0.0, %v3012
  %v3014 = vpop.f32.mrb[0].mxu0
  %3015 = vmatprep.mubr.bf16.mxu0 0
  %3016 = vmatmul.mubr.bf16.gmra.mrb[0].mxu0 %v2947
  %v3017 = vpop.f32.mrb[0].mxu0
  %v3018 = vadd.f32 0.0, %v3017
  %v3019 = vpop.f32.mrb[0].mxu0
  %v3020 = vpop.f32.mrb[0].mxu0
  %v3021 = vadd.f32 0.0, %v3020
  %v3022 = vpop.f32.mrb[0].mxu0
  %3023 = vmatprep.mubr.bf16.mxu0 0
  %3024 = vmatmul.mubr.bf16.gmra.mrb[0].mxu0 %v2950
  %v3025 = vpop.f32.mrb[0].mxu0
  %v3026 = vadd.f32 0.0, %v3025
  %v3027 = vpop.f32.mrb[0].mxu0
  %v3028 = vpop.f32.mrb[0].mxu0
  %v3029 = vadd.f32 0.0, %v3028
  %v3030 = vpop.f32.mrb[0].mxu0
  %3031 = vmatprep.mubr.bf16.mxu0 0
  %3032 = vmatmul.mubr.bf16.gmra.mrb[0].mxu0 %v2953
  %v3033 = vpop.f32.mrb[0].mxu0
  %v3034 = vadd.f32 0.0, %v3033
  %v3035 = vpop.f32.mrb[0].mxu0
  %v3036 = vpop.f32.mrb[0].mxu0
  %v3037 = vadd.f32 0.0, %v3036
  %v3038 = vpop.f32.mrb[0].mxu0
  %3039 = vmatprep.mubr.bf16.mxu0 0
  %3040 = vmatmul.mubr.bf16.gmra.mrb[0].mxu0 %v2956
  %v3041 = vpop.f32.mrb[0].mxu0
  %v3042 = vadd.f32 0.0, %v3041
  %v3043 = vpop.f32.mrb[0].mxu0
  %v3044 = vpop.f32.mrb[0].mxu0
  %v3045 = vadd.f32 0.0, %v3044
  %v3046 = vpop.f32.mrb[0].mxu0
  %3047 = vmatprep.mubr.bf16.mxu0 0
  %3048 = vmatmul.mubr.bf16.gmra.mrb[0].mxu0 %v2959
  %v3049 = vpop.f32.mrb[0].mxu0
  %v3050 = vadd.f32 0.0, %v3049
  %v3051 = vpop.f32.mrb[0].mxu0
  %v3052 = vpop.f32.mrb[0].mxu0
  %v3053 = vadd.f32 0.0, %v3052
  %v3054 = vpop.f32.mrb[0].mxu0
  %3055 = vmatprep.mubr.bf16.mxu0 0
  %3056 = vmatmul.mubr.bf16.gmra.mrb[0].mxu0 %v2962
  %v3057 = vpop.f32.mrb[0].mxu0
  %v3058 = vadd.f32 0.0, %v3057
  %v3059 = vpop.f32.mrb[0].mxu0
  %v3060 = vpop.f32.mrb[0].mxu0
  %v3061 = vadd.f32 0.0, %v3060
  %v3062 = vpop.f32.mrb[0].mxu0
  %3063 = vdwg.mxu0
  %v3064 = vadd.f32 %v2898, %v3002
  %v3065 = vadd.f32 %v2899, %v3005
  %v3066 = vadd.f32 %v2900, %v3010
  %v3067 = vadd.f32 %v2901, %v3013
  %v3068 = vadd.f32 %v2902, %v3018
  %v3069 = vadd.f32 %v2903, %v3021
  %v3070 = vadd.f32 %v2904, %v3026
  %v3071 = vadd.f32 %v2905, %v3029
  %v3072 = vadd.f32 %v2906, %v3034
  %v3073 = vadd.f32 %v2907, %v3037
  %v3074 = vadd.f32 %v2908, %v3042
  %v3075 = vadd.f32 %v2909, %v3045
  %v3076 = vadd.f32 %v2910, %v3050
  %v3077 = vadd.f32 %v2911, %v3053
  %v3078 = vadd.f32 %v2912, %v3058
  %v3079 = vadd.f32 %v2913, %v3061
  %v3080 = vld [vmem:[%s2747 + $0x2] sm:$0xff]
  %v3081 = vld [vmem:[%s2747 + $0x12] sm:$0xff]
  %v3082 = vld [vmem:[%s2747 + $0x22] sm:$0xff]
  %v3083 = vld [vmem:[%s2747 + $0x32] sm:$0xff]
  %v3084 = vld [vmem:[%s2747 + $0x42] sm:$0xff]
  %v3085 = vld [vmem:[%s2747 + $0x52] sm:$0xff]
  %v3086 = vld [vmem:[%s2747 + $0x62] sm:$0xff]
  %v3087 = vld [vmem:[%s2747 + $0x72] sm:$0xff]
  %v3088 = vld [vmem:[%s2747 + $0xa2] sm:$0xff]
  %v3089 = vld [vmem:[%s2747 + $0xb2] sm:$0xff]
  %v3090 = vld [vmem:[%s2747 + $0xc2] sm:$0xff]
  %v3091 = vld [vmem:[%s2747 + $0xd2] sm:$0xff]
  %v3092 = vld [vmem:[%s2747 + $0xe2] sm:$0xff]
  %v3093 = vld [vmem:[%s2747 + $0xf2] sm:$0xff]
  %v3094 = vld [vmem:[%s2747 + $0x102] sm:$0xff]
  %v3095 = vld [vmem:[%s2747 + $0x112] sm:$0xff]
  %v3096 = vpack.c.bf16 %v3081, %v3080
  %v3097 = vpack.c.bf16 %v3083, %v3082
  %v3098 = vpack.c.bf16 %v3085, %v3084
  %v3099 = vpack.c.bf16 %v3087, %v3086
  %v3100 = vpack.c.bf16 %v3089, %v3088
  %v3101 = vpack.c.bf16 %v3091, %v3090
  %v3102 = vpack.c.bf16 %v3093, %v3092
  %v3103 = vpack.c.bf16 %v3095, %v3094
  %s3104 = scalar_lea.vmem %s2, 32
  %v3105 = vld [vmem:[%s3104] sm:$0xf]
  %v3107 = vsel %vm1714, %v3096, 0
  %v3110 = vsel %vm1714, %v3097, 0
  %v3113 = vsel %vm1714, %v3098, 0
  %v3116 = vsel %vm1714, %v3099, 0
  %v3119 = vsel %vm1714, %v3100, 0
  %v3122 = vsel %vm1714, %v3101, 0
  %v3125 = vsel %vm1714, %v3102, 0
  %v3128 = vsel %vm1714, %v3103, 0
  %v3131 = vsel %vm1858, %v3105, 0
  %3133 = vmatprep.subr.bf16.mxu0 0
  %3134 = vmatpush1.bf16.msra.mxu0 %v3131
  %3135 = vmatprep.subr.bf16.mxu0 0
  %3136 = vmatpush1.bf16.msra.mxu0 0
  %3137 = vmatprep.subr.bf16.mxu0 0
  %3138 = vmatpush1.bf16.msra.mxu0 0
  %3139 = vmatprep.subr.bf16.mxu0 0
  %3140 = vmatpush1.bf16.msra.mxu0 0
  %3141 = vmatprep.subr.bf16.mxu0 0
  %3142 = vmatpush1.bf16.msra.mxu0 0
  %3143 = vmatprep.subr.bf16.mxu0 0
  %3144 = vmatpush1.bf16.msra.mxu0 0
  %3145 = vmatprep.subr.bf16.mxu0 0
  %3146 = vmatpush1.bf16.msra.mxu0 0
  %3147 = vmatprep.subr.bf16.mxu0 0
  %3148 = vmatpush1.bf16.msra.mxu0 0
  %3149 = vmatprep.subr.bf16.mxu0 0
  %3150 = vmatpush1.bf16.msra.mxu0 0
  %3151 = vmatprep.subr.bf16.mxu0 0
  %3152 = vmatpush1.bf16.msra.mxu0 0
  %3153 = vmatprep.subr.bf16.mxu0 0
  %3154 = vmatpush1.bf16.msra.mxu0 0
  %3155 = vmatprep.subr.bf16.mxu0 0
  %3156 = vmatpush1.bf16.msra.mxu0 0
  %3157 = vmatprep.subr.bf16.mxu0 0
  %3158 = vmatpush1.bf16.msra.mxu0 0
  %3159 = vmatprep.subr.bf16.mxu0 0
  %3160 = vmatpush1.bf16.msra.mxu0 0
  %3161 = vmatprep.subr.bf16.mxu0 0
  %3162 = vmatpush1.bf16.msra.mxu0 0
  %3163 = vmatprep.subr.bf16.mxu0 0
  %3164 = vmatpush1.bf16.msra.mxu0 0
  %3165 = vmatprep.mubr.bf16.mxu0 0
  %3166 = vmatmul.mubr.bf16.gmra.mrb[0].mxu0 %v3107
  %v3167 = vpop.f32.mrb[0].mxu0
  %v3168 = vadd.f32 0.0, %v3167
  %v3169 = vpop.f32.mrb[0].mxu0
  %v3170 = vpop.f32.mrb[0].mxu0
  %v3171 = vadd.f32 0.0, %v3170
  %v3172 = vpop.f32.mrb[0].mxu0
  %3173 = vmatprep.mubr.bf16.mxu0 0
  %3174 = vmatmul.mubr.bf16.gmra.mrb[0].mxu0 %v3110
  %v3175 = vpop.f32.mrb[0].mxu0
  %v3176 = vadd.f32 0.0, %v3175
  %v3177 = vpop.f32.mrb[0].mxu0
  %v3178 = vpop.f32.mrb[0].mxu0
  %v3179 = vadd.f32 0.0, %v3178
  %v3180 = vpop.f32.mrb[0].mxu0
  %3181 = vmatprep.mubr.bf16.mxu0 0
  %3182 = vmatmul.mubr.bf16.gmra.mrb[0].mxu0 %v3113
  %v3183 = vpop.f32.mrb[0].mxu0
  %v3184 = vadd.f32 0.0, %v3183
  %v3185 = vpop.f32.mrb[0].mxu0
  %v3186 = vpop.f32.mrb[0].mxu0
  %v3187 = vadd.f32 0.0, %v3186
  %v3188 = vpop.f32.mrb[0].mxu0
  %3189 = vmatprep.mubr.bf16.mxu0 0
  %3190 = vmatmul.mubr.bf16.gmra.mrb[0].mxu0 %v3116
  %v3191 = vpop.f32.mrb[0].mxu0
  %v3192 = vadd.f32 0.0, %v3191
  %v3193 = vpop.f32.mrb[0].mxu0
  %v3194 = vpop.f32.mrb[0].mxu0
  %v3195 = vadd.f32 0.0, %v3194
  %v3196 = vpop.f32.mrb[0].mxu0
  %3197 = vmatprep.mubr.bf16.mxu0 0
  %3198 = vmatmul.mubr.bf16.gmra.mrb[0].mxu0 %v3119
  %v3199 = vpop.f32.mrb[0].mxu0
  %v3200 = vadd.f32 0.0, %v3199
  %v3201 = vpop.f32.mrb[0].mxu0
  %v3202 = vpop.f32.mrb[0].mxu0
  %v3203 = vadd.f32 0.0, %v3202
  %v3204 = vpop.f32.mrb[0].mxu0
  %3205 = vmatprep.mubr.bf16.mxu0 0
  %3206 = vmatmul.mubr.bf16.gmra.mrb[0].mxu0 %v3122
  %v3207 = vpop.f32.mrb[0].mxu0
  %v3208 = vadd.f32 0.0, %v3207
  %v3209 = vpop.f32.mrb[0].mxu0
  %v3210 = vpop.f32.mrb[0].mxu0
  %v3211 = vadd.f32 0.0, %v3210
  %v3212 = vpop.f32.mrb[0].mxu0
  %3213 = vmatprep.mubr.bf16.mxu0 0
  %3214 = vmatmul.mubr.bf16.gmra.mrb[0].mxu0 %v3125
  %v3215 = vpop.f32.mrb[0].mxu0
  %v3216 = vadd.f32 0.0, %v3215
  %v3217 = vpop.f32.mrb[0].mxu0
  %v3218 = vpop.f32.mrb[0].mxu0
  %v3219 = vadd.f32 0.0, %v3218
  %v3220 = vpop.f32.mrb[0].mxu0
  %3221 = vmatprep.mubr.bf16.mxu0 0
  %3222 = vmatmul.mubr.bf16.gmra.mrb[0].mxu0 %v3128
  %v3223 = vpop.f32.mrb[0].mxu0
  %v3224 = vadd.f32 0.0, %v3223
  %v3225 = vpop.f32.mrb[0].mxu0
  %v3226 = vpop.f32.mrb[0].mxu0
  %v3227 = vadd.f32 0.0, %v3226
  %v3228 = vpop.f32.mrb[0].mxu0
  %3229 = vdwg.mxu0
  %v3230 = vadd.f32 %v3064, %v3168
  %v3231 = vadd.f32 %v3065, %v3171
  %v3232 = vadd.f32 %v3066, %v3176
  %v3233 = vadd.f32 %v3067, %v3179
  %v3234 = vadd.f32 %v3068, %v3184
  %v3235 = vadd.f32 %v3069, %v3187
  %v3236 = vadd.f32 %v3070, %v3192
  %v3237 = vadd.f32 %v3071, %v3195
  %v3238 = vadd.f32 %v3072, %v3200
  %v3239 = vadd.f32 %v3073, %v3203
  %v3240 = vadd.f32 %v3074, %v3208
  %v3241 = vadd.f32 %v3075, %v3211
  %v3242 = vadd.f32 %v3076, %v3216
  %v3243 = vadd.f32 %v3077, %v3219
  %v3244 = vadd.f32 %v3078, %v3224
  %v3245 = vadd.f32 %v3079, %v3227
  %3246 = vmatprep.subr.mxu0 0.0
  %3247 = vmatpush1.msra.mxu0 %v3230
  %3248 = vmatprep.subr.mxu0 0.0
  %3249 = vmatpush1.msra.mxu0 %v3231
  %3250 = vmatprep.subr.mxu0 0.0
  %3251 = vmatpush1.msra.mxu0 %v3232
  %3252 = vmatprep.subr.mxu0 0.0
  %3253 = vmatpush1.msra.mxu0 %v3233
  %3254 = vmatprep.subr.mxu0 0.0
  %3255 = vmatpush1.msra.mxu0 %v3234
  %3256 = vmatprep.subr.mxu0 0.0
  %3257 = vmatpush1.msra.mxu0 %v3235
  %3258 = vmatprep.subr.mxu0 0.0
  %3259 = vmatpush1.msra.mxu0 %v3236
  %3260 = vmatprep.subr.mxu0 0.0
  %3261 = vmatpush1.msra.mxu0 %v3237
  %3262 = vmatprep.subr.mxu0 0.0
  %3263 = vmatpush1.msra.mxu0 %v3238
  %3264 = vmatprep.subr.mxu0 0.0
  %3265 = vmatpush1.msra.mxu0 %v3239
  %3266 = vmatprep.subr.mxu0 0.0
  %3267 = vmatpush1.msra.mxu0 %v3240
  %3268 = vmatprep.subr.mxu0 0.0
  %3269 = vmatpush1.msra.mxu0 %v3241
  %3270 = vmatprep.subr.mxu0 0.0
  %3271 = vmatpush1.msra.mxu0 %v3242
  %3272 = vmatprep.subr.mxu0 0.0
  %3273 = vmatpush1.msra.mxu0 %v3243
  %3274 = vmatprep.subr.mxu0 0.0
  %3275 = vmatpush1.msra.mxu0 %v3244
  %3276 = vmatprep.subr.mxu0 0.0
  %3277 = vmatpush1.msra.mxu0 %v3245
  %3278 = vmatprep.subr.mxu0 0.0
  %3279 = vmatpush1.msra.mxu0 0.0
  %3280 = vmatprep.subr.mxu0 0.0
  %3281 = vmatpush1.msra.mxu0 0.0
  %3282 = vmatprep.subr.mxu0 0.0
  %3283 = vmatpush1.msra.mxu0 0.0
  %3284 = vmatprep.subr.mxu0 0.0
  %3285 = vmatpush1.msra.mxu0 0.0
  %3286 = vmatprep.subr.mxu0 0.0
  %3287 = vmatpush1.msra.mxu0 0.0
  %3288 = vmatprep.subr.mxu0 0.0
  %3289 = vmatpush1.msra.mxu0 0.0
  %3290 = vmatprep.subr.mxu0 0.0
  %3291 = vmatpush1.msra.mxu0 0.0
  %3292 = vmatprep.subr.mxu0 0.0
  %3293 = vmatpush1.msra.mxu0 0.0
  %3294 = vmatprep.subr.mxu0 0.0
  %3295 = vmatpush1.msra.mxu0 0.0
  %3296 = vmatprep.subr.mxu0 0.0
  %3297 = vmatpush1.msra.mxu0 0.0
  %3298 = vmatprep.subr.mxu0 0.0
  %3299 = vmatpush1.msra.mxu0 0.0
  %3300 = vmatprep.subr.mxu0 0.0
  %3301 = vmatpush1.msra.mxu0 0.0
  %3302 = vmatprep.subr.mxu0 0.0
  %3303 = vmatpush1.msra.mxu0 0.0
  %3304 = vmatprep.subr.mxu0 0.0
  %3305 = vmatpush1.msra.mxu0 0.0
  %3306 = vmatprep.subr.mxu0 0.0
  %3307 = vmatpush1.msra.mxu0 0.0
  %3308 = vmatprep.subr.mxu0 0.0
  %3309 = vmatpush1.msra.mxu0 0.0
  %3310 = vmatprep.mubr.f32.mxu0 0.0
  %3311 = vmatmul.mubr.f32.gmra.mrb[0].mxu0 1.0
  %v3312 = vpop.f32.mrb[0].mxu0
  %v3313 = vadd.f32 0.0, %v3312
  %v3314 = vpop.f32.mrb[0].mxu0
  %3315 = vdwg.mxu0
  %v3316 = vmul.f32 %v3230, %v3230
  %v3317 = vmul.f32 %v3231, %v3231
  %v3318 = vmul.f32 %v3232, %v3232
  %v3319 = vmul.f32 %v3233, %v3233
  %v3320 = vmul.f32 %v3234, %v3234
  %v3321 = vmul.f32 %v3235, %v3235
  %v3322 = vmul.f32 %v3236, %v3236
  %v3323 = vmul.f32 %v3237, %v3237
  %v3324 = vmul.f32 %v3238, %v3238
  %v3325 = vmul.f32 %v3239, %v3239
  %v3326 = vmul.f32 %v3240, %v3240
  %v3327 = vmul.f32 %v3241, %v3241
  %v3328 = vmul.f32 %v3242, %v3242
  %v3329 = vmul.f32 %v3243, %v3243
  %v3330 = vmul.f32 %v3244, %v3244
  %v3331 = vmul.f32 %v3245, %v3245
  %3332 = vmatprep.subr.mxu0 0.0
  %3333 = vmatpush1.msra.mxu0 %v3316
  %3334 = vmatprep.subr.mxu0 0.0
  %3335 = vmatpush1.msra.mxu0 %v3317
  %3336 = vmatprep.subr.mxu0 0.0
  %3337 = vmatpush1.msra.mxu0 %v3318
  %3338 = vmatprep.subr.mxu0 0.0
  %3339 = vmatpush1.msra.mxu0 %v3319
  %3340 = vmatprep.subr.mxu0 0.0
  %3341 = vmatpush1.msra.mxu0 %v3320
  %3342 = vmatprep.subr.mxu0 0.0
  %3343 = vmatpush1.msra.mxu0 %v3321
  %3344 = vmatprep.subr.mxu0 0.0
  %3345 = vmatpush1.msra.mxu0 %v3322
  %3346 = vmatprep.subr.mxu0 0.0
  %3347 = vmatpush1.msra.mxu0 %v3323
  %3348 = vmatprep.subr.mxu0 0.0
  %3349 = vmatpush1.msra.mxu0 %v3324
  %3350 = vmatprep.subr.mxu0 0.0
  %3351 = vmatpush1.msra.mxu0 %v3325
  %3352 = vmatprep.subr.mxu0 0.0
  %3353 = vmatpush1.msra.mxu0 %v3326
  %3354 = vmatprep.subr.mxu0 0.0
  %3355 = vmatpush1.msra.mxu0 %v3327
  %3356 = vmatprep.subr.mxu0 0.0
  %3357 = vmatpush1.msra.mxu0 %v3328
  %3358 = vmatprep.subr.mxu0 0.0
  %3359 = vmatpush1.msra.mxu0 %v3329
  %3360 = vmatprep.subr.mxu0 0.0
  %3361 = vmatpush1.msra.mxu0 %v3330
  %3362 = vmatprep.subr.mxu0 0.0
  %3363 = vmatpush1.msra.mxu0 %v3331
  %3364 = vmatprep.subr.mxu0 0.0
  %3365 = vmatpush1.msra.mxu0 0.0
  %3366 = vmatprep.subr.mxu0 0.0
  %3367 = vmatpush1.msra.mxu0 0.0
  %3368 = vmatprep.subr.mxu0 0.0
  %3369 = vmatpush1.msra.mxu0 0.0
  %3370 = vmatprep.subr.mxu0 0.0
  %3371 = vmatpush1.msra.mxu0 0.0
  %3372 = vmatprep.subr.mxu0 0.0
  %3373 = vmatpush1.msra.mxu0 0.0
  %3374 = vmatprep.subr.mxu0 0.0
  %3375 = vmatpush1.msra.mxu0 0.0
  %3376 = vmatprep.subr.mxu0 0.0
  %3377 = vmatpush1.msra.mxu0 0.0
  %3378 = vmatprep.subr.mxu0 0.0
  %3379 = vmatpush1.msra.mxu0 0.0
  %3380 = vmatprep.subr.mxu0 0.0
  %3381 = vmatpush1.msra.mxu0 0.0
  %3382 = vmatprep.subr.mxu0 0.0
  %3383 = vmatpush1.msra.mxu0 0.0
  %3384 = vmatprep.subr.mxu0 0.0
  %3385 = vmatpush1.msra.mxu0 0.0
  %3386 = vmatprep.subr.mxu0 0.0
  %3387 = vmatpush1.msra.mxu0 0.0
  %3388 = vmatprep.subr.mxu0 0.0
  %3389 = vmatpush1.msra.mxu0 0.0
  %3390 = vmatprep.subr.mxu0 0.0
  %3391 = vmatpush1.msra.mxu0 0.0
  %3392 = vmatprep.subr.mxu0 0.0
  %3393 = vmatpush1.msra.mxu0 0.0
  %3394 = vmatprep.subr.mxu0 0.0
  %3395 = vmatpush1.msra.mxu0 0.0
  %3396 = vmatprep.mubr.f32.mxu0 0.0
  %3397 = vmatmul.mubr.f32.gmra.mrb[0].mxu0 1.0
  %v3398 = vpop.f32.mrb[0].mxu0
  %v3399 = vadd.f32 0.0, %v3398
  %v3400 = vpop.f32.mrb[0].mxu0
  %3401 = vdwg.mxu0
  %v3402 = vmul.f32 %v3313, 0.0078125
  %v3403 = vmul.f32 %v3399, 0.0078125
  %v3404 = vmul.f32 %v3402, %v3402
  %v3405 = vsub.f32 %v3403, %v3404
  %v3406 = vadd.f32 %v3405, 1e-05
  %v3407 = vrsqrt.pop %v3406
  %v3409 = vrot.slane %v3407, 6
  %v3411 = vmul.f32 %v21, %v3409
  %v3413 = vrot.slane %v3411, 2
  %v3415 = vmul.f32 %v3402, %v3413
  %v3417 = vrot.slane %v3415, 5
  %v3419 = vsub.f32 %v21, %v3417
  %v3420 = vlaneseq
  %v3421 = vshrl.u32 %v3420, 7
  %v3422 = vsub.s32 2, %v3421
  %v3423 = vrot.slane %v3411, %v3422
  %v3424 = vmul.f32 %v3230, %v3423
  %v3425 = vmul.f32 %v3231, %v3423
  %v3426 = vmul.f32 %v3232, %v3423
  %v3427 = vmul.f32 %v3233, %v3423
  %v3428 = vmul.f32 %v3234, %v3423
  %v3429 = vmul.f32 %v3235, %v3423
  %v3430 = vmul.f32 %v3236, %v3423
  %v3431 = vmul.f32 %v3237, %v3423
  %v3432 = vmul.f32 %v3238, %v3423
  %v3433 = vmul.f32 %v3239, %v3423
  %v3434 = vmul.f32 %v3240, %v3423
  %v3435 = vmul.f32 %v3241, %v3423
  %v3436 = vmul.f32 %v3242, %v3423
  %v3437 = vmul.f32 %v3243, %v3423
  %v3438 = vmul.f32 %v3244, %v3423
  %v3439 = vmul.f32 %v3245, %v3423
  %v3440 = vlaneseq
  %v3441 = vshrl.u32 %v3440, 7
  %v3442 = vsub.s32 3, %v3441
  %v3443 = vrot.slane %v3419, %v3442
  %v3444 = vadd.f32 %v3424, %v3443
  %v3445 = vadd.f32 %v3425, %v3443
  %v3446 = vadd.f32 %v3426, %v3443
  %v3447 = vadd.f32 %v3427, %v3443
  %v3448 = vadd.f32 %v3428, %v3443
  %v3449 = vadd.f32 %v3429, %v3443
  %v3450 = vadd.f32 %v3430, %v3443
  %v3451 = vadd.f32 %v3431, %v3443
  %v3452 = vadd.f32 %v3432, %v3443
  %v3453 = vadd.f32 %v3433, %v3443
  %v3454 = vadd.f32 %v3434, %v3443
  %v3455 = vadd.f32 %v3435, %v3443
  %v3456 = vadd.f32 %v3436, %v3443
  %v3457 = vadd.f32 %v3437, %v3443
  %v3458 = vadd.f32 %v3438, %v3443
  %v3459 = vadd.f32 %v3439, %v3443
  %v3460 = vld [vmem:[%s657] sm:$0xff]
  %v3461 = vld [vmem:[%s657 + $0x10] sm:$0xff]
  %v3462 = vld [vmem:[%s657 + $0x20] sm:$0xff]
  %v3463 = vld [vmem:[%s657 + $0x30] sm:$0xff]
  %v3464 = vld [vmem:[%s657 + $0x40] sm:$0xff]
  %v3465 = vld [vmem:[%s657 + $0x50] sm:$0xff]
  %v3466 = vld [vmem:[%s657 + $0x60] sm:$0xff]
  %v3467 = vld [vmem:[%s657 + $0x70] sm:$0xff]
  %v3468 = vld [vmem:[%s657 + $0x90] sm:$0xff]
  %v3469 = vld [vmem:[%s657 + $0xa0] sm:$0xff]
  %v3470 = vld [vmem:[%s657 + $0xb0] sm:$0xff]
  %v3471 = vld [vmem:[%s657 + $0xc0] sm:$0xff]
  %v3472 = vld [vmem:[%s657 + $0xd0] sm:$0xff]
  %v3473 = vld [vmem:[%s657 + $0xe0] sm:$0xff]
  %v3474 = vld [vmem:[%s657 + $0xf0] sm:$0xff]
  %v3475 = vld [vmem:[%s657 + $0x100] sm:$0xff]
  %v3476 = vpack.c.bf16 %v3461, %v3460
  %v3477 = vpack.c.bf16 %v3463, %v3462
  %v3478 = vpack.c.bf16 %v3465, %v3464
  %v3479 = vpack.c.bf16 %v3467, %v3466
  %v3480 = vpack.c.bf16 %v3469, %v3468
  %v3481 = vpack.c.bf16 %v3471, %v3470
  %v3482 = vpack.c.bf16 %v3473, %v3472
  %v3483 = vpack.c.bf16 %v3475, %v3474
  %v3484 = vld [vmem:[%s3] sm:$0x3]
  %v3486 = vsel %vm74, %v3476, 0
  %v3489 = vsel %vm74, %v3477, 0
  %v3492 = vsel %vm74, %v3478, 0
  %v3495 = vsel %vm74, %v3479, 0
  %v3498 = vsel %vm74, %v3480, 0
  %v3501 = vsel %vm74, %v3481, 0
  %v3504 = vsel %vm74, %v3482, 0
  %v3507 = vsel %vm74, %v3483, 0
  %v3510 = vsel %vm99, %v3484, 0
  %3512 = vmatprep.subr.bf16.mxu0 0
  %3513 = vmatpush1.bf16.msra.mxu0 %v3510
  %3514 = vmatprep.subr.bf16.mxu0 0
  %3515 = vmatpush1.bf16.msra.mxu0 0
  %3516 = vmatprep.subr.bf16.mxu0 0
  %3517 = vmatpush1.bf16.msra.mxu0 0
  %3518 = vmatprep.subr.bf16.mxu0 0
  %3519 = vmatpush1.bf16.msra.mxu0 0
  %3520 = vmatprep.subr.bf16.mxu0 0
  %3521 = vmatpush1.bf16.msra.mxu0 0
  %3522 = vmatprep.subr.bf16.mxu0 0
  %3523 = vmatpush1.bf16.msra.mxu0 0
  %3524 = vmatprep.subr.bf16.mxu0 0
  %3525 = vmatpush1.bf16.msra.mxu0 0
  %3526 = vmatprep.subr.bf16.mxu0 0
  %3527 = vmatpush1.bf16.msra.mxu0 0
  %3528 = vmatprep.subr.bf16.mxu0 0
  %3529 = vmatpush1.bf16.msra.mxu0 0
  %3530 = vmatprep.subr.bf16.mxu0 0
  %3531 = vmatpush1.bf16.msra.mxu0 0
  %3532 = vmatprep.subr.bf16.mxu0 0
  %3533 = vmatpush1.bf16.msra.mxu0 0
  %3534 = vmatprep.subr.bf16.mxu0 0
  %3535 = vmatpush1.bf16.msra.mxu0 0
  %3536 = vmatprep.subr.bf16.mxu0 0
  %3537 = vmatpush1.bf16.msra.mxu0 0
  %3538 = vmatprep.subr.bf16.mxu0 0
  %3539 = vmatpush1.bf16.msra.mxu0 0
  %3540 = vmatprep.subr.bf16.mxu0 0
  %3541 = vmatpush1.bf16.msra.mxu0 0
  %3542 = vmatprep.subr.bf16.mxu0 0
  %3543 = vmatpush1.bf16.msra.mxu0 0
  %3544 = vmatprep.mubr.bf16.mxu0 0
  %3545 = vmatmul.mubr.bf16.gmra.mrb[0].mxu0 %v3486
  %v3546 = vpop.f32.mrb[0].mxu0
  %v3547 = vadd.f32 0.0, %v3546
  %v3548 = vpop.f32.mrb[0].mxu0
  %v3549 = vpop.f32.mrb[0].mxu0
  %v3550 = vadd.f32 0.0, %v3549
  %v3551 = vpop.f32.mrb[0].mxu0
  %3552 = vmatprep.mubr.bf16.mxu0 0
  %3553 = vmatmul.mubr.bf16.gmra.mrb[0].mxu0 %v3489
  %v3554 = vpop.f32.mrb[0].mxu0
  %v3555 = vadd.f32 0.0, %v3554
  %v3556 = vpop.f32.mrb[0].mxu0
  %v3557 = vpop.f32.mrb[0].mxu0
  %v3558 = vadd.f32 0.0, %v3557
  %v3559 = vpop.f32.mrb[0].mxu0
  %3560 = vmatprep.mubr.bf16.mxu0 0
  %3561 = vmatmul.mubr.bf16.gmra.mrb[0].mxu0 %v3492
  %v3562 = vpop.f32.mrb[0].mxu0
  %v3563 = vadd.f32 0.0, %v3562
  %v3564 = vpop.f32.mrb[0].mxu0
  %v3565 = vpop.f32.mrb[0].mxu0
  %v3566 = vadd.f32 0.0, %v3565
  %v3567 = vpop.f32.mrb[0].mxu0
  %3568 = vmatprep.mubr.bf16.mxu0 0
  %3569 = vmatmul.mubr.bf16.gmra.mrb[0].mxu0 %v3495
  %v3570 = vpop.f32.mrb[0].mxu0
  %v3571 = vadd.f32 0.0, %v3570
  %v3572 = vpop.f32.mrb[0].mxu0
  %v3573 = vpop.f32.mrb[0].mxu0
  %v3574 = vadd.f32 0.0, %v3573
  %v3575 = vpop.f32.mrb[0].mxu0
  %3576 = vmatprep.mubr.bf16.mxu0 0
  %3577 = vmatmul.mubr.bf16.gmra.mrb[0].mxu0 %v3498
  %v3578 = vpop.f32.mrb[0].mxu0
  %v3579 = vadd.f32 0.0, %v3578
  %v3580 = vpop.f32.mrb[0].mxu0
  %v3581 = vpop.f32.mrb[0].mxu0
  %v3582 = vadd.f32 0.0, %v3581
  %v3583 = vpop.f32.mrb[0].mxu0
  %3584 = vmatprep.mubr.bf16.mxu0 0
  %3585 = vmatmul.mubr.bf16.gmra.mrb[0].mxu0 %v3501
  %v3586 = vpop.f32.mrb[0].mxu0
  %v3587 = vadd.f32 0.0, %v3586
  %v3588 = vpop.f32.mrb[0].mxu0
  %v3589 = vpop.f32.mrb[0].mxu0
  %v3590 = vadd.f32 0.0, %v3589
  %v3591 = vpop.f32.mrb[0].mxu0
  %3592 = vmatprep.mubr.bf16.mxu0 0
  %3593 = vmatmul.mubr.bf16.gmra.mrb[0].mxu0 %v3504
  %v3594 = vpop.f32.mrb[0].mxu0
  %v3595 = vadd.f32 0.0, %v3594
  %v3596 = vpop.f32.mrb[0].mxu0
  %v3597 = vpop.f32.mrb[0].mxu0
  %v3598 = vadd.f32 0.0, %v3597
  %v3599 = vpop.f32.mrb[0].mxu0
  %3600 = vmatprep.mubr.bf16.mxu0 0
  %3601 = vmatmul.mubr.bf16.gmra.mrb[0].mxu0 %v3507
  %v3602 = vpop.f32.mrb[0].mxu0
  %v3603 = vadd.f32 0.0, %v3602
  %v3604 = vpop.f32.mrb[0].mxu0
  %v3605 = vpop.f32.mrb[0].mxu0
  %v3606 = vadd.f32 0.0, %v3605
  %v3607 = vpop.f32.mrb[0].mxu0
  %3608 = vdwg.mxu0
  %3609 = vmatprep.subr.mxu0 0.0
  %3610 = vmatpush1.msra.mxu0 %v3547
  %3611 = vmatprep.subr.mxu0 0.0
  %3612 = vmatpush1.msra.mxu0 %v3550
  %3613 = vmatprep.subr.mxu0 0.0
  %3614 = vmatpush1.msra.mxu0 %v3555
  %3615 = vmatprep.subr.mxu0 0.0
  %3616 = vmatpush1.msra.mxu0 %v3558
  %3617 = vmatprep.subr.mxu0 0.0
  %3618 = vmatpush1.msra.mxu0 %v3563
  %3619 = vmatprep.subr.mxu0 0.0
  %3620 = vmatpush1.msra.mxu0 %v3566
  %3621 = vmatprep.subr.mxu0 0.0
  %3622 = vmatpush1.msra.mxu0 %v3571
  %3623 = vmatprep.subr.mxu0 0.0
  %3624 = vmatpush1.msra.mxu0 %v3574
  %3625 = vmatprep.subr.mxu0 0.0
  %3626 = vmatpush1.msra.mxu0 %v3579
  %3627 = vmatprep.subr.mxu0 0.0
  %3628 = vmatpush1.msra.mxu0 %v3582
  %3629 = vmatprep.subr.mxu0 0.0
  %3630 = vmatpush1.msra.mxu0 %v3587
  %3631 = vmatprep.subr.mxu0 0.0
  %3632 = vmatpush1.msra.mxu0 %v3590
  %3633 = vmatprep.subr.mxu0 0.0
  %3634 = vmatpush1.msra.mxu0 %v3595
  %3635 = vmatprep.subr.mxu0 0.0
  %3636 = vmatpush1.msra.mxu0 %v3598
  %3637 = vmatprep.subr.mxu0 0.0
  %3638 = vmatpush1.msra.mxu0 %v3603
  %3639 = vmatprep.subr.mxu0 0.0
  %3640 = vmatpush1.msra.mxu0 %v3606
  %3641 = vmatprep.subr.mxu0 0.0
  %3642 = vmatpush1.msra.mxu0 0.0
  %3643 = vmatprep.subr.mxu0 0.0
  %3644 = vmatpush1.msra.mxu0 0.0
  %3645 = vmatprep.subr.mxu0 0.0
  %3646 = vmatpush1.msra.mxu0 0.0
  %3647 = vmatprep.subr.mxu0 0.0
  %3648 = vmatpush1.msra.mxu0 0.0
  %3649 = vmatprep.subr.mxu0 0.0
  %3650 = vmatpush1.msra.mxu0 0.0
  %3651 = vmatprep.subr.mxu0 0.0
  %3652 = vmatpush1.msra.mxu0 0.0
  %3653 = vmatprep.subr.mxu0 0.0
  %3654 = vmatpush1.msra.mxu0 0.0
  %3655 = vmatprep.subr.mxu0 0.0
  %3656 = vmatpush1.msra.mxu0 0.0
  %3657 = vmatprep.subr.mxu0 0.0
  %3658 = vmatpush1.msra.mxu0 0.0
  %3659 = vmatprep.subr.mxu0 0.0
  %3660 = vmatpush1.msra.mxu0 0.0
  %3661 = vmatprep.subr.mxu0 0.0
  %3662 = vmatpush1.msra.mxu0 0.0
  %3663 = vmatprep.subr.mxu0 0.0
  %3664 = vmatpush1.msra.mxu0 0.0
  %3665 = vmatprep.subr.mxu0 0.0
  %3666 = vmatpush1.msra.mxu0 0.0
  %3667 = vmatprep.subr.mxu0 0.0
  %3668 = vmatpush1.msra.mxu0 0.0
  %3669 = vmatprep.subr.mxu0 0.0
  %3670 = vmatpush1.msra.mxu0 0.0
  %3671 = vmatprep.subr.mxu0 0.0
  %3672 = vmatpush1.msra.mxu0 0.0
  %3673 = vmatprep.mubr.f32.mxu0 0.0
  %3674 = vmatmul.mubr.f32.gmra.mrb[0].mxu0 1.0
  %v3675 = vpop.f32.mrb[0].mxu0
  %v3676 = vadd.f32 0.0, %v3675
  %v3677 = vpop.f32.mrb[0].mxu0
  %3678 = vdwg.mxu0
  %v3679 = vmul.f32 %v3547, %v3547
  %v3680 = vmul.f32 %v3550, %v3550
  %v3681 = vmul.f32 %v3555, %v3555
  %v3682 = vmul.f32 %v3558, %v3558
  %v3683 = vmul.f32 %v3563, %v3563
  %v3684 = vmul.f32 %v3566, %v3566
  %v3685 = vmul.f32 %v3571, %v3571
  %v3686 = vmul.f32 %v3574, %v3574
  %v3687 = vmul.f32 %v3579, %v3579
  %v3688 = vmul.f32 %v3582, %v3582
  %v3689 = vmul.f32 %v3587, %v3587
  %v3690 = vmul.f32 %v3590, %v3590
  %v3691 = vmul.f32 %v3595, %v3595
  %v3692 = vmul.f32 %v3598, %v3598
  %v3693 = vmul.f32 %v3603, %v3603
  %v3694 = vmul.f32 %v3606, %v3606
  %3695 = vmatprep.subr.mxu0 0.0
  %3696 = vmatpush1.msra.mxu0 %v3679
  %3697 = vmatprep.subr.mxu0 0.0
  %3698 = vmatpush1.msra.mxu0 %v3680
  %3699 = vmatprep.subr.mxu0 0.0
  %3700 = vmatpush1.msra.mxu0 %v3681
  %3701 = vmatprep.subr.mxu0 0.0
  %3702 = vmatpush1.msra.mxu0 %v3682
  %3703 = vmatprep.subr.mxu0 0.0
  %3704 = vmatpush1.msra.mxu0 %v3683
  %3705 = vmatprep.subr.mxu0 0.0
  %3706 = vmatpush1.msra.mxu0 %v3684
  %3707 = vmatprep.subr.mxu0 0.0
  %3708 = vmatpush1.msra.mxu0 %v3685
  %3709 = vmatprep.subr.mxu0 0.0
  %3710 = vmatpush1.msra.mxu0 %v3686
  %3711 = vmatprep.subr.mxu0 0.0
  %3712 = vmatpush1.msra.mxu0 %v3687
  %3713 = vmatprep.subr.mxu0 0.0
  %3714 = vmatpush1.msra.mxu0 %v3688
  %3715 = vmatprep.subr.mxu0 0.0
  %3716 = vmatpush1.msra.mxu0 %v3689
  %3717 = vmatprep.subr.mxu0 0.0
  %3718 = vmatpush1.msra.mxu0 %v3690
  %3719 = vmatprep.subr.mxu0 0.0
  %3720 = vmatpush1.msra.mxu0 %v3691
  %3721 = vmatprep.subr.mxu0 0.0
  %3722 = vmatpush1.msra.mxu0 %v3692
  %3723 = vmatprep.subr.mxu0 0.0
  %3724 = vmatpush1.msra.mxu0 %v3693
  %3725 = vmatprep.subr.mxu0 0.0
  %3726 = vmatpush1.msra.mxu0 %v3694
  %3727 = vmatprep.subr.mxu0 0.0
  %3728 = vmatpush1.msra.mxu0 0.0
  %3729 = vmatprep.subr.mxu0 0.0
  %3730 = vmatpush1.msra.mxu0 0.0
  %3731 = vmatprep.subr.mxu0 0.0
  %3732 = vmatpush1.msra.mxu0 0.0
  %3733 = vmatprep.subr.mxu0 0.0
  %3734 = vmatpush1.msra.mxu0 0.0
  %3735 = vmatprep.subr.mxu0 0.0
  %3736 = vmatpush1.msra.mxu0 0.0
  %3737 = vmatprep.subr.mxu0 0.0
  %3738 = vmatpush1.msra.mxu0 0.0
  %3739 = vmatprep.subr.mxu0 0.0
  %3740 = vmatpush1.msra.mxu0 0.0
  %3741 = vmatprep.subr.mxu0 0.0
  %3742 = vmatpush1.msra.mxu0 0.0
  %3743 = vmatprep.subr.mxu0 0.0
  %3744 = vmatpush1.msra.mxu0 0.0
  %3745 = vmatprep.subr.mxu0 0.0
  %3746 = vmatpush1.msra.mxu0 0.0
  %3747 = vmatprep.subr.mxu0 0.0
  %3748 = vmatpush1.msra.mxu0 0.0
  %3749 = vmatprep.subr.mxu0 0.0
  %3750 = vmatpush1.msra.mxu0 0.0
  %3751 = vmatprep.subr.mxu0 0.0
  %3752 = vmatpush1.msra.mxu0 0.0
  %3753 = vmatprep.subr.mxu0 0.0
  %3754 = vmatpush1.msra.mxu0 0.0
  %3755 = vmatprep.subr.mxu0 0.0
  %3756 = vmatpush1.msra.mxu0 0.0
  %3757 = vmatprep.subr.mxu0 0.0
  %3758 = vmatpush1.msra.mxu0 0.0
  %3759 = vmatprep.mubr.f32.mxu0 0.0
  %3760 = vmatmul.mubr.f32.gmra.mrb[0].mxu0 1.0
  %v3761 = vpop.f32.mrb[0].mxu0
  %v3762 = vadd.f32 0.0, %v3761
  %v3763 = vpop.f32.mrb[0].mxu0
  %3764 = vdwg.mxu0
  %v3765 = vmul.f32 %v3676, 0.0078125
  %v3766 = vmul.f32 %v3762, 0.0078125
  %v3767 = vmul.f32 %v3765, %v3765
  %v3768 = vsub.f32 %v3766, %v3767
  %v3769 = vadd.f32 %v3768, 1e-05
  %v3770 = vrsqrt.pop %v3769
  %v3772 = vrot.slane %v3770, 4
  %v3774 = vmul.f32 %v21, %v3772
  %v3776 = vrot.slane %v3774, 4
  %v3778 = vmul.f32 %v3765, %v3776
  %v3780 = vrot.slane %v3778, 3
  %v3782 = vsub.f32 %v21, %v3780
  %v3783 = vlaneseq
  %v3784 = vshrl.u32 %v3783, 7
  %v3785 = vsub.s32 4, %v3784
  %v3786 = vrot.slane %v3774, %v3785
  %v3787 = vmul.f32 %v3547, %v3786
  %v3788 = vmul.f32 %v3550, %v3786
  %v3789 = vmul.f32 %v3555, %v3786
  %v3790 = vmul.f32 %v3558, %v3786
  %v3791 = vmul.f32 %v3563, %v3786
  %v3792 = vmul.f32 %v3566, %v3786
  %v3793 = vmul.f32 %v3571, %v3786
  %v3794 = vmul.f32 %v3574, %v3786
  %v3795 = vmul.f32 %v3579, %v3786
  %v3796 = vmul.f32 %v3582, %v3786
  %v3797 = vmul.f32 %v3587, %v3786
  %v3798 = vmul.f32 %v3590, %v3786
  %v3799 = vmul.f32 %v3595, %v3786
  %v3800 = vmul.f32 %v3598, %v3786
  %v3801 = vmul.f32 %v3603, %v3786
  %v3802 = vmul.f32 %v3606, %v3786
  %v3803 = vlaneseq
  %v3804 = vshrl.u32 %v3803, 7
  %v3805 = vsub.s32 5, %v3804
  %v3806 = vrot.slane %v3782, %v3805
  %v3807 = vadd.f32 %v3787, %v3806
  %v3808 = vadd.f32 %v3788, %v3806
  %v3809 = vadd.f32 %v3789, %v3806
  %v3810 = vadd.f32 %v3790, %v3806
  %v3811 = vadd.f32 %v3791, %v3806
  %v3812 = vadd.f32 %v3792, %v3806
  %v3813 = vadd.f32 %v3793, %v3806
  %v3814 = vadd.f32 %v3794, %v3806
  %v3815 = vadd.f32 %v3795, %v3806
  %v3816 = vadd.f32 %v3796, %v3806
  %v3817 = vadd.f32 %v3797, %v3806
  %v3818 = vadd.f32 %v3798, %v3806
  %v3819 = vadd.f32 %v3799, %v3806
  %v3820 = vadd.f32 %v3800, %v3806
  %v3821 = vadd.f32 %v3801, %v3806
  %v3822 = vadd.f32 %v3802, %v3806
  %v3823 = vadd.f32 %v3444, %v3807
  %v3824 = vadd.f32 %v3445, %v3808
  %v3825 = vadd.f32 %v3446, %v3809
  %v3826 = vadd.f32 %v3447, %v3810
  %v3827 = vadd.f32 %v3448, %v3811
  %v3828 = vadd.f32 %v3449, %v3812
  %v3829 = vadd.f32 %v3450, %v3813
  %v3830 = vadd.f32 %v3451, %v3814
  %v3831 = vadd.f32 %v3452, %v3815
  %v3832 = vadd.f32 %v3453, %v3816
  %v3833 = vadd.f32 %v3454, %v3817
  %v3834 = vadd.f32 %v3455, %v3818
  %v3835 = vadd.f32 %v3456, %v3819
  %v3836 = vadd.f32 %v3457, %v3820
  %v3837 = vadd.f32 %v3458, %v3821
  %v3838 = vadd.f32 %v3459, %v3822
  %v3839 = vmax.f32 %v3823, 0.0
  %v3840 = vmax.f32 %v3824, 0.0
  %v3841 = vmax.f32 %v3825, 0.0
  %v3842 = vmax.f32 %v3826, 0.0
  %v3843 = vmax.f32 %v3827, 0.0
  %v3844 = vmax.f32 %v3828, 0.0
  %v3845 = vmax.f32 %v3829, 0.0
  %v3846 = vmax.f32 %v3830, 0.0
  %v3847 = vmax.f32 %v3831, 0.0
  %v3848 = vmax.f32 %v3832, 0.0
  %v3849 = vmax.f32 %v3833, 0.0
  %v3850 = vmax.f32 %v3834, 0.0
  %v3851 = vmax.f32 %v3835, 0.0
  %v3852 = vmax.f32 %v3836, 0.0
  %v3853 = vmax.f32 %v3837, 0.0
  %v3854 = vmax.f32 %v3838, 0.0
  %3855 = vst.msk [vmem:[%s5] sm:$0xff] %vm1714, %v3839
  %3856 = vst.msk [vmem:[%s5 + $0x8] sm:$0xff] %vm1714, %v3840
  %3857 = vst.msk [vmem:[%s5 + $0x10] sm:$0xff] %vm1714, %v3841
  %3858 = vst.msk [vmem:[%s5 + $0x18] sm:$0xff] %vm1714, %v3842
  %3859 = vst.msk [vmem:[%s5 + $0x20] sm:$0xff] %vm1714, %v3843
  %3860 = vst.msk [vmem:[%s5 + $0x28] sm:$0xff] %vm1714, %v3844
  %3861 = vst.msk [vmem:[%s5 + $0x30] sm:$0xff] %vm1714, %v3845
  %3862 = vst.msk [vmem:[%s5 + $0x38] sm:$0xff] %vm1714, %v3846
  %3863 = vst.msk [vmem:[%s5 + $0x40] sm:$0xff] %vm1714, %v3847
  %3864 = vst.msk [vmem:[%s5 + $0x48] sm:$0xff] %vm1714, %v3848
  %3865 = vst.msk [vmem:[%s5 + $0x50] sm:$0xff] %vm1714, %v3849
  %3866 = vst.msk [vmem:[%s5 + $0x58] sm:$0xff] %vm1714, %v3850
  %3867 = vst.msk [vmem:[%s5 + $0x60] sm:$0xff] %vm1714, %v3851
  %3868 = vst.msk [vmem:[%s5 + $0x68] sm:$0xff] %vm1714, %v3852
  %3869 = vst.msk [vmem:[%s5 + $0x70] sm:$0xff] %vm1714, %v3853
  %3870 = vst.msk [vmem:[%s5 + $0x78] sm:$0xff] %vm1714, %v3854
  // Predicated region
  $region22: #{tpu_custom_call.1} parent=0 // pred_check
    _
  $region23: #{tpu_custom_call.1} parent=0 // pred_check_branch
    %3872 = sbr.rel (0) target = $region25
  $region24: #{tpu_custom_call.1} parent=0 // pred_region
    _
  $region25: #{tpu_custom_call.1} parent=0 // pred_fallthru
    _
  // Predicated region
  $region26: #{tpu_custom_call.1} parent=0 // pred_check
    _
  $region27: #{tpu_custom_call.1} parent=0 // pred_check_branch
    %3874 = sbr.rel (0) target = $region29
  $region28: #{tpu_custom_call.1} parent=0 // pred_region
    _
  $region29: #{tpu_custom_call.1} parent=0 // pred_fallthru
    _

</llo_original>
